<compile_context>
chip_gen: v5e
topology: v5e:2x2
jax: 0.10.0
libtpu: 0.0.40
codegen_flags: <defaults>
</compile_context>

<pallas_src>
import functools

import jax
import jax.numpy as jnp
from jax import lax
from jax.experimental import pallas as pl
from jax.experimental.pallas import tpu as pltpu


def lstm_fc_kernel(ids_ref, eg_ref, whh_ref, wfc_ref, bfc_ref, out_ref, gx_ref,
                   *, seq_len, batch, hidden):
    """One invocation: SMEM-indexed gather from projected embedding + LSTM recurrence + FC."""
    H = hidden

    # ---- Fused embedding gather + input projection -------------------------------------
    # eg = emb_table @ W_ih^T + (b_ih + b_hh) was folded offline (embedding is frozen), so
    # the input path is a row gather into the gx VMEM scratch.  Store index is static
    # (unrolled), only the load row index is dynamic (read from SMEM).
    for r in range(seq_len * batch):
        idx = ids_ref[r]
        gx_ref[pl.ds(r, 1), :] = eg_ref[pl.ds(idx, 1), :]

    w_hh = whh_ref[...]                       # (H, 4H) bf16, VMEM resident across the loop

    def sigmoid(x):                           # exactly sigmoid; one EUP op (tanh) per gate
        return 0.5 * jnp.tanh(0.5 * x) + 0.5

    def gate_math(gates, c_prev):             # gates/c/h all f32 (v5e-safe elementwise)
        i = sigmoid(gates[:, 0 * H:1 * H])
        f = sigmoid(gates[:, 1 * H:2 * H])
        g = jnp.tanh(gates[:, 2 * H:3 * H])
        o = sigmoid(gates[:, 3 * H:4 * H])
        c = f * c_prev + i * g
        h = o * jnp.tanh(c)
        return h, c

    # ---- t = 0: h == c == 0 -> skip the serial h @ W_hh matmul and the forget path -----
    g0 = gx_ref[pl.ds(0, batch), :]
    i0 = sigmoid(g0[:, 0 * H:1 * H])
    gg0 = jnp.tanh(g0[:, 2 * H:3 * H])
    o0 = sigmoid(g0[:, 3 * H:4 * H])
    c = i0 * gg0
    h = o0 * jnp.tanh(c)

    # ---- t = 1 .. T-1: only h @ W_hh^T (bf16 operands, f32 accumulate) is serial --------
    def body(t, carry):
        h, c = carry
        start = pl.multiple_of(t * batch, batch)            # batch is a multiple of 8
        gates = gx_ref[pl.ds(start, batch), :] + jnp.dot(
            h.astype(jnp.bfloat16), w_hh, preferred_element_type=jnp.float32)
        return gate_math(gates, c)

    h, c = lax.fori_loop(1, seq_len, body, (h, c), unroll=True)

    # ---- FC head: logits = h_n[-1] @ W_fc^T + b_fc  (lane-dense padded output) ----------
    out_ref[...] = (jnp.dot(h.astype(jnp.bfloat16), wfc_ref[...],
                            preferred_element_type=jnp.float32) + bfc_ref[...])


def prepare_params(params):
    """One-time (outside the jitted per-call path) weight prep:
    fold frozen embedding + input projection + biases, pre-transpose, pre-cast to bf16,
    and pad the FC head to a lane-dense 128-wide output."""
    w_ih, w_hh = params["w_ih"], params["w_hh"]
    w_fc, b_fc = params["w_fc"], params["b_fc"]
    b = params["b_ih"] + params["b_hh"]
    eg = jnp.dot(params["embedding"], w_ih.T) + b[None, :]        # (V, 4H) f32, exact
    H = w_hh.shape[1]
    C = w_fc.shape[0]
    Cp = ((C + 127) // 128) * 128
    w_fc_p = jnp.zeros((H, Cp), jnp.float32).at[:, :C].set(w_fc.T)
    b_fc_p = jnp.zeros((1, Cp), jnp.float32).at[:, :C].set(b_fc)
    return {
        "eg": eg.astype(jnp.float32),                             # (V, 4H)
        "w_hh_t": w_hh.T.astype(jnp.bfloat16),                    # (H, 4H)
        "w_fc_t": w_fc_p.astype(jnp.bfloat16),                    # (H, Cp)
        "b_fc": b_fc_p,                                           # (1, Cp) f32
    }


@functools.partial(jax.jit, static_argnames=("num_classes",))
def svd_classifier_forward(input_ids, prep, *, num_classes):
    """Forward pass: tiny int glue (pad/flatten ids) + single Pallas kernel."""
    eg, w_hh_t, w_fc_t, b_fc = prep["eg"], prep["w_hh_t"], prep["w_fc_t"], prep["b_fc"]
    B, T = input_ids.shape
    G4 = eg.shape[1]
    H = w_hh_t.shape[0]
    Cp = w_fc_t.shape[1]
    Bp = ((B + 7) // 8) * 8                                       # pad batch to f32 sublane

    ids = jnp.pad(input_ids.astype(jnp.int32), ((0, Bp - B), (0, 0)))   # (Bp, T), pads -> id 0
    ids_tm = jnp.transpose(ids).reshape(-1)                       # (T*Bp,) time-major

    logits_p = pl.pallas_call(
        functools.partial(lstm_fc_kernel, seq_len=T, batch=Bp, hidden=H),
        out_shape=jax.ShapeDtypeStruct((Bp, Cp), jnp.float32),
        in_specs=[
            pl.BlockSpec(memory_space=pltpu.MemorySpace.SMEM),    # ids (scalar table)
            pl.BlockSpec(memory_space=pltpu.MemorySpace.VMEM),    # eg  (V, 4H) f32
            pl.BlockSpec(memory_space=pltpu.MemorySpace.VMEM),    # w_hh_t (H, 4H) bf16
            pl.BlockSpec(memory_space=pltpu.MemorySpace.VMEM),    # w_fc_t (H, Cp) bf16
            pl.BlockSpec(memory_space=pltpu.MemorySpace.VMEM),    # b_fc (1, Cp) f32
        ],
        out_specs=pl.BlockSpec(memory_space=pltpu.MemorySpace.VMEM),
        scratch_shapes=[pltpu.VMEM((T * Bp, G4), jnp.float32)],   # gx: bounded live range
    )(ids_tm, eg, w_hh_t, w_fc_t, b_fc)

    return logits_p[:B, :num_classes]                             # drop batch/class padding


def init_params(key, vocab_size, embed_dim, hidden, num_classes):
    """Deterministic synthetic parameters matching the module's shapes."""
    ks = jax.random.split(key, 7)
    bound = 1.0 / jnp.sqrt(hidden)
    u = lambda k, shape: jax.random.uniform(k, shape, jnp.float32, -bound, bound)
    return {
        "embedding": jax.random.normal(ks[0], (vocab_size, embed_dim), jnp.float32),
        "w_ih": u(ks[1], (4 * hidden, embed_dim)),
        "w_hh": u(ks[2], (4 * hidden, hidden)),
        "b_ih": u(ks[3], (4 * hidden,)),
        "b_hh": u(ks[4], (4 * hidden,)),
        "w_fc": u(ks[5], (num_classes, hidden)),
        "b_fc": u(ks[6], (num_classes,)),
    }


def _reference_forward(input_ids, params):
    """Pure-JAX f32 reference (mirrors torch LSTM semantics, gate order [i,f,g,o])."""
    emb = jnp.take(params["embedding"], input_ids, axis=0)        # (B, T, E)
    B, T, _ = emb.shape
    H = params["w_hh"].shape[1]
    h = jnp.zeros((B, H), jnp.float32)
    c = jnp.zeros((B, H), jnp.float32)
    for t in range(T):
        gates = (emb[:, t] @ params["w_ih"].T + params["b_ih"]
                 + h @ params["w_hh"].T + params["b_hh"])
        i = jax.nn.sigmoid(gates[:, 0 * H:1 * H])
        f = jax.nn.sigmoid(gates[:, 1 * H:2 * H])
        g = jnp.tanh(gates[:, 2 * H:3 * H])
        o = jax.nn.sigmoid(gates[:, 3 * H:4 * H])
        c = f * c + i * g
        h = o * jnp.tanh(c)
    return h @ params["w_fc"].T + params["b_fc"]


if __name__ == "__main__":
    B, T = 2, 8
    VOCAB, EMBED_DIM = 50, 32
    HIDDEN = 128           # rnn_hidden_size default
    NUM_CLASSES = 4

    key = jax.random.PRNGKey(0)
    k_param, k_ids = jax.random.split(key)
    params = init_params(k_param, VOCAB, EMBED_DIM, HIDDEN, NUM_CLASSES)
    input_ids = jax.random.randint(k_ids, (B, T), 0, VOCAB, dtype=jnp.int32)

    prep = prepare_params(params)
    logits = svd_classifier_forward(input_ids, prep, num_classes=NUM_CLASSES)
    logits = jax.block_until_ready(logits)
    assert logits.shape == (B, NUM_CLASSES)

    ref = _reference_forward(input_ids, params)
    # bf16 MXU operands (f32 accumulate) -> expected ~1e-3 rounding vs the pure-f32 reference.
    assert jnp.allclose(logits, ref, atol=2e-2, rtol=2e-2), "mismatch vs reference"

    print("KERNEL_OK")
</pallas_src>

<mosaic_0001>
module attributes {stable_mosaic.version = 11 : i64} {
  func.func @lstm_fc_kernel(%arg0: memref<64xi32, #tpu.memory_space<smem>>, %arg1: memref<50x512xf32, #tpu.memory_space<vmem>>, %arg2: memref<128x512xbf16, #tpu.memory_space<vmem>>, %arg3: memref<128x128xbf16, #tpu.memory_space<vmem>>, %arg4: memref<1x128xf32, #tpu.memory_space<vmem>>, %arg5: memref<8x128xf32, #tpu.memory_space<vmem>>, %arg6: memref<64x512xf32, #tpu.memory_space<vmem>>) attributes {dimension_semantics = [], scalar_prefetch = 0 : i64, scratch_operands = 1 : i64, tpu.core_type = #tpu.core_type<tc>} {
    %c0 = arith.constant 0 : index
    %0 = memref.load %arg0[%c0] : memref<64xi32, #tpu.memory_space<smem>>
    %1 = arith.index_cast %0 : i32 to index
    %c0_0 = arith.constant 0 : index
    %2 = vector.load %arg1[%1, %c0_0] : memref<50x512xf32, #tpu.memory_space<vmem>>, vector<1x512xf32>
    %c0_1 = arith.constant 0 : index
    %c0_2 = arith.constant 0 : index
    %3 = vector.load %arg6[%c0_1, %c0_2] : memref<64x512xf32, #tpu.memory_space<vmem>>, vector<1x512xf32>
    tpu.vector_store %arg6[%c0_1, %c0_2], %2 {strides = array<i32>} : memref<64x512xf32, #tpu.memory_space<vmem>>, vector<1x512xf32>,
    %c1 = arith.constant 1 : index
    %4 = memref.load %arg0[%c1] : memref<64xi32, #tpu.memory_space<smem>>
    %5 = arith.index_cast %4 : i32 to index
    %c0_3 = arith.constant 0 : index
    %6 = vector.load %arg1[%5, %c0_3] : memref<50x512xf32, #tpu.memory_space<vmem>>, vector<1x512xf32>
    %c1_4 = arith.constant 1 : index
    %c0_5 = arith.constant 0 : index
    %7 = vector.load %arg6[%c1_4, %c0_5] : memref<64x512xf32, #tpu.memory_space<vmem>>, vector<1x512xf32>
    tpu.vector_store %arg6[%c1_4, %c0_5], %6 {strides = array<i32>} : memref<64x512xf32, #tpu.memory_space<vmem>>, vector<1x512xf32>,
    %c2 = arith.constant 2 : index
    %8 = memref.load %arg0[%c2] : memref<64xi32, #tpu.memory_space<smem>>
    %9 = arith.index_cast %8 : i32 to index
    %c0_6 = arith.constant 0 : index
    %10 = vector.load %arg1[%9, %c0_6] : memref<50x512xf32, #tpu.memory_space<vmem>>, vector<1x512xf32>
    %c2_7 = arith.constant 2 : index
    %c0_8 = arith.constant 0 : index
    %11 = vector.load %arg6[%c2_7, %c0_8] : memref<64x512xf32, #tpu.memory_space<vmem>>, vector<1x512xf32>
    tpu.vector_store %arg6[%c2_7, %c0_8], %10 {strides = array<i32>} : memref<64x512xf32, #tpu.memory_space<vmem>>, vector<1x512xf32>,
    %c3 = arith.constant 3 : index
    %12 = memref.load %arg0[%c3] : memref<64xi32, #tpu.memory_space<smem>>
    %13 = arith.index_cast %12 : i32 to index
    %c0_9 = arith.constant 0 : index
    %14 = vector.load %arg1[%13, %c0_9] : memref<50x512xf32, #tpu.memory_space<vmem>>, vector<1x512xf32>
    %c3_10 = arith.constant 3 : index
    %c0_11 = arith.constant 0 : index
    %15 = vector.load %arg6[%c3_10, %c0_11] : memref<64x512xf32, #tpu.memory_space<vmem>>, vector<1x512xf32>
    tpu.vector_store %arg6[%c3_10, %c0_11], %14 {strides = array<i32>} : memref<64x512xf32, #tpu.memory_space<vmem>>, vector<1x512xf32>,
    %c4 = arith.constant 4 : index
    %16 = memref.load %arg0[%c4] : memref<64xi32, #tpu.memory_space<smem>>
    %17 = arith.index_cast %16 : i32 to index
    %c0_12 = arith.constant 0 : index
    %18 = vector.load %arg1[%17, %c0_12] : memref<50x512xf32, #tpu.memory_space<vmem>>, vector<1x512xf32>
    %c4_13 = arith.constant 4 : index
    %c0_14 = arith.constant 0 : index
    %19 = vector.load %arg6[%c4_13, %c0_14] : memref<64x512xf32, #tpu.memory_space<vmem>>, vector<1x512xf32>
    tpu.vector_store %arg6[%c4_13, %c0_14], %18 {strides = array<i32>} : memref<64x512xf32, #tpu.memory_space<vmem>>, vector<1x512xf32>,
    %c5 = arith.constant 5 : index
    %20 = memref.load %arg0[%c5] : memref<64xi32, #tpu.memory_space<smem>>
    %21 = arith.index_cast %20 : i32 to index
    %c0_15 = arith.constant 0 : index
    %22 = vector.load %arg1[%21, %c0_15] : memref<50x512xf32, #tpu.memory_space<vmem>>, vector<1x512xf32>
    %c5_16 = arith.constant 5 : index
    %c0_17 = arith.constant 0 : index
    %23 = vector.load %arg6[%c5_16, %c0_17] : memref<64x512xf32, #tpu.memory_space<vmem>>, vector<1x512xf32>
    tpu.vector_store %arg6[%c5_16, %c0_17], %22 {strides = array<i32>} : memref<64x512xf32, #tpu.memory_space<vmem>>, vector<1x512xf32>,
    %c6 = arith.constant 6 : index
    %24 = memref.load %arg0[%c6] : memref<64xi32, #tpu.memory_space<smem>>
    %25 = arith.index_cast %24 : i32 to index
    %c0_18 = arith.constant 0 : index
    %26 = vector.load %arg1[%25, %c0_18] : memref<50x512xf32, #tpu.memory_space<vmem>>, vector<1x512xf32>
    %c6_19 = arith.constant 6 : index
    %c0_20 = arith.constant 0 : index
    %27 = vector.load %arg6[%c6_19, %c0_20] : memref<64x512xf32, #tpu.memory_space<vmem>>, vector<1x512xf32>
    tpu.vector_store %arg6[%c6_19, %c0_20], %26 {strides = array<i32>} : memref<64x512xf32, #tpu.memory_space<vmem>>, vector<1x512xf32>,
    %c7 = arith.constant 7 : index
    %28 = memref.load %arg0[%c7] : memref<64xi32, #tpu.memory_space<smem>>
    %29 = arith.index_cast %28 : i32 to index
    %c0_21 = arith.constant 0 : index
    %30 = vector.load %arg1[%29, %c0_21] : memref<50x512xf32, #tpu.memory_space<vmem>>, vector<1x512xf32>
    %c7_22 = arith.constant 7 : index
    %c0_23 = arith.constant 0 : index
    %31 = vector.load %arg6[%c7_22, %c0_23] : memref<64x512xf32, #tpu.memory_space<vmem>>, vector<1x512xf32>
    tpu.vector_store %arg6[%c7_22, %c0_23], %30 {strides = array<i32>} : memref<64x512xf32, #tpu.memory_space<vmem>>, vector<1x512xf32>,
    %c8 = arith.constant 8 : index
    %32 = memref.load %arg0[%c8] : memref<64xi32, #tpu.memory_space<smem>>
    %33 = arith.index_cast %32 : i32 to index
    %c0_24 = arith.constant 0 : index
    %34 = vector.load %arg1[%33, %c0_24] : memref<50x512xf32, #tpu.memory_space<vmem>>, vector<1x512xf32>
    %c8_25 = arith.constant 8 : index
    %c0_26 = arith.constant 0 : index
    %35 = vector.load %arg6[%c8_25, %c0_26] : memref<64x512xf32, #tpu.memory_space<vmem>>, vector<1x512xf32>
    tpu.vector_store %arg6[%c8_25, %c0_26], %34 {strides = array<i32>} : memref<64x512xf32, #tpu.memory_space<vmem>>, vector<1x512xf32>,
    %c9 = arith.constant 9 : index
    %36 = memref.load %arg0[%c9] : memref<64xi32, #tpu.memory_space<smem>>
    %37 = arith.index_cast %36 : i32 to index
    %c0_27 = arith.constant 0 : index
    %38 = vector.load %arg1[%37, %c0_27] : memref<50x512xf32, #tpu.memory_space<vmem>>, vector<1x512xf32>
    %c9_28 = arith.constant 9 : index
    %c0_29 = arith.constant 0 : index
    %39 = vector.load %arg6[%c9_28, %c0_29] : memref<64x512xf32, #tpu.memory_space<vmem>>, vector<1x512xf32>
    tpu.vector_store %arg6[%c9_28, %c0_29], %38 {strides = array<i32>} : memref<64x512xf32, #tpu.memory_space<vmem>>, vector<1x512xf32>,
    %c10 = arith.constant 10 : index
    %40 = memref.load %arg0[%c10] : memref<64xi32, #tpu.memory_space<smem>>
    %41 = arith.index_cast %40 : i32 to index
    %c0_30 = arith.constant 0 : index
    %42 = vector.load %arg1[%41, %c0_30] : memref<50x512xf32, #tpu.memory_space<vmem>>, vector<1x512xf32>
    %c10_31 = arith.constant 10 : index
    %c0_32 = arith.constant 0 : index
    %43 = vector.load %arg6[%c10_31, %c0_32] : memref<64x512xf32, #tpu.memory_space<vmem>>, vector<1x512xf32>
    tpu.vector_store %arg6[%c10_31, %c0_32], %42 {strides = array<i32>} : memref<64x512xf32, #tpu.memory_space<vmem>>, vector<1x512xf32>,
    %c11 = arith.constant 11 : index
    %44 = memref.load %arg0[%c11] : memref<64xi32, #tpu.memory_space<smem>>
    %45 = arith.index_cast %44 : i32 to index
    %c0_33 = arith.constant 0 : index
    %46 = vector.load %arg1[%45, %c0_33] : memref<50x512xf32, #tpu.memory_space<vmem>>, vector<1x512xf32>
    %c11_34 = arith.constant 11 : index
    %c0_35 = arith.constant 0 : index
    %47 = vector.load %arg6[%c11_34, %c0_35] : memref<64x512xf32, #tpu.memory_space<vmem>>, vector<1x512xf32>
    tpu.vector_store %arg6[%c11_34, %c0_35], %46 {strides = array<i32>} : memref<64x512xf32, #tpu.memory_space<vmem>>, vector<1x512xf32>,
    %c12 = arith.constant 12 : index
    %48 = memref.load %arg0[%c12] : memref<64xi32, #tpu.memory_space<smem>>
    %49 = arith.index_cast %48 : i32 to index
    %c0_36 = arith.constant 0 : index
    %50 = vector.load %arg1[%49, %c0_36] : memref<50x512xf32, #tpu.memory_space<vmem>>, vector<1x512xf32>
    %c12_37 = arith.constant 12 : index
    %c0_38 = arith.constant 0 : index
    %51 = vector.load %arg6[%c12_37, %c0_38] : memref<64x512xf32, #tpu.memory_space<vmem>>, vector<1x512xf32>
    tpu.vector_store %arg6[%c12_37, %c0_38], %50 {strides = array<i32>} : memref<64x512xf32, #tpu.memory_space<vmem>>, vector<1x512xf32>,
    %c13 = arith.constant 13 : index
    %52 = memref.load %arg0[%c13] : memref<64xi32, #tpu.memory_space<smem>>
    %53 = arith.index_cast %52 : i32 to index
    %c0_39 = arith.constant 0 : index
    %54 = vector.load %arg1[%53, %c0_39] : memref<50x512xf32, #tpu.memory_space<vmem>>, vector<1x512xf32>
    %c13_40 = arith.constant 13 : index
    %c0_41 = arith.constant 0 : index
    %55 = vector.load %arg6[%c13_40, %c0_41] : memref<64x512xf32, #tpu.memory_space<vmem>>, vector<1x512xf32>
    tpu.vector_store %arg6[%c13_40, %c0_41], %54 {strides = array<i32>} : memref<64x512xf32, #tpu.memory_space<vmem>>, vector<1x512xf32>,
    %c14 = arith.constant 14 : index
    %56 = memref.load %arg0[%c14] : memref<64xi32, #tpu.memory_space<smem>>
    %57 = arith.index_cast %56 : i32 to index
    %c0_42 = arith.constant 0 : index
    %58 = vector.load %arg1[%57, %c0_42] : memref<50x512xf32, #tpu.memory_space<vmem>>, vector<1x512xf32>
    %c14_43 = arith.constant 14 : index
    %c0_44 = arith.constant 0 : index
    %59 = vector.load %arg6[%c14_43, %c0_44] : memref<64x512xf32, #tpu.memory_space<vmem>>, vector<1x512xf32>
    tpu.vector_store %arg6[%c14_43, %c0_44], %58 {strides = array<i32>} : memref<64x512xf32, #tpu.memory_space<vmem>>, vector<1x512xf32>,
    %c15 = arith.constant 15 : index
    %60 = memref.load %arg0[%c15] : memref<64xi32, #tpu.memory_space<smem>>
    %61 = arith.index_cast %60 : i32 to index
    %c0_45 = arith.constant 0 : index
    %62 = vector.load %arg1[%61, %c0_45] : memref<50x512xf32, #tpu.memory_space<vmem>>, vector<1x512xf32>
    %c15_46 = arith.constant 15 : index
    %c0_47 = arith.constant 0 : index
    %63 = vector.load %arg6[%c15_46, %c0_47] : memref<64x512xf32, #tpu.memory_space<vmem>>, vector<1x512xf32>
    tpu.vector_store %arg6[%c15_46, %c0_47], %62 {strides = array<i32>} : memref<64x512xf32, #tpu.memory_space<vmem>>, vector<1x512xf32>,
    %c16 = arith.constant 16 : index
    %64 = memref.load %arg0[%c16] : memref<64xi32, #tpu.memory_space<smem>>
    %65 = arith.index_cast %64 : i32 to index
    %c0_48 = arith.constant 0 : index
    %66 = vector.load %arg1[%65, %c0_48] : memref<50x512xf32, #tpu.memory_space<vmem>>, vector<1x512xf32>
    %c16_49 = arith.constant 16 : index
    %c0_50 = arith.constant 0 : index
    %67 = vector.load %arg6[%c16_49, %c0_50] : memref<64x512xf32, #tpu.memory_space<vmem>>, vector<1x512xf32>
    tpu.vector_store %arg6[%c16_49, %c0_50], %66 {strides = array<i32>} : memref<64x512xf32, #tpu.memory_space<vmem>>, vector<1x512xf32>,
    %c17 = arith.constant 17 : index
    %68 = memref.load %arg0[%c17] : memref<64xi32, #tpu.memory_space<smem>>
    %69 = arith.index_cast %68 : i32 to index
    %c0_51 = arith.constant 0 : index
    %70 = vector.load %arg1[%69, %c0_51] : memref<50x512xf32, #tpu.memory_space<vmem>>, vector<1x512xf32>
    %c17_52 = arith.constant 17 : index
    %c0_53 = arith.constant 0 : index
    %71 = vector.load %arg6[%c17_52, %c0_53] : memref<64x512xf32, #tpu.memory_space<vmem>>, vector<1x512xf32>
    tpu.vector_store %arg6[%c17_52, %c0_53], %70 {strides = array<i32>} : memref<64x512xf32, #tpu.memory_space<vmem>>, vector<1x512xf32>,
    %c18 = arith.constant 18 : index
    %72 = memref.load %arg0[%c18] : memref<64xi32, #tpu.memory_space<smem>>
    %73 = arith.index_cast %72 : i32 to index
    %c0_54 = arith.constant 0 : index
    %74 = vector.load %arg1[%73, %c0_54] : memref<50x512xf32, #tpu.memory_space<vmem>>, vector<1x512xf32>
    %c18_55 = arith.constant 18 : index
    %c0_56 = arith.constant 0 : index
    %75 = vector.load %arg6[%c18_55, %c0_56] : memref<64x512xf32, #tpu.memory_space<vmem>>, vector<1x512xf32>
    tpu.vector_store %arg6[%c18_55, %c0_56], %74 {strides = array<i32>} : memref<64x512xf32, #tpu.memory_space<vmem>>, vector<1x512xf32>,
    %c19 = arith.constant 19 : index
    %76 = memref.load %arg0[%c19] : memref<64xi32, #tpu.memory_space<smem>>
    %77 = arith.index_cast %76 : i32 to index
    %c0_57 = arith.constant 0 : index
    %78 = vector.load %arg1[%77, %c0_57] : memref<50x512xf32, #tpu.memory_space<vmem>>, vector<1x512xf32>
    %c19_58 = arith.constant 19 : index
    %c0_59 = arith.constant 0 : index
    %79 = vector.load %arg6[%c19_58, %c0_59] : memref<64x512xf32, #tpu.memory_space<vmem>>, vector<1x512xf32>
    tpu.vector_store %arg6[%c19_58, %c0_59], %78 {strides = array<i32>} : memref<64x512xf32, #tpu.memory_space<vmem>>, vector<1x512xf32>,
    %c20 = arith.constant 20 : index
    %80 = memref.load %arg0[%c20] : memref<64xi32, #tpu.memory_space<smem>>
    %81 = arith.index_cast %80 : i32 to index
    %c0_60 = arith.constant 0 : index
    %82 = vector.load %arg1[%81, %c0_60] : memref<50x512xf32, #tpu.memory_space<vmem>>, vector<1x512xf32>
    %c20_61 = arith.constant 20 : index
    %c0_62 = arith.constant 0 : index
    %83 = vector.load %arg6[%c20_61, %c0_62] : memref<64x512xf32, #tpu.memory_space<vmem>>, vector<1x512xf32>
    tpu.vector_store %arg6[%c20_61, %c0_62], %82 {strides = array<i32>} : memref<64x512xf32, #tpu.memory_space<vmem>>, vector<1x512xf32>,
    %c21 = arith.constant 21 : index
    %84 = memref.load %arg0[%c21] : memref<64xi32, #tpu.memory_space<smem>>
    %85 = arith.index_cast %84 : i32 to index
    %c0_63 = arith.constant 0 : index
    %86 = vector.load %arg1[%85, %c0_63] : memref<50x512xf32, #tpu.memory_space<vmem>>, vector<1x512xf32>
    %c21_64 = arith.constant 21 : index
    %c0_65 = arith.constant 0 : index
    %87 = vector.load %arg6[%c21_64, %c0_65] : memref<64x512xf32, #tpu.memory_space<vmem>>, vector<1x512xf32>
    tpu.vector_store %arg6[%c21_64, %c0_65], %86 {strides = array<i32>} : memref<64x512xf32, #tpu.memory_space<vmem>>, vector<1x512xf32>,
    %c22 = arith.constant 22 : index
    %88 = memref.load %arg0[%c22] : memref<64xi32, #tpu.memory_space<smem>>
    %89 = arith.index_cast %88 : i32 to index
    %c0_66 = arith.constant 0 : index
    %90 = vector.load %arg1[%89, %c0_66] : memref<50x512xf32, #tpu.memory_space<vmem>>, vector<1x512xf32>
    %c22_67 = arith.constant 22 : index
    %c0_68 = arith.constant 0 : index
    %91 = vector.load %arg6[%c22_67, %c0_68] : memref<64x512xf32, #tpu.memory_space<vmem>>, vector<1x512xf32>
    tpu.vector_store %arg6[%c22_67, %c0_68], %90 {strides = array<i32>} : memref<64x512xf32, #tpu.memory_space<vmem>>, vector<1x512xf32>,
    %c23 = arith.constant 23 : index
    %92 = memref.load %arg0[%c23] : memref<64xi32, #tpu.memory_space<smem>>
    %93 = arith.index_cast %92 : i32 to index
    %c0_69 = arith.constant 0 : index
    %94 = vector.load %arg1[%93, %c0_69] : memref<50x512xf32, #tpu.memory_space<vmem>>, vector<1x512xf32>
    %c23_70 = arith.constant 23 : index
    %c0_71 = arith.constant 0 : index
    %95 = vector.load %arg6[%c23_70, %c0_71] : memref<64x512xf32, #tpu.memory_space<vmem>>, vector<1x512xf32>
    tpu.vector_store %arg6[%c23_70, %c0_71], %94 {strides = array<i32>} : memref<64x512xf32, #tpu.memory_space<vmem>>, vector<1x512xf32>,
    %c24 = arith.constant 24 : index
    %96 = memref.load %arg0[%c24] : memref<64xi32, #tpu.memory_space<smem>>
    %97 = arith.index_cast %96 : i32 to index
    %c0_72 = arith.constant 0 : index
    %98 = vector.load %arg1[%97, %c0_72] : memref<50x512xf32, #tpu.memory_space<vmem>>, vector<1x512xf32>
    %c24_73 = arith.constant 24 : index
    %c0_74 = arith.constant 0 : index
    %99 = vector.load %arg6[%c24_73, %c0_74] : memref<64x512xf32, #tpu.memory_space<vmem>>, vector<1x512xf32>
    tpu.vector_store %arg6[%c24_73, %c0_74], %98 {strides = array<i32>} : memref<64x512xf32, #tpu.memory_space<vmem>>, vector<1x512xf32>,
    %c25 = arith.constant 25 : index
    %100 = memref.load %arg0[%c25] : memref<64xi32, #tpu.memory_space<smem>>
    %101 = arith.index_cast %100 : i32 to index
    %c0_75 = arith.constant 0 : index
    %102 = vector.load %arg1[%101, %c0_75] : memref<50x512xf32, #tpu.memory_space<vmem>>, vector<1x512xf32>
    %c25_76 = arith.constant 25 : index
    %c0_77 = arith.constant 0 : index
    %103 = vector.load %arg6[%c25_76, %c0_77] : memref<64x512xf32, #tpu.memory_space<vmem>>, vector<1x512xf32>
    tpu.vector_store %arg6[%c25_76, %c0_77], %102 {strides = array<i32>} : memref<64x512xf32, #tpu.memory_space<vmem>>, vector<1x512xf32>,
    %c26 = arith.constant 26 : index
    %104 = memref.load %arg0[%c26] : memref<64xi32, #tpu.memory_space<smem>>
    %105 = arith.index_cast %104 : i32 to index
    %c0_78 = arith.constant 0 : index
    %106 = vector.load %arg1[%105, %c0_78] : memref<50x512xf32, #tpu.memory_space<vmem>>, vector<1x512xf32>
    %c26_79 = arith.constant 26 : index
    %c0_80 = arith.constant 0 : index
    %107 = vector.load %arg6[%c26_79, %c0_80] : memref<64x512xf32, #tpu.memory_space<vmem>>, vector<1x512xf32>
    tpu.vector_store %arg6[%c26_79, %c0_80], %106 {strides = array<i32>} : memref<64x512xf32, #tpu.memory_space<vmem>>, vector<1x512xf32>,
    %c27 = arith.constant 27 : index
    %108 = memref.load %arg0[%c27] : memref<64xi32, #tpu.memory_space<smem>>
    %109 = arith.index_cast %108 : i32 to index
    %c0_81 = arith.constant 0 : index
    %110 = vector.load %arg1[%109, %c0_81] : memref<50x512xf32, #tpu.memory_space<vmem>>, vector<1x512xf32>
    %c27_82 = arith.constant 27 : index
    %c0_83 = arith.constant 0 : index
    %111 = vector.load %arg6[%c27_82, %c0_83] : memref<64x512xf32, #tpu.memory_space<vmem>>, vector<1x512xf32>
    tpu.vector_store %arg6[%c27_82, %c0_83], %110 {strides = array<i32>} : memref<64x512xf32, #tpu.memory_space<vmem>>, vector<1x512xf32>,
    %c28 = arith.constant 28 : index
    %112 = memref.load %arg0[%c28] : memref<64xi32, #tpu.memory_space<smem>>
    %113 = arith.index_cast %112 : i32 to index
    %c0_84 = arith.constant 0 : index
    %114 = vector.load %arg1[%113, %c0_84] : memref<50x512xf32, #tpu.memory_space<vmem>>, vector<1x512xf32>
    %c28_85 = arith.constant 28 : index
    %c0_86 = arith.constant 0 : index
    %115 = vector.load %arg6[%c28_85, %c0_86] : memref<64x512xf32, #tpu.memory_space<vmem>>, vector<1x512xf32>
    tpu.vector_store %arg6[%c28_85, %c0_86], %114 {strides = array<i32>} : memref<64x512xf32, #tpu.memory_space<vmem>>, vector<1x512xf32>,
    %c29 = arith.constant 29 : index
    %116 = memref.load %arg0[%c29] : memref<64xi32, #tpu.memory_space<smem>>
    %117 = arith.index_cast %116 : i32 to index
    %c0_87 = arith.constant 0 : index
    %118 = vector.load %arg1[%117, %c0_87] : memref<50x512xf32, #tpu.memory_space<vmem>>, vector<1x512xf32>
    %c29_88 = arith.constant 29 : index
    %c0_89 = arith.constant 0 : index
    %119 = vector.load %arg6[%c29_88, %c0_89] : memref<64x512xf32, #tpu.memory_space<vmem>>, vector<1x512xf32>
    tpu.vector_store %arg6[%c29_88, %c0_89], %118 {strides = array<i32>} : memref<64x512xf32, #tpu.memory_space<vmem>>, vector<1x512xf32>,
    %c30 = arith.constant 30 : index
    %120 = memref.load %arg0[%c30] : memref<64xi32, #tpu.memory_space<smem>>
    %121 = arith.index_cast %120 : i32 to index
    %c0_90 = arith.constant 0 : index
    %122 = vector.load %arg1[%121, %c0_90] : memref<50x512xf32, #tpu.memory_space<vmem>>, vector<1x512xf32>
    %c30_91 = arith.constant 30 : index
    %c0_92 = arith.constant 0 : index
    %123 = vector.load %arg6[%c30_91, %c0_92] : memref<64x512xf32, #tpu.memory_space<vmem>>, vector<1x512xf32>
    tpu.vector_store %arg6[%c30_91, %c0_92], %122 {strides = array<i32>} : memref<64x512xf32, #tpu.memory_space<vmem>>, vector<1x512xf32>,
    %c31 = arith.constant 31 : index
    %124 = memref.load %arg0[%c31] : memref<64xi32, #tpu.memory_space<smem>>
    %125 = arith.index_cast %124 : i32 to index
    %c0_93 = arith.constant 0 : index
    %126 = vector.load %arg1[%125, %c0_93] : memref<50x512xf32, #tpu.memory_space<vmem>>, vector<1x512xf32>
    %c31_94 = arith.constant 31 : index
    %c0_95 = arith.constant 0 : index
    %127 = vector.load %arg6[%c31_94, %c0_95] : memref<64x512xf32, #tpu.memory_space<vmem>>, vector<1x512xf32>
    tpu.vector_store %arg6[%c31_94, %c0_95], %126 {strides = array<i32>} : memref<64x512xf32, #tpu.memory_space<vmem>>, vector<1x512xf32>,
    %c32 = arith.constant 32 : index
    %128 = memref.load %arg0[%c32] : memref<64xi32, #tpu.memory_space<smem>>
    %129 = arith.index_cast %128 : i32 to index
    %c0_96 = arith.constant 0 : index
    %130 = vector.load %arg1[%129, %c0_96] : memref<50x512xf32, #tpu.memory_space<vmem>>, vector<1x512xf32>
    %c32_97 = arith.constant 32 : index
    %c0_98 = arith.constant 0 : index
    %131 = vector.load %arg6[%c32_97, %c0_98] : memref<64x512xf32, #tpu.memory_space<vmem>>, vector<1x512xf32>
    tpu.vector_store %arg6[%c32_97, %c0_98], %130 {strides = array<i32>} : memref<64x512xf32, #tpu.memory_space<vmem>>, vector<1x512xf32>,
    %c33 = arith.constant 33 : index
    %132 = memref.load %arg0[%c33] : memref<64xi32, #tpu.memory_space<smem>>
    %133 = arith.index_cast %132 : i32 to index
    %c0_99 = arith.constant 0 : index
    %134 = vector.load %arg1[%133, %c0_99] : memref<50x512xf32, #tpu.memory_space<vmem>>, vector<1x512xf32>
    %c33_100 = arith.constant 33 : index
    %c0_101 = arith.constant 0 : index
    %135 = vector.load %arg6[%c33_100, %c0_101] : memref<64x512xf32, #tpu.memory_space<vmem>>, vector<1x512xf32>
    tpu.vector_store %arg6[%c33_100, %c0_101], %134 {strides = array<i32>} : memref<64x512xf32, #tpu.memory_space<vmem>>, vector<1x512xf32>,
    %c34 = arith.constant 34 : index
    %136 = memref.load %arg0[%c34] : memref<64xi32, #tpu.memory_space<smem>>
    %137 = arith.index_cast %136 : i32 to index
    %c0_102 = arith.constant 0 : index
    %138 = vector.load %arg1[%137, %c0_102] : memref<50x512xf32, #tpu.memory_space<vmem>>, vector<1x512xf32>
    %c34_103 = arith.constant 34 : index
    %c0_104 = arith.constant 0 : index
    %139 = vector.load %arg6[%c34_103, %c0_104] : memref<64x512xf32, #tpu.memory_space<vmem>>, vector<1x512xf32>
    tpu.vector_store %arg6[%c34_103, %c0_104], %138 {strides = array<i32>} : memref<64x512xf32, #tpu.memory_space<vmem>>, vector<1x512xf32>,
    %c35 = arith.constant 35 : index
    %140 = memref.load %arg0[%c35] : memref<64xi32, #tpu.memory_space<smem>>
    %141 = arith.index_cast %140 : i32 to index
    %c0_105 = arith.constant 0 : index
    %142 = vector.load %arg1[%141, %c0_105] : memref<50x512xf32, #tpu.memory_space<vmem>>, vector<1x512xf32>
    %c35_106 = arith.constant 35 : index
    %c0_107 = arith.constant 0 : index
    %143 = vector.load %arg6[%c35_106, %c0_107] : memref<64x512xf32, #tpu.memory_space<vmem>>, vector<1x512xf32>
    tpu.vector_store %arg6[%c35_106, %c0_107], %142 {strides = array<i32>} : memref<64x512xf32, #tpu.memory_space<vmem>>, vector<1x512xf32>,
    %c36 = arith.constant 36 : index
    %144 = memref.load %arg0[%c36] : memref<64xi32, #tpu.memory_space<smem>>
    %145 = arith.index_cast %144 : i32 to index
    %c0_108 = arith.constant 0 : index
    %146 = vector.load %arg1[%145, %c0_108] : memref<50x512xf32, #tpu.memory_space<vmem>>, vector<1x512xf32>
    %c36_109 = arith.constant 36 : index
    %c0_110 = arith.constant 0 : index
    %147 = vector.load %arg6[%c36_109, %c0_110] : memref<64x512xf32, #tpu.memory_space<vmem>>, vector<1x512xf32>
    tpu.vector_store %arg6[%c36_109, %c0_110], %146 {strides = array<i32>} : memref<64x512xf32, #tpu.memory_space<vmem>>, vector<1x512xf32>,
    %c37 = arith.constant 37 : index
    %148 = memref.load %arg0[%c37] : memref<64xi32, #tpu.memory_space<smem>>
    %149 = arith.index_cast %148 : i32 to index
    %c0_111 = arith.constant 0 : index
    %150 = vector.load %arg1[%149, %c0_111] : memref<50x512xf32, #tpu.memory_space<vmem>>, vector<1x512xf32>
    %c37_112 = arith.constant 37 : index
    %c0_113 = arith.constant 0 : index
    %151 = vector.load %arg6[%c37_112, %c0_113] : memref<64x512xf32, #tpu.memory_space<vmem>>, vector<1x512xf32>
    tpu.vector_store %arg6[%c37_112, %c0_113], %150 {strides = array<i32>} : memref<64x512xf32, #tpu.memory_space<vmem>>, vector<1x512xf32>,
    %c38 = arith.constant 38 : index
    %152 = memref.load %arg0[%c38] : memref<64xi32, #tpu.memory_space<smem>>
    %153 = arith.index_cast %152 : i32 to index
    %c0_114 = arith.constant 0 : index
    %154 = vector.load %arg1[%153, %c0_114] : memref<50x512xf32, #tpu.memory_space<vmem>>, vector<1x512xf32>
    %c38_115 = arith.constant 38 : index
    %c0_116 = arith.constant 0 : index
    %155 = vector.load %arg6[%c38_115, %c0_116] : memref<64x512xf32, #tpu.memory_space<vmem>>, vector<1x512xf32>
    tpu.vector_store %arg6[%c38_115, %c0_116], %154 {strides = array<i32>} : memref<64x512xf32, #tpu.memory_space<vmem>>, vector<1x512xf32>,
    %c39 = arith.constant 39 : index
    %156 = memref.load %arg0[%c39] : memref<64xi32, #tpu.memory_space<smem>>
    %157 = arith.index_cast %156 : i32 to index
    %c0_117 = arith.constant 0 : index
    %158 = vector.load %arg1[%157, %c0_117] : memref<50x512xf32, #tpu.memory_space<vmem>>, vector<1x512xf32>
    %c39_118 = arith.constant 39 : index
    %c0_119 = arith.constant 0 : index
    %159 = vector.load %arg6[%c39_118, %c0_119] : memref<64x512xf32, #tpu.memory_space<vmem>>, vector<1x512xf32>
    tpu.vector_store %arg6[%c39_118, %c0_119], %158 {strides = array<i32>} : memref<64x512xf32, #tpu.memory_space<vmem>>, vector<1x512xf32>,
    %c40 = arith.constant 40 : index
    %160 = memref.load %arg0[%c40] : memref<64xi32, #tpu.memory_space<smem>>
    %161 = arith.index_cast %160 : i32 to index
    %c0_120 = arith.constant 0 : index
    %162 = vector.load %arg1[%161, %c0_120] : memref<50x512xf32, #tpu.memory_space<vmem>>, vector<1x512xf32>
    %c40_121 = arith.constant 40 : index
    %c0_122 = arith.constant 0 : index
    %163 = vector.load %arg6[%c40_121, %c0_122] : memref<64x512xf32, #tpu.memory_space<vmem>>, vector<1x512xf32>
    tpu.vector_store %arg6[%c40_121, %c0_122], %162 {strides = array<i32>} : memref<64x512xf32, #tpu.memory_space<vmem>>, vector<1x512xf32>,
    %c41 = arith.constant 41 : index
    %164 = memref.load %arg0[%c41] : memref<64xi32, #tpu.memory_space<smem>>
    %165 = arith.index_cast %164 : i32 to index
    %c0_123 = arith.constant 0 : index
    %166 = vector.load %arg1[%165, %c0_123] : memref<50x512xf32, #tpu.memory_space<vmem>>, vector<1x512xf32>
    %c41_124 = arith.constant 41 : index
    %c0_125 = arith.constant 0 : index
    %167 = vector.load %arg6[%c41_124, %c0_125] : memref<64x512xf32, #tpu.memory_space<vmem>>, vector<1x512xf32>
    tpu.vector_store %arg6[%c41_124, %c0_125], %166 {strides = array<i32>} : memref<64x512xf32, #tpu.memory_space<vmem>>, vector<1x512xf32>,
    %c42 = arith.constant 42 : index
    %168 = memref.load %arg0[%c42] : memref<64xi32, #tpu.memory_space<smem>>
    %169 = arith.index_cast %168 : i32 to index
    %c0_126 = arith.constant 0 : index
    %170 = vector.load %arg1[%169, %c0_126] : memref<50x512xf32, #tpu.memory_space<vmem>>, vector<1x512xf32>
    %c42_127 = arith.constant 42 : index
    %c0_128 = arith.constant 0 : index
    %171 = vector.load %arg6[%c42_127, %c0_128] : memref<64x512xf32, #tpu.memory_space<vmem>>, vector<1x512xf32>
    tpu.vector_store %arg6[%c42_127, %c0_128], %170 {strides = array<i32>} : memref<64x512xf32, #tpu.memory_space<vmem>>, vector<1x512xf32>,
    %c43 = arith.constant 43 : index
    %172 = memref.load %arg0[%c43] : memref<64xi32, #tpu.memory_space<smem>>
    %173 = arith.index_cast %172 : i32 to index
    %c0_129 = arith.constant 0 : index
    %174 = vector.load %arg1[%173, %c0_129] : memref<50x512xf32, #tpu.memory_space<vmem>>, vector<1x512xf32>
    %c43_130 = arith.constant 43 : index
    %c0_131 = arith.constant 0 : index
    %175 = vector.load %arg6[%c43_130, %c0_131] : memref<64x512xf32, #tpu.memory_space<vmem>>, vector<1x512xf32>
    tpu.vector_store %arg6[%c43_130, %c0_131], %174 {strides = array<i32>} : memref<64x512xf32, #tpu.memory_space<vmem>>, vector<1x512xf32>,
    %c44 = arith.constant 44 : index
    %176 = memref.load %arg0[%c44] : memref<64xi32, #tpu.memory_space<smem>>
    %177 = arith.index_cast %176 : i32 to index
    %c0_132 = arith.constant 0 : index
    %178 = vector.load %arg1[%177, %c0_132] : memref<50x512xf32, #tpu.memory_space<vmem>>, vector<1x512xf32>
    %c44_133 = arith.constant 44 : index
    %c0_134 = arith.constant 0 : index
    %179 = vector.load %arg6[%c44_133, %c0_134] : memref<64x512xf32, #tpu.memory_space<vmem>>, vector<1x512xf32>
    tpu.vector_store %arg6[%c44_133, %c0_134], %178 {strides = array<i32>} : memref<64x512xf32, #tpu.memory_space<vmem>>, vector<1x512xf32>,
    %c45 = arith.constant 45 : index
    %180 = memref.load %arg0[%c45] : memref<64xi32, #tpu.memory_space<smem>>
    %181 = arith.index_cast %180 : i32 to index
    %c0_135 = arith.constant 0 : index
    %182 = vector.load %arg1[%181, %c0_135] : memref<50x512xf32, #tpu.memory_space<vmem>>, vector<1x512xf32>
    %c45_136 = arith.constant 45 : index
    %c0_137 = arith.constant 0 : index
    %183 = vector.load %arg6[%c45_136, %c0_137] : memref<64x512xf32, #tpu.memory_space<vmem>>, vector<1x512xf32>
    tpu.vector_store %arg6[%c45_136, %c0_137], %182 {strides = array<i32>} : memref<64x512xf32, #tpu.memory_space<vmem>>, vector<1x512xf32>,
    %c46 = arith.constant 46 : index
    %184 = memref.load %arg0[%c46] : memref<64xi32, #tpu.memory_space<smem>>
    %185 = arith.index_cast %184 : i32 to index
    %c0_138 = arith.constant 0 : index
    %186 = vector.load %arg1[%185, %c0_138] : memref<50x512xf32, #tpu.memory_space<vmem>>, vector<1x512xf32>
    %c46_139 = arith.constant 46 : index
    %c0_140 = arith.constant 0 : index
    %187 = vector.load %arg6[%c46_139, %c0_140] : memref<64x512xf32, #tpu.memory_space<vmem>>, vector<1x512xf32>
    tpu.vector_store %arg6[%c46_139, %c0_140], %186 {strides = array<i32>} : memref<64x512xf32, #tpu.memory_space<vmem>>, vector<1x512xf32>,
    %c47 = arith.constant 47 : index
    %188 = memref.load %arg0[%c47] : memref<64xi32, #tpu.memory_space<smem>>
    %189 = arith.index_cast %188 : i32 to index
    %c0_141 = arith.constant 0 : index
    %190 = vector.load %arg1[%189, %c0_141] : memref<50x512xf32, #tpu.memory_space<vmem>>, vector<1x512xf32>
    %c47_142 = arith.constant 47 : index
    %c0_143 = arith.constant 0 : index
    %191 = vector.load %arg6[%c47_142, %c0_143] : memref<64x512xf32, #tpu.memory_space<vmem>>, vector<1x512xf32>
    tpu.vector_store %arg6[%c47_142, %c0_143], %190 {strides = array<i32>} : memref<64x512xf32, #tpu.memory_space<vmem>>, vector<1x512xf32>,
    %c48 = arith.constant 48 : index
    %192 = memref.load %arg0[%c48] : memref<64xi32, #tpu.memory_space<smem>>
    %193 = arith.index_cast %192 : i32 to index
    %c0_144 = arith.constant 0 : index
    %194 = vector.load %arg1[%193, %c0_144] : memref<50x512xf32, #tpu.memory_space<vmem>>, vector<1x512xf32>
    %c48_145 = arith.constant 48 : index
    %c0_146 = arith.constant 0 : index
    %195 = vector.load %arg6[%c48_145, %c0_146] : memref<64x512xf32, #tpu.memory_space<vmem>>, vector<1x512xf32>
    tpu.vector_store %arg6[%c48_145, %c0_146], %194 {strides = array<i32>} : memref<64x512xf32, #tpu.memory_space<vmem>>, vector<1x512xf32>,
    %c49 = arith.constant 49 : index
    %196 = memref.load %arg0[%c49] : memref<64xi32, #tpu.memory_space<smem>>
    %197 = arith.index_cast %196 : i32 to index
    %c0_147 = arith.constant 0 : index
    %198 = vector.load %arg1[%197, %c0_147] : memref<50x512xf32, #tpu.memory_space<vmem>>, vector<1x512xf32>
    %c49_148 = arith.constant 49 : index
    %c0_149 = arith.constant 0 : index
    %199 = vector.load %arg6[%c49_148, %c0_149] : memref<64x512xf32, #tpu.memory_space<vmem>>, vector<1x512xf32>
    tpu.vector_store %arg6[%c49_148, %c0_149], %198 {strides = array<i32>} : memref<64x512xf32, #tpu.memory_space<vmem>>, vector<1x512xf32>,
    %c50 = arith.constant 50 : index
    %200 = memref.load %arg0[%c50] : memref<64xi32, #tpu.memory_space<smem>>
    %201 = arith.index_cast %200 : i32 to index
    %c0_150 = arith.constant 0 : index
    %202 = vector.load %arg1[%201, %c0_150] : memref<50x512xf32, #tpu.memory_space<vmem>>, vector<1x512xf32>
    %c50_151 = arith.constant 50 : index
    %c0_152 = arith.constant 0 : index
    %203 = vector.load %arg6[%c50_151, %c0_152] : memref<64x512xf32, #tpu.memory_space<vmem>>, vector<1x512xf32>
    tpu.vector_store %arg6[%c50_151, %c0_152], %202 {strides = array<i32>} : memref<64x512xf32, #tpu.memory_space<vmem>>, vector<1x512xf32>,
    %c51 = arith.constant 51 : index
    %204 = memref.load %arg0[%c51] : memref<64xi32, #tpu.memory_space<smem>>
    %205 = arith.index_cast %204 : i32 to index
    %c0_153 = arith.constant 0 : index
    %206 = vector.load %arg1[%205, %c0_153] : memref<50x512xf32, #tpu.memory_space<vmem>>, vector<1x512xf32>
    %c51_154 = arith.constant 51 : index
    %c0_155 = arith.constant 0 : index
    %207 = vector.load %arg6[%c51_154, %c0_155] : memref<64x512xf32, #tpu.memory_space<vmem>>, vector<1x512xf32>
    tpu.vector_store %arg6[%c51_154, %c0_155], %206 {strides = array<i32>} : memref<64x512xf32, #tpu.memory_space<vmem>>, vector<1x512xf32>,
    %c52 = arith.constant 52 : index
    %208 = memref.load %arg0[%c52] : memref<64xi32, #tpu.memory_space<smem>>
    %209 = arith.index_cast %208 : i32 to index
    %c0_156 = arith.constant 0 : index
    %210 = vector.load %arg1[%209, %c0_156] : memref<50x512xf32, #tpu.memory_space<vmem>>, vector<1x512xf32>
    %c52_157 = arith.constant 52 : index
    %c0_158 = arith.constant 0 : index
    %211 = vector.load %arg6[%c52_157, %c0_158] : memref<64x512xf32, #tpu.memory_space<vmem>>, vector<1x512xf32>
    tpu.vector_store %arg6[%c52_157, %c0_158], %210 {strides = array<i32>} : memref<64x512xf32, #tpu.memory_space<vmem>>, vector<1x512xf32>,
    %c53 = arith.constant 53 : index
    %212 = memref.load %arg0[%c53] : memref<64xi32, #tpu.memory_space<smem>>
    %213 = arith.index_cast %212 : i32 to index
    %c0_159 = arith.constant 0 : index
    %214 = vector.load %arg1[%213, %c0_159] : memref<50x512xf32, #tpu.memory_space<vmem>>, vector<1x512xf32>
    %c53_160 = arith.constant 53 : index
    %c0_161 = arith.constant 0 : index
    %215 = vector.load %arg6[%c53_160, %c0_161] : memref<64x512xf32, #tpu.memory_space<vmem>>, vector<1x512xf32>
    tpu.vector_store %arg6[%c53_160, %c0_161], %214 {strides = array<i32>} : memref<64x512xf32, #tpu.memory_space<vmem>>, vector<1x512xf32>,
    %c54 = arith.constant 54 : index
    %216 = memref.load %arg0[%c54] : memref<64xi32, #tpu.memory_space<smem>>
    %217 = arith.index_cast %216 : i32 to index
    %c0_162 = arith.constant 0 : index
    %218 = vector.load %arg1[%217, %c0_162] : memref<50x512xf32, #tpu.memory_space<vmem>>, vector<1x512xf32>
    %c54_163 = arith.constant 54 : index
    %c0_164 = arith.constant 0 : index
    %219 = vector.load %arg6[%c54_163, %c0_164] : memref<64x512xf32, #tpu.memory_space<vmem>>, vector<1x512xf32>
    tpu.vector_store %arg6[%c54_163, %c0_164], %218 {strides = array<i32>} : memref<64x512xf32, #tpu.memory_space<vmem>>, vector<1x512xf32>,
    %c55 = arith.constant 55 : index
    %220 = memref.load %arg0[%c55] : memref<64xi32, #tpu.memory_space<smem>>
    %221 = arith.index_cast %220 : i32 to index
    %c0_165 = arith.constant 0 : index
    %222 = vector.load %arg1[%221, %c0_165] : memref<50x512xf32, #tpu.memory_space<vmem>>, vector<1x512xf32>
    %c55_166 = arith.constant 55 : index
    %c0_167 = arith.constant 0 : index
    %223 = vector.load %arg6[%c55_166, %c0_167] : memref<64x512xf32, #tpu.memory_space<vmem>>, vector<1x512xf32>
    tpu.vector_store %arg6[%c55_166, %c0_167], %222 {strides = array<i32>} : memref<64x512xf32, #tpu.memory_space<vmem>>, vector<1x512xf32>,
    %c56 = arith.constant 56 : index
    %224 = memref.load %arg0[%c56] : memref<64xi32, #tpu.memory_space<smem>>
    %225 = arith.index_cast %224 : i32 to index
    %c0_168 = arith.constant 0 : index
    %226 = vector.load %arg1[%225, %c0_168] : memref<50x512xf32, #tpu.memory_space<vmem>>, vector<1x512xf32>
    %c56_169 = arith.constant 56 : index
    %c0_170 = arith.constant 0 : index
    %227 = vector.load %arg6[%c56_169, %c0_170] : memref<64x512xf32, #tpu.memory_space<vmem>>, vector<1x512xf32>
    tpu.vector_store %arg6[%c56_169, %c0_170], %226 {strides = array<i32>} : memref<64x512xf32, #tpu.memory_space<vmem>>, vector<1x512xf32>,
    %c57 = arith.constant 57 : index
    %228 = memref.load %arg0[%c57] : memref<64xi32, #tpu.memory_space<smem>>
    %229 = arith.index_cast %228 : i32 to index
    %c0_171 = arith.constant 0 : index
    %230 = vector.load %arg1[%229, %c0_171] : memref<50x512xf32, #tpu.memory_space<vmem>>, vector<1x512xf32>
    %c57_172 = arith.constant 57 : index
    %c0_173 = arith.constant 0 : index
    %231 = vector.load %arg6[%c57_172, %c0_173] : memref<64x512xf32, #tpu.memory_space<vmem>>, vector<1x512xf32>
    tpu.vector_store %arg6[%c57_172, %c0_173], %230 {strides = array<i32>} : memref<64x512xf32, #tpu.memory_space<vmem>>, vector<1x512xf32>,
    %c58 = arith.constant 58 : index
    %232 = memref.load %arg0[%c58] : memref<64xi32, #tpu.memory_space<smem>>
    %233 = arith.index_cast %232 : i32 to index
    %c0_174 = arith.constant 0 : index
    %234 = vector.load %arg1[%233, %c0_174] : memref<50x512xf32, #tpu.memory_space<vmem>>, vector<1x512xf32>
    %c58_175 = arith.constant 58 : index
    %c0_176 = arith.constant 0 : index
    %235 = vector.load %arg6[%c58_175, %c0_176] : memref<64x512xf32, #tpu.memory_space<vmem>>, vector<1x512xf32>
    tpu.vector_store %arg6[%c58_175, %c0_176], %234 {strides = array<i32>} : memref<64x512xf32, #tpu.memory_space<vmem>>, vector<1x512xf32>,
    %c59 = arith.constant 59 : index
    %236 = memref.load %arg0[%c59] : memref<64xi32, #tpu.memory_space<smem>>
    %237 = arith.index_cast %236 : i32 to index
    %c0_177 = arith.constant 0 : index
    %238 = vector.load %arg1[%237, %c0_177] : memref<50x512xf32, #tpu.memory_space<vmem>>, vector<1x512xf32>
    %c59_178 = arith.constant 59 : index
    %c0_179 = arith.constant 0 : index
    %239 = vector.load %arg6[%c59_178, %c0_179] : memref<64x512xf32, #tpu.memory_space<vmem>>, vector<1x512xf32>
    tpu.vector_store %arg6[%c59_178, %c0_179], %238 {strides = array<i32>} : memref<64x512xf32, #tpu.memory_space<vmem>>, vector<1x512xf32>,
    %c60 = arith.constant 60 : index
    %240 = memref.load %arg0[%c60] : memref<64xi32, #tpu.memory_space<smem>>
    %241 = arith.index_cast %240 : i32 to index
    %c0_180 = arith.constant 0 : index
    %242 = vector.load %arg1[%241, %c0_180] : memref<50x512xf32, #tpu.memory_space<vmem>>, vector<1x512xf32>
    %c60_181 = arith.constant 60 : index
    %c0_182 = arith.constant 0 : index
    %243 = vector.load %arg6[%c60_181, %c0_182] : memref<64x512xf32, #tpu.memory_space<vmem>>, vector<1x512xf32>
    tpu.vector_store %arg6[%c60_181, %c0_182], %242 {strides = array<i32>} : memref<64x512xf32, #tpu.memory_space<vmem>>, vector<1x512xf32>,
    %c61 = arith.constant 61 : index
    %244 = memref.load %arg0[%c61] : memref<64xi32, #tpu.memory_space<smem>>
    %245 = arith.index_cast %244 : i32 to index
    %c0_183 = arith.constant 0 : index
    %246 = vector.load %arg1[%245, %c0_183] : memref<50x512xf32, #tpu.memory_space<vmem>>, vector<1x512xf32>
    %c61_184 = arith.constant 61 : index
    %c0_185 = arith.constant 0 : index
    %247 = vector.load %arg6[%c61_184, %c0_185] : memref<64x512xf32, #tpu.memory_space<vmem>>, vector<1x512xf32>
    tpu.vector_store %arg6[%c61_184, %c0_185], %246 {strides = array<i32>} : memref<64x512xf32, #tpu.memory_space<vmem>>, vector<1x512xf32>,
    %c62 = arith.constant 62 : index
    %248 = memref.load %arg0[%c62] : memref<64xi32, #tpu.memory_space<smem>>
    %249 = arith.index_cast %248 : i32 to index
    %c0_186 = arith.constant 0 : index
    %250 = vector.load %arg1[%249, %c0_186] : memref<50x512xf32, #tpu.memory_space<vmem>>, vector<1x512xf32>
    %c62_187 = arith.constant 62 : index
    %c0_188 = arith.constant 0 : index
    %251 = vector.load %arg6[%c62_187, %c0_188] : memref<64x512xf32, #tpu.memory_space<vmem>>, vector<1x512xf32>
    tpu.vector_store %arg6[%c62_187, %c0_188], %250 {strides = array<i32>} : memref<64x512xf32, #tpu.memory_space<vmem>>, vector<1x512xf32>,
    %c63 = arith.constant 63 : index
    %252 = memref.load %arg0[%c63] : memref<64xi32, #tpu.memory_space<smem>>
    %253 = arith.index_cast %252 : i32 to index
    %c0_189 = arith.constant 0 : index
    %254 = vector.load %arg1[%253, %c0_189] : memref<50x512xf32, #tpu.memory_space<vmem>>, vector<1x512xf32>
    %c63_190 = arith.constant 63 : index
    %c0_191 = arith.constant 0 : index
    %255 = vector.load %arg6[%c63_190, %c0_191] : memref<64x512xf32, #tpu.memory_space<vmem>>, vector<1x512xf32>
    tpu.vector_store %arg6[%c63_190, %c0_191], %254 {strides = array<i32>} : memref<64x512xf32, #tpu.memory_space<vmem>>, vector<1x512xf32>,
    %c0_192 = arith.constant 0 : index
    %c0_193 = arith.constant 0 : index
    %256 = vector.load %arg2[%c0_192, %c0_193] : memref<128x512xbf16, #tpu.memory_space<vmem>>, vector<128x512xbf16>
    %c0_194 = arith.constant 0 : index
    %c0_195 = arith.constant 0 : index
    %257 = vector.load %arg6[%c0_194, %c0_195] : memref<64x512xf32, #tpu.memory_space<vmem>>, vector<8x512xf32>
    %258 = vector.extract_strided_slice %257 {offsets = [0, 0], sizes = [8, 128], strides = [1, 1]} : vector<8x512xf32> to vector<8x128xf32>
    %cst = arith.constant 5.000000e-01 : f32
    %259 = vector.broadcast %cst : f32 to vector<8x128xf32>
    %260 = arith.mulf %259, %258 : vector<8x128xf32>
    %261 = math.tanh %260 : vector<8x128xf32>
    %cst_196 = arith.constant 5.000000e-01 : f32
    %262 = vector.broadcast %cst_196 : f32 to vector<8x128xf32>
    %263 = arith.mulf %262, %261 : vector<8x128xf32>
    %cst_197 = arith.constant 5.000000e-01 : f32
    %264 = vector.broadcast %cst_197 : f32 to vector<8x128xf32>
    %265 = arith.addf %263, %264 : vector<8x128xf32>
    %266 = vector.extract_strided_slice %257 {offsets = [0, 256], sizes = [8, 128], strides = [1, 1]} : vector<8x512xf32> to vector<8x128xf32>
    %267 = math.tanh %266 : vector<8x128xf32>
    %268 = vector.extract_strided_slice %257 {offsets = [0, 384], sizes = [8, 128], strides = [1, 1]} : vector<8x512xf32> to vector<8x128xf32>
    %cst_198 = arith.constant 5.000000e-01 : f32
    %269 = vector.broadcast %cst_198 : f32 to vector<8x128xf32>
    %270 = arith.mulf %269, %268 : vector<8x128xf32>
    %271 = math.tanh %270 : vector<8x128xf32>
    %cst_199 = arith.constant 5.000000e-01 : f32
    %272 = vector.broadcast %cst_199 : f32 to vector<8x128xf32>
    %273 = arith.mulf %272, %271 : vector<8x128xf32>
    %cst_200 = arith.constant 5.000000e-01 : f32
    %274 = vector.broadcast %cst_200 : f32 to vector<8x128xf32>
    %275 = arith.addf %273, %274 : vector<8x128xf32>
    %276 = arith.mulf %265, %267 : vector<8x128xf32>
    %277 = math.tanh %276 : vector<8x128xf32>
    %278 = arith.mulf %275, %277 : vector<8x128xf32>
    %c1_i32 = arith.constant 1 : i32
    %c8_i32 = arith.constant 8 : i32
    %279 = arith.muli %c1_i32, %c8_i32 : i32
    %280 = tpu.assume_multiple %279, 8 : i32
    %281 = arith.index_cast %280 : i32 to index
    %c0_201 = arith.constant 0 : index
    %282 = vector.load %arg6[%281, %c0_201] : memref<64x512xf32, #tpu.memory_space<vmem>>, vector<8x512xf32>
    %283 = arith.truncf %278 : vector<8x128xf32> to vector<8x128xbf16>
    %cst_202 = arith.constant dense<0.000000e+00> : vector<8x512xf32>
    %284 = tpu.matmul %283, %256, %cst_202 {dimension_numbers = #tpu.dot_dimension_numbers<[1], [0], [0], [1], [0, 0, 1, 1], [], []>} : vector<8x128xbf16>, vector<128x512xbf16>, vector<8x512xf32> -> vector<8x512xf32>
    %285 = arith.addf %282, %284 : vector<8x512xf32>
    %286 = vector.extract_strided_slice %285 {offsets = [0, 0], sizes = [8, 128], strides = [1, 1]} : vector<8x512xf32> to vector<8x128xf32>
    %cst_203 = arith.constant 5.000000e-01 : f32
    %287 = vector.broadcast %cst_203 : f32 to vector<8x128xf32>
    %288 = arith.mulf %287, %286 : vector<8x128xf32>
    %289 = math.tanh %288 : vector<8x128xf32>
    %cst_204 = arith.constant 5.000000e-01 : f32
    %290 = vector.broadcast %cst_204 : f32 to vector<8x128xf32>
    %291 = arith.mulf %290, %289 : vector<8x128xf32>
    %cst_205 = arith.constant 5.000000e-01 : f32
    %292 = vector.broadcast %cst_205 : f32 to vector<8x128xf32>
    %293 = arith.addf %291, %292 : vector<8x128xf32>
    %294 = vector.extract_strided_slice %285 {offsets = [0, 128], sizes = [8, 128], strides = [1, 1]} : vector<8x512xf32> to vector<8x128xf32>
    %cst_206 = arith.constant 5.000000e-01 : f32
    %295 = vector.broadcast %cst_206 : f32 to vector<8x128xf32>
    %296 = arith.mulf %295, %294 : vector<8x128xf32>
    %297 = math.tanh %296 : vector<8x128xf32>
    %cst_207 = arith.constant 5.000000e-01 : f32
    %298 = vector.broadcast %cst_207 : f32 to vector<8x128xf32>
    %299 = arith.mulf %298, %297 : vector<8x128xf32>
    %cst_208 = arith.constant 5.000000e-01 : f32
    %300 = vector.broadcast %cst_208 : f32 to vector<8x128xf32>
    %301 = arith.addf %299, %300 : vector<8x128xf32>
    %302 = vector.extract_strided_slice %285 {offsets = [0, 256], sizes = [8, 128], strides = [1, 1]} : vector<8x512xf32> to vector<8x128xf32>
    %303 = math.tanh %302 : vector<8x128xf32>
    %304 = vector.extract_strided_slice %285 {offsets = [0, 384], sizes = [8, 128], strides = [1, 1]} : vector<8x512xf32> to vector<8x128xf32>
    %cst_209 = arith.constant 5.000000e-01 : f32
    %305 = vector.broadcast %cst_209 : f32 to vector<8x128xf32>
    %306 = arith.mulf %305, %304 : vector<8x128xf32>
    %307 = math.tanh %306 : vector<8x128xf32>
    %cst_210 = arith.constant 5.000000e-01 : f32
    %308 = vector.broadcast %cst_210 : f32 to vector<8x128xf32>
    %309 = arith.mulf %308, %307 : vector<8x128xf32>
    %cst_211 = arith.constant 5.000000e-01 : f32
    %310 = vector.broadcast %cst_211 : f32 to vector<8x128xf32>
    %311 = arith.addf %309, %310 : vector<8x128xf32>
    %312 = arith.mulf %301, %276 : vector<8x128xf32>
    %313 = arith.mulf %293, %303 : vector<8x128xf32>
    %314 = arith.addf %312, %313 : vector<8x128xf32>
    %315 = math.tanh %314 : vector<8x128xf32>
    %316 = arith.mulf %311, %315 : vector<8x128xf32>
    %c2_i32 = arith.constant 2 : i32
    %c8_i32_212 = arith.constant 8 : i32
    %317 = arith.muli %c2_i32, %c8_i32_212 : i32
    %318 = tpu.assume_multiple %317, 8 : i32
    %319 = arith.index_cast %318 : i32 to index
    %c0_213 = arith.constant 0 : index
    %320 = vector.load %arg6[%319, %c0_213] : memref<64x512xf32, #tpu.memory_space<vmem>>, vector<8x512xf32>
    %321 = arith.truncf %316 : vector<8x128xf32> to vector<8x128xbf16>
    %cst_214 = arith.constant dense<0.000000e+00> : vector<8x512xf32>
    %322 = tpu.matmul %321, %256, %cst_214 {dimension_numbers = #tpu.dot_dimension_numbers<[1], [0], [0], [1], [0, 0, 1, 1], [], []>} : vector<8x128xbf16>, vector<128x512xbf16>, vector<8x512xf32> -> vector<8x512xf32>
    %323 = arith.addf %320, %322 : vector<8x512xf32>
    %324 = vector.extract_strided_slice %323 {offsets = [0, 0], sizes = [8, 128], strides = [1, 1]} : vector<8x512xf32> to vector<8x128xf32>
    %cst_215 = arith.constant 5.000000e-01 : f32
    %325 = vector.broadcast %cst_215 : f32 to vector<8x128xf32>
    %326 = arith.mulf %325, %324 : vector<8x128xf32>
    %327 = math.tanh %326 : vector<8x128xf32>
    %cst_216 = arith.constant 5.000000e-01 : f32
    %328 = vector.broadcast %cst_216 : f32 to vector<8x128xf32>
    %329 = arith.mulf %328, %327 : vector<8x128xf32>
    %cst_217 = arith.constant 5.000000e-01 : f32
    %330 = vector.broadcast %cst_217 : f32 to vector<8x128xf32>
    %331 = arith.addf %329, %330 : vector<8x128xf32>
    %332 = vector.extract_strided_slice %323 {offsets = [0, 128], sizes = [8, 128], strides = [1, 1]} : vector<8x512xf32> to vector<8x128xf32>
    %cst_218 = arith.constant 5.000000e-01 : f32
    %333 = vector.broadcast %cst_218 : f32 to vector<8x128xf32>
    %334 = arith.mulf %333, %332 : vector<8x128xf32>
    %335 = math.tanh %334 : vector<8x128xf32>
    %cst_219 = arith.constant 5.000000e-01 : f32
    %336 = vector.broadcast %cst_219 : f32 to vector<8x128xf32>
    %337 = arith.mulf %336, %335 : vector<8x128xf32>
    %cst_220 = arith.constant 5.000000e-01 : f32
    %338 = vector.broadcast %cst_220 : f32 to vector<8x128xf32>
    %339 = arith.addf %337, %338 : vector<8x128xf32>
    %340 = vector.extract_strided_slice %323 {offsets = [0, 256], sizes = [8, 128], strides = [1, 1]} : vector<8x512xf32> to vector<8x128xf32>
    %341 = math.tanh %340 : vector<8x128xf32>
    %342 = vector.extract_strided_slice %323 {offsets = [0, 384], sizes = [8, 128], strides = [1, 1]} : vector<8x512xf32> to vector<8x128xf32>
    %cst_221 = arith.constant 5.000000e-01 : f32
    %343 = vector.broadcast %cst_221 : f32 to vector<8x128xf32>
    %344 = arith.mulf %343, %342 : vector<8x128xf32>
    %345 = math.tanh %344 : vector<8x128xf32>
    %cst_222 = arith.constant 5.000000e-01 : f32
    %346 = vector.broadcast %cst_222 : f32 to vector<8x128xf32>
    %347 = arith.mulf %346, %345 : vector<8x128xf32>
    %cst_223 = arith.constant 5.000000e-01 : f32
    %348 = vector.broadcast %cst_223 : f32 to vector<8x128xf32>
    %349 = arith.addf %347, %348 : vector<8x128xf32>
    %350 = arith.mulf %339, %314 : vector<8x128xf32>
    %351 = arith.mulf %331, %341 : vector<8x128xf32>
    %352 = arith.addf %350, %351 : vector<8x128xf32>
    %353 = math.tanh %352 : vector<8x128xf32>
    %354 = arith.mulf %349, %353 : vector<8x128xf32>
    %c3_i32 = arith.constant 3 : i32
    %c8_i32_224 = arith.constant 8 : i32
    %355 = arith.muli %c3_i32, %c8_i32_224 : i32
    %356 = tpu.assume_multiple %355, 8 : i32
    %357 = arith.index_cast %356 : i32 to index
    %c0_225 = arith.constant 0 : index
    %358 = vector.load %arg6[%357, %c0_225] : memref<64x512xf32, #tpu.memory_space<vmem>>, vector<8x512xf32>
    %359 = arith.truncf %354 : vector<8x128xf32> to vector<8x128xbf16>
    %cst_226 = arith.constant dense<0.000000e+00> : vector<8x512xf32>
    %360 = tpu.matmul %359, %256, %cst_226 {dimension_numbers = #tpu.dot_dimension_numbers<[1], [0], [0], [1], [0, 0, 1, 1], [], []>} : vector<8x128xbf16>, vector<128x512xbf16>, vector<8x512xf32> -> vector<8x512xf32>
    %361 = arith.addf %358, %360 : vector<8x512xf32>
    %362 = vector.extract_strided_slice %361 {offsets = [0, 0], sizes = [8, 128], strides = [1, 1]} : vector<8x512xf32> to vector<8x128xf32>
    %cst_227 = arith.constant 5.000000e-01 : f32
    %363 = vector.broadcast %cst_227 : f32 to vector<8x128xf32>
    %364 = arith.mulf %363, %362 : vector<8x128xf32>
    %365 = math.tanh %364 : vector<8x128xf32>
    %cst_228 = arith.constant 5.000000e-01 : f32
    %366 = vector.broadcast %cst_228 : f32 to vector<8x128xf32>
    %367 = arith.mulf %366, %365 : vector<8x128xf32>
    %cst_229 = arith.constant 5.000000e-01 : f32
    %368 = vector.broadcast %cst_229 : f32 to vector<8x128xf32>
    %369 = arith.addf %367, %368 : vector<8x128xf32>
    %370 = vector.extract_strided_slice %361 {offsets = [0, 128], sizes = [8, 128], strides = [1, 1]} : vector<8x512xf32> to vector<8x128xf32>
    %cst_230 = arith.constant 5.000000e-01 : f32
    %371 = vector.broadcast %cst_230 : f32 to vector<8x128xf32>
    %372 = arith.mulf %371, %370 : vector<8x128xf32>
    %373 = math.tanh %372 : vector<8x128xf32>
    %cst_231 = arith.constant 5.000000e-01 : f32
    %374 = vector.broadcast %cst_231 : f32 to vector<8x128xf32>
    %375 = arith.mulf %374, %373 : vector<8x128xf32>
    %cst_232 = arith.constant 5.000000e-01 : f32
    %376 = vector.broadcast %cst_232 : f32 to vector<8x128xf32>
    %377 = arith.addf %375, %376 : vector<8x128xf32>
    %378 = vector.extract_strided_slice %361 {offsets = [0, 256], sizes = [8, 128], strides = [1, 1]} : vector<8x512xf32> to vector<8x128xf32>
    %379 = math.tanh %378 : vector<8x128xf32>
    %380 = vector.extract_strided_slice %361 {offsets = [0, 384], sizes = [8, 128], strides = [1, 1]} : vector<8x512xf32> to vector<8x128xf32>
    %cst_233 = arith.constant 5.000000e-01 : f32
    %381 = vector.broadcast %cst_233 : f32 to vector<8x128xf32>
    %382 = arith.mulf %381, %380 : vector<8x128xf32>
    %383 = math.tanh %382 : vector<8x128xf32>
    %cst_234 = arith.constant 5.000000e-01 : f32
    %384 = vector.broadcast %cst_234 : f32 to vector<8x128xf32>
    %385 = arith.mulf %384, %383 : vector<8x128xf32>
    %cst_235 = arith.constant 5.000000e-01 : f32
    %386 = vector.broadcast %cst_235 : f32 to vector<8x128xf32>
    %387 = arith.addf %385, %386 : vector<8x128xf32>
    %388 = arith.mulf %377, %352 : vector<8x128xf32>
    %389 = arith.mulf %369, %379 : vector<8x128xf32>
    %390 = arith.addf %388, %389 : vector<8x128xf32>
    %391 = math.tanh %390 : vector<8x128xf32>
    %392 = arith.mulf %387, %391 : vector<8x128xf32>
    %c4_i32 = arith.constant 4 : i32
    %c8_i32_236 = arith.constant 8 : i32
    %393 = arith.muli %c4_i32, %c8_i32_236 : i32
    %394 = tpu.assume_multiple %393, 8 : i32
    %395 = arith.index_cast %394 : i32 to index
    %c0_237 = arith.constant 0 : index
    %396 = vector.load %arg6[%395, %c0_237] : memref<64x512xf32, #tpu.memory_space<vmem>>, vector<8x512xf32>
    %397 = arith.truncf %392 : vector<8x128xf32> to vector<8x128xbf16>
    %cst_238 = arith.constant dense<0.000000e+00> : vector<8x512xf32>
    %398 = tpu.matmul %397, %256, %cst_238 {dimension_numbers = #tpu.dot_dimension_numbers<[1], [0], [0], [1], [0, 0, 1, 1], [], []>} : vector<8x128xbf16>, vector<128x512xbf16>, vector<8x512xf32> -> vector<8x512xf32>
    %399 = arith.addf %396, %398 : vector<8x512xf32>
    %400 = vector.extract_strided_slice %399 {offsets = [0, 0], sizes = [8, 128], strides = [1, 1]} : vector<8x512xf32> to vector<8x128xf32>
    %cst_239 = arith.constant 5.000000e-01 : f32
    %401 = vector.broadcast %cst_239 : f32 to vector<8x128xf32>
    %402 = arith.mulf %401, %400 : vector<8x128xf32>
    %403 = math.tanh %402 : vector<8x128xf32>
    %cst_240 = arith.constant 5.000000e-01 : f32
    %404 = vector.broadcast %cst_240 : f32 to vector<8x128xf32>
    %405 = arith.mulf %404, %403 : vector<8x128xf32>
    %cst_241 = arith.constant 5.000000e-01 : f32
    %406 = vector.broadcast %cst_241 : f32 to vector<8x128xf32>
    %407 = arith.addf %405, %406 : vector<8x128xf32>
    %408 = vector.extract_strided_slice %399 {offsets = [0, 128], sizes = [8, 128], strides = [1, 1]} : vector<8x512xf32> to vector<8x128xf32>
    %cst_242 = arith.constant 5.000000e-01 : f32
    %409 = vector.broadcast %cst_242 : f32 to vector<8x128xf32>
    %410 = arith.mulf %409, %408 : vector<8x128xf32>
    %411 = math.tanh %410 : vector<8x128xf32>
    %cst_243 = arith.constant 5.000000e-01 : f32
    %412 = vector.broadcast %cst_243 : f32 to vector<8x128xf32>
    %413 = arith.mulf %412, %411 : vector<8x128xf32>
    %cst_244 = arith.constant 5.000000e-01 : f32
    %414 = vector.broadcast %cst_244 : f32 to vector<8x128xf32>
    %415 = arith.addf %413, %414 : vector<8x128xf32>
    %416 = vector.extract_strided_slice %399 {offsets = [0, 256], sizes = [8, 128], strides = [1, 1]} : vector<8x512xf32> to vector<8x128xf32>
    %417 = math.tanh %416 : vector<8x128xf32>
    %418 = vector.extract_strided_slice %399 {offsets = [0, 384], sizes = [8, 128], strides = [1, 1]} : vector<8x512xf32> to vector<8x128xf32>
    %cst_245 = arith.constant 5.000000e-01 : f32
    %419 = vector.broadcast %cst_245 : f32 to vector<8x128xf32>
    %420 = arith.mulf %419, %418 : vector<8x128xf32>
    %421 = math.tanh %420 : vector<8x128xf32>
    %cst_246 = arith.constant 5.000000e-01 : f32
    %422 = vector.broadcast %cst_246 : f32 to vector<8x128xf32>
    %423 = arith.mulf %422, %421 : vector<8x128xf32>
    %cst_247 = arith.constant 5.000000e-01 : f32
    %424 = vector.broadcast %cst_247 : f32 to vector<8x128xf32>
    %425 = arith.addf %423, %424 : vector<8x128xf32>
    %426 = arith.mulf %415, %390 : vector<8x128xf32>
    %427 = arith.mulf %407, %417 : vector<8x128xf32>
    %428 = arith.addf %426, %427 : vector<8x128xf32>
    %429 = math.tanh %428 : vector<8x128xf32>
    %430 = arith.mulf %425, %429 : vector<8x128xf32>
    %c5_i32 = arith.constant 5 : i32
    %c8_i32_248 = arith.constant 8 : i32
    %431 = arith.muli %c5_i32, %c8_i32_248 : i32
    %432 = tpu.assume_multiple %431, 8 : i32
    %433 = arith.index_cast %432 : i32 to index
    %c0_249 = arith.constant 0 : index
    %434 = vector.load %arg6[%433, %c0_249] : memref<64x512xf32, #tpu.memory_space<vmem>>, vector<8x512xf32>
    %435 = arith.truncf %430 : vector<8x128xf32> to vector<8x128xbf16>
    %cst_250 = arith.constant dense<0.000000e+00> : vector<8x512xf32>
    %436 = tpu.matmul %435, %256, %cst_250 {dimension_numbers = #tpu.dot_dimension_numbers<[1], [0], [0], [1], [0, 0, 1, 1], [], []>} : vector<8x128xbf16>, vector<128x512xbf16>, vector<8x512xf32> -> vector<8x512xf32>
    %437 = arith.addf %434, %436 : vector<8x512xf32>
    %438 = vector.extract_strided_slice %437 {offsets = [0, 0], sizes = [8, 128], strides = [1, 1]} : vector<8x512xf32> to vector<8x128xf32>
    %cst_251 = arith.constant 5.000000e-01 : f32
    %439 = vector.broadcast %cst_251 : f32 to vector<8x128xf32>
    %440 = arith.mulf %439, %438 : vector<8x128xf32>
    %441 = math.tanh %440 : vector<8x128xf32>
    %cst_252 = arith.constant 5.000000e-01 : f32
    %442 = vector.broadcast %cst_252 : f32 to vector<8x128xf32>
    %443 = arith.mulf %442, %441 : vector<8x128xf32>
    %cst_253 = arith.constant 5.000000e-01 : f32
    %444 = vector.broadcast %cst_253 : f32 to vector<8x128xf32>
    %445 = arith.addf %443, %444 : vector<8x128xf32>
    %446 = vector.extract_strided_slice %437 {offsets = [0, 128], sizes = [8, 128], strides = [1, 1]} : vector<8x512xf32> to vector<8x128xf32>
    %cst_254 = arith.constant 5.000000e-01 : f32
    %447 = vector.broadcast %cst_254 : f32 to vector<8x128xf32>
    %448 = arith.mulf %447, %446 : vector<8x128xf32>
    %449 = math.tanh %448 : vector<8x128xf32>
    %cst_255 = arith.constant 5.000000e-01 : f32
    %450 = vector.broadcast %cst_255 : f32 to vector<8x128xf32>
    %451 = arith.mulf %450, %449 : vector<8x128xf32>
    %cst_256 = arith.constant 5.000000e-01 : f32
    %452 = vector.broadcast %cst_256 : f32 to vector<8x128xf32>
    %453 = arith.addf %451, %452 : vector<8x128xf32>
    %454 = vector.extract_strided_slice %437 {offsets = [0, 256], sizes = [8, 128], strides = [1, 1]} : vector<8x512xf32> to vector<8x128xf32>
    %455 = math.tanh %454 : vector<8x128xf32>
    %456 = vector.extract_strided_slice %437 {offsets = [0, 384], sizes = [8, 128], strides = [1, 1]} : vector<8x512xf32> to vector<8x128xf32>
    %cst_257 = arith.constant 5.000000e-01 : f32
    %457 = vector.broadcast %cst_257 : f32 to vector<8x128xf32>
    %458 = arith.mulf %457, %456 : vector<8x128xf32>
    %459 = math.tanh %458 : vector<8x128xf32>
    %cst_258 = arith.constant 5.000000e-01 : f32
    %460 = vector.broadcast %cst_258 : f32 to vector<8x128xf32>
    %461 = arith.mulf %460, %459 : vector<8x128xf32>
    %cst_259 = arith.constant 5.000000e-01 : f32
    %462 = vector.broadcast %cst_259 : f32 to vector<8x128xf32>
    %463 = arith.addf %461, %462 : vector<8x128xf32>
    %464 = arith.mulf %453, %428 : vector<8x128xf32>
    %465 = arith.mulf %445, %455 : vector<8x128xf32>
    %466 = arith.addf %464, %465 : vector<8x128xf32>
    %467 = math.tanh %466 : vector<8x128xf32>
    %468 = arith.mulf %463, %467 : vector<8x128xf32>
    %c6_i32 = arith.constant 6 : i32
    %c8_i32_260 = arith.constant 8 : i32
    %469 = arith.muli %c6_i32, %c8_i32_260 : i32
    %470 = tpu.assume_multiple %469, 8 : i32
    %471 = arith.index_cast %470 : i32 to index
    %c0_261 = arith.constant 0 : index
    %472 = vector.load %arg6[%471, %c0_261] : memref<64x512xf32, #tpu.memory_space<vmem>>, vector<8x512xf32>
    %473 = arith.truncf %468 : vector<8x128xf32> to vector<8x128xbf16>
    %cst_262 = arith.constant dense<0.000000e+00> : vector<8x512xf32>
    %474 = tpu.matmul %473, %256, %cst_262 {dimension_numbers = #tpu.dot_dimension_numbers<[1], [0], [0], [1], [0, 0, 1, 1], [], []>} : vector<8x128xbf16>, vector<128x512xbf16>, vector<8x512xf32> -> vector<8x512xf32>
    %475 = arith.addf %472, %474 : vector<8x512xf32>
    %476 = vector.extract_strided_slice %475 {offsets = [0, 0], sizes = [8, 128], strides = [1, 1]} : vector<8x512xf32> to vector<8x128xf32>
    %cst_263 = arith.constant 5.000000e-01 : f32
    %477 = vector.broadcast %cst_263 : f32 to vector<8x128xf32>
    %478 = arith.mulf %477, %476 : vector<8x128xf32>
    %479 = math.tanh %478 : vector<8x128xf32>
    %cst_264 = arith.constant 5.000000e-01 : f32
    %480 = vector.broadcast %cst_264 : f32 to vector<8x128xf32>
    %481 = arith.mulf %480, %479 : vector<8x128xf32>
    %cst_265 = arith.constant 5.000000e-01 : f32
    %482 = vector.broadcast %cst_265 : f32 to vector<8x128xf32>
    %483 = arith.addf %481, %482 : vector<8x128xf32>
    %484 = vector.extract_strided_slice %475 {offsets = [0, 128], sizes = [8, 128], strides = [1, 1]} : vector<8x512xf32> to vector<8x128xf32>
    %cst_266 = arith.constant 5.000000e-01 : f32
    %485 = vector.broadcast %cst_266 : f32 to vector<8x128xf32>
    %486 = arith.mulf %485, %484 : vector<8x128xf32>
    %487 = math.tanh %486 : vector<8x128xf32>
    %cst_267 = arith.constant 5.000000e-01 : f32
    %488 = vector.broadcast %cst_267 : f32 to vector<8x128xf32>
    %489 = arith.mulf %488, %487 : vector<8x128xf32>
    %cst_268 = arith.constant 5.000000e-01 : f32
    %490 = vector.broadcast %cst_268 : f32 to vector<8x128xf32>
    %491 = arith.addf %489, %490 : vector<8x128xf32>
    %492 = vector.extract_strided_slice %475 {offsets = [0, 256], sizes = [8, 128], strides = [1, 1]} : vector<8x512xf32> to vector<8x128xf32>
    %493 = math.tanh %492 : vector<8x128xf32>
    %494 = vector.extract_strided_slice %475 {offsets = [0, 384], sizes = [8, 128], strides = [1, 1]} : vector<8x512xf32> to vector<8x128xf32>
    %cst_269 = arith.constant 5.000000e-01 : f32
    %495 = vector.broadcast %cst_269 : f32 to vector<8x128xf32>
    %496 = arith.mulf %495, %494 : vector<8x128xf32>
    %497 = math.tanh %496 : vector<8x128xf32>
    %cst_270 = arith.constant 5.000000e-01 : f32
    %498 = vector.broadcast %cst_270 : f32 to vector<8x128xf32>
    %499 = arith.mulf %498, %497 : vector<8x128xf32>
    %cst_271 = arith.constant 5.000000e-01 : f32
    %500 = vector.broadcast %cst_271 : f32 to vector<8x128xf32>
    %501 = arith.addf %499, %500 : vector<8x128xf32>
    %502 = arith.mulf %491, %466 : vector<8x128xf32>
    %503 = arith.mulf %483, %493 : vector<8x128xf32>
    %504 = arith.addf %502, %503 : vector<8x128xf32>
    %505 = math.tanh %504 : vector<8x128xf32>
    %506 = arith.mulf %501, %505 : vector<8x128xf32>
    %c7_i32 = arith.constant 7 : i32
    %c8_i32_272 = arith.constant 8 : i32
    %507 = arith.muli %c7_i32, %c8_i32_272 : i32
    %508 = tpu.assume_multiple %507, 8 : i32
    %509 = arith.index_cast %508 : i32 to index
    %c0_273 = arith.constant 0 : index
    %510 = vector.load %arg6[%509, %c0_273] : memref<64x512xf32, #tpu.memory_space<vmem>>, vector<8x512xf32>
    %511 = arith.truncf %506 : vector<8x128xf32> to vector<8x128xbf16>
    %cst_274 = arith.constant dense<0.000000e+00> : vector<8x512xf32>
    %512 = tpu.matmul %511, %256, %cst_274 {dimension_numbers = #tpu.dot_dimension_numbers<[1], [0], [0], [1], [0, 0, 1, 1], [], []>} : vector<8x128xbf16>, vector<128x512xbf16>, vector<8x512xf32> -> vector<8x512xf32>
    %513 = arith.addf %510, %512 : vector<8x512xf32>
    %514 = vector.extract_strided_slice %513 {offsets = [0, 0], sizes = [8, 128], strides = [1, 1]} : vector<8x512xf32> to vector<8x128xf32>
    %cst_275 = arith.constant 5.000000e-01 : f32
    %515 = vector.broadcast %cst_275 : f32 to vector<8x128xf32>
    %516 = arith.mulf %515, %514 : vector<8x128xf32>
    %517 = math.tanh %516 : vector<8x128xf32>
    %cst_276 = arith.constant 5.000000e-01 : f32
    %518 = vector.broadcast %cst_276 : f32 to vector<8x128xf32>
    %519 = arith.mulf %518, %517 : vector<8x128xf32>
    %cst_277 = arith.constant 5.000000e-01 : f32
    %520 = vector.broadcast %cst_277 : f32 to vector<8x128xf32>
    %521 = arith.addf %519, %520 : vector<8x128xf32>
    %522 = vector.extract_strided_slice %513 {offsets = [0, 128], sizes = [8, 128], strides = [1, 1]} : vector<8x512xf32> to vector<8x128xf32>
    %cst_278 = arith.constant 5.000000e-01 : f32
    %523 = vector.broadcast %cst_278 : f32 to vector<8x128xf32>
    %524 = arith.mulf %523, %522 : vector<8x128xf32>
    %525 = math.tanh %524 : vector<8x128xf32>
    %cst_279 = arith.constant 5.000000e-01 : f32
    %526 = vector.broadcast %cst_279 : f32 to vector<8x128xf32>
    %527 = arith.mulf %526, %525 : vector<8x128xf32>
    %cst_280 = arith.constant 5.000000e-01 : f32
    %528 = vector.broadcast %cst_280 : f32 to vector<8x128xf32>
    %529 = arith.addf %527, %528 : vector<8x128xf32>
    %530 = vector.extract_strided_slice %513 {offsets = [0, 256], sizes = [8, 128], strides = [1, 1]} : vector<8x512xf32> to vector<8x128xf32>
    %531 = math.tanh %530 : vector<8x128xf32>
    %532 = vector.extract_strided_slice %513 {offsets = [0, 384], sizes = [8, 128], strides = [1, 1]} : vector<8x512xf32> to vector<8x128xf32>
    %cst_281 = arith.constant 5.000000e-01 : f32
    %533 = vector.broadcast %cst_281 : f32 to vector<8x128xf32>
    %534 = arith.mulf %533, %532 : vector<8x128xf32>
    %535 = math.tanh %534 : vector<8x128xf32>
    %cst_282 = arith.constant 5.000000e-01 : f32
    %536 = vector.broadcast %cst_282 : f32 to vector<8x128xf32>
    %537 = arith.mulf %536, %535 : vector<8x128xf32>
    %cst_283 = arith.constant 5.000000e-01 : f32
    %538 = vector.broadcast %cst_283 : f32 to vector<8x128xf32>
    %539 = arith.addf %537, %538 : vector<8x128xf32>
    %540 = arith.mulf %529, %504 : vector<8x128xf32>
    %541 = arith.mulf %521, %531 : vector<8x128xf32>
    %542 = arith.addf %540, %541 : vector<8x128xf32>
    %543 = math.tanh %542 : vector<8x128xf32>
    %544 = arith.mulf %539, %543 : vector<8x128xf32>
    %c7_i32_284 = arith.constant 7 : i32
    %545 = arith.truncf %544 : vector<8x128xf32> to vector<8x128xbf16>
    %c0_285 = arith.constant 0 : index
    %c0_286 = arith.constant 0 : index
    %546 = vector.load %arg3[%c0_285, %c0_286] : memref<128x128xbf16, #tpu.memory_space<vmem>>, vector<128x128xbf16>
    %cst_287 = arith.constant dense<0.000000e+00> : vector<8x128xf32>
    %547 = tpu.matmul %545, %546, %cst_287 {dimension_numbers = #tpu.dot_dimension_numbers<[1], [0], [0], [1], [0, 0, 1, 1], [], []>} : vector<8x128xbf16>, vector<128x128xbf16>, vector<8x128xf32> -> vector<8x128xf32>
    %c0_288 = arith.constant 0 : index
    %c0_289 = arith.constant 0 : index
    %548 = vector.load %arg4[%c0_288, %c0_289] : memref<1x128xf32, #tpu.memory_space<vmem>>, vector<1x128xf32>
    %549 = vector.broadcast %548 : vector<1x128xf32> to vector<8x128xf32>
    %550 = arith.addf %547, %549 : vector<8x128xf32>
    %c0_290 = arith.constant 0 : index
    %c0_291 = arith.constant 0 : index
    %551 = vector.load %arg5[%c0_290, %c0_291] : memref<8x128xf32, #tpu.memory_space<vmem>>, vector<8x128xf32>
    tpu.vector_store %arg5[%c0_290, %c0_291], %550 {strides = array<i32>} : memref<8x128xf32, #tpu.memory_space<vmem>>, vector<8x128xf32>,
    return
  }
}

</mosaic_0001>

<llo_original>
// kernel: svd_classifier_forward.1
$region0: #{svd_classifier_forward.1}
  #allocation0 [shape = 'u32[]', space=smem, size = 0x4, offset = 0x4, fixed_abs, tag = 'smem constant byte address 0x4 - core index']
  #allocation1 [shape = 'u32[72,128]{1,0:T(1,128)}', space=vmem, size = 0x9000, scoped, tag = 'internal scratch']
  #allocation2 [shape = 'f32[64,512]{1,0:T(8,128)}', space=vmem, size = 0x20000, scoped, tag = 'scratch operand']
  %s0 = inlined_call_operand.vmem [shape: s32[64], index: 0, kind: input, shape index: {}]
  %s1 = inlined_call_operand.hbm [shape: f32[50,512], index: 1, kind: input, shape index: {}]
  %s2 = inlined_call_operand.hbm [shape: bf16[128,512], index: 2, kind: input, shape index: {}]
  %s3 = inlined_call_operand.hbm [shape: bf16[128,128], index: 3, kind: input, shape index: {}]
  %s4 = inlined_call_operand.vmem [shape: f32[1,128], index: 4, kind: input, shape index: {}]
  %s5 = inlined_call_operand.vmem [shape: f32[8,128], index: 5, kind: output, shape index: {}]
  %s6 = sld [smem:[#allocation0]]
  $region46: #{svd_classifier_forward.1} parent=0
    _
  %s8 = ssub.s32 1, %s6
  %s9 = scalar_select 0, %s8, %s6
  $region1: #{svd_classifier_forward.1} parent=0
    #allocation3 [shape = 'u8[512]{0}', space=smem, size = 0x200, scoped, tag = 'input window, operand 0, single buffered']
    #allocation4 [shape = 's32[1]{0}', space=sflag, size = 0x4, scoped, tag = 'scoped memory for svd_classifier_forward.1']
    #allocation5 [shape = 's32[1]{0}', space=sflag, size = 0x4, scoped, tag = 'scoped memory for svd_classifier_forward.1']
    #allocation6 [shape = 'u8[114688]{0}', space=vmem, size = 0x1c000, scoped, tag = 'input window, operand 1, single buffered']
    #allocation7 [shape = 'u8[131072]{0}', space=vmem, size = 0x20000, scoped, tag = 'input window, operand 2, single buffered']
    #allocation8 [shape = 's32[1]{0}', space=sflag, size = 0x4, scoped, tag = 'scoped memory for svd_classifier_forward.1']
    #allocation9 [shape = 'u8[32768]{0}', space=vmem, size = 0x8000, scoped, tag = 'input window, operand 3, single buffered']
    %10 = vsyncpa [#allocation5], 0
    %11 = vsyncpa [#allocation4], 0
    %12 = vsyncpa [#allocation8], 0
    // Predicated region
    $region2: #{svd_classifier_forward.1} parent=1 // pred_check
      _
    $region3: #{svd_classifier_forward.1} parent=1 // pred_check_branch
      %14 = sbr.rel (0) target = $region5
    $region4: #{svd_classifier_forward.1} parent=1 // pred_region
      %16 = vsyncadd [#allocation5], 0
      %s18 = sshll.u32 %s0, 4
      %s19 = int_to_ptr.vmem [resolvable:$true] %s18
      %21 = dma.vmem_to_smem %s19, 16, [#allocation3], [#allocation5]
    $region5: #{svd_classifier_forward.1} parent=1 // pred_fallthru
      _
    // Predicated region
    $region6: #{svd_classifier_forward.1} parent=1 // pred_check
      _
    $region7: #{svd_classifier_forward.1} parent=1 // pred_check_branch
      %23 = sbr.rel (0) target = $region9
    $region8: #{svd_classifier_forward.1} parent=1 // pred_region
      %25 = vsyncadd [#allocation4], 0
      %s26 = sshll.u32 %s1, 4
      %s27 = int_to_ptr.hbm [resolvable:$true] %s26
      %s28 = sshll.u32 [#allocation6], 4
      %s29 = int_to_ptr.vmem [resolvable:$true] %s28
      %34 = dma.hbm_to_vmem [thread:$0]  %s27, 3584, %s29, [#allocation4], 512, 512, 32
    $region9: #{svd_classifier_forward.1} parent=1 // pred_fallthru
      _
    // Predicated region
    $region10: #{svd_classifier_forward.1} parent=1 // pred_check
      _
    $region11: #{svd_classifier_forward.1} parent=1 // pred_check_branch
      %36 = sbr.rel (0) target = $region13
    $region12: #{svd_classifier_forward.1} parent=1 // pred_region
      %38 = vsyncadd [#allocation8], 0
      %s39 = sshll.u32 %s2, 4
      %s40 = int_to_ptr.hbm [resolvable:$true] %s39
      %s41 = sshll.u32 [#allocation7], 4
      %s42 = int_to_ptr.vmem [resolvable:$true] %s41
      %47 = dma.hbm_to_vmem [thread:$0]  %s40, 4096, %s42, [#allocation8], 256, 256, 16
    $region13: #{svd_classifier_forward.1} parent=1 // pred_fallthru
      _
    // Predicated region
    $region14: #{svd_classifier_forward.1} parent=1 // pred_check
      _
    $region15: #{svd_classifier_forward.1} parent=1 // pred_check_branch
      %49 = sbr.rel (0) target = $region17
    $region16: #{svd_classifier_forward.1} parent=1 // pred_region
      %51 = vsyncadd [#allocation8], 0
      %s52 = sshll.u32 %s3, 4
      %s53 = int_to_ptr.hbm [resolvable:$true] %s52
      %s54 = sshll.u32 [#allocation9], 4
      %s55 = int_to_ptr.vmem [resolvable:$true] %s54
      %60 = dma.hbm_to_vmem [thread:$0]  %s53, 1024, %s55, [#allocation8], 64, 64, 4
    $region17: #{svd_classifier_forward.1} parent=1 // pred_fallthru
      _
    // Predicated region
    $region18: #{svd_classifier_forward.1} parent=1 // pred_check
      _
    $region19: #{svd_classifier_forward.1} parent=1 // pred_check_branch
      %62 = sbr.rel (0) target = $region21
    $region20: #{svd_classifier_forward.1} parent=1 // pred_region
      _
    $region21: #{svd_classifier_forward.1} parent=1 // pred_fallthru
      _
    // Predicated region
    $region22: #{svd_classifier_forward.1} parent=1 // pred_check
      _
    $region23: #{svd_classifier_forward.1} parent=1 // pred_check_branch
      %64 = sbr.rel (0) target = $region25
    $region24: #{svd_classifier_forward.1} parent=1 // pred_region
      %66 = dma.done [#allocation5], 16
    $region25: #{svd_classifier_forward.1} parent=1 // pred_fallthru
      _
    // Predicated region
    $region26: #{svd_classifier_forward.1} parent=1 // pred_check
      _
    $region27: #{svd_classifier_forward.1} parent=1 // pred_check_branch
      %68 = sbr.rel (0) target = $region29
    $region28: #{svd_classifier_forward.1} parent=1 // pred_region
      %70 = dma.done [#allocation4], 3584
    $region29: #{svd_classifier_forward.1} parent=1 // pred_fallthru
      _
    // Predicated region
    $region30: #{svd_classifier_forward.1} parent=1 // pred_check
      _
    $region31: #{svd_classifier_forward.1} parent=1 // pred_check_branch
      %72 = sbr.rel (0) target = $region33
    $region32: #{svd_classifier_forward.1} parent=1 // pred_region
      %74 = dma.done [#allocation8], 4096
    $region33: #{svd_classifier_forward.1} parent=1 // pred_fallthru
      _
    // Predicated region
    $region34: #{svd_classifier_forward.1} parent=1 // pred_check
      _
    $region35: #{svd_classifier_forward.1} parent=1 // pred_check_branch
      %76 = sbr.rel (0) target = $region37
    $region36: #{svd_classifier_forward.1} parent=1 // pred_region
      %78 = dma.done [#allocation8], 1024
    $region37: #{svd_classifier_forward.1} parent=1 // pred_fallthru
      _
    %79 = sfence
    %s80 = sld [smem:[#allocation3]]
    %s81 = sshra.s32 %s80, 3
    %s82 = sand.u32 %s80, 7
    %s83 = sshra.s32 %s80, 3
    %s84 = sand.u32 %s80, 7
    %s85 = smul.u32 %s81, 4
    %s86 = smul.u32 %s85, 8
    %s87 = sadd.s32 %s86, %s84
    %s88 = scalar_lea.vmem [#allocation6], %s87
    %v89 = vld [vmem:[%s88] ss:$8 sm:$0xf]
    %v90 = vlaneseq
    %vm91 = vcmp.ge.s32.totalorder %v90, 0
    %vm92 = vcmp.lt.s32.totalorder %v90, 512
    %vm93 = vmand %vm91, %vm92
    %94 = vst.msk [vmem:[#allocation2] ss:$8 sm:$0xf] %vm93, %v89
    %95 = vst.msk [vmem:[#allocation2] ss:$8 sm:$0x0] %vm93, %v89
    %s96 = sld [smem:[#allocation3 + $0x1]]
    %s97 = sshra.s32 %s96, 3
    %s98 = sand.u32 %s96, 7
    %s99 = sshra.s32 %s96, 3
    %s100 = sand.u32 %s96, 7
    %s101 = smul.u32 %s97, 4
    %s102 = smul.u32 %s101, 8
    %s103 = sadd.s32 %s102, %s100
    %s104 = scalar_lea.vmem [#allocation6], %s103
    %v105 = vld [vmem:[%s104] ss:$8 sm:$0xf]
    %s106 = scalar_lea.vmem [#allocation2], 1
    %107 = vst.msk [vmem:[%s106] ss:$8 sm:$0xf] %vm93, %v105
    %108 = vst.msk [vmem:[%s106] ss:$8 sm:$0x0] %vm93, %v105
    %s109 = sld [smem:[#allocation3 + $0x2]]
    %s110 = sshra.s32 %s109, 3
    %s111 = sand.u32 %s109, 7
    %s112 = sshra.s32 %s109, 3
    %s113 = sand.u32 %s109, 7
    %s114 = smul.u32 %s110, 4
    %s115 = smul.u32 %s114, 8
    %s116 = sadd.s32 %s115, %s113
    %s117 = scalar_lea.vmem [#allocation6], %s116
    %v118 = vld [vmem:[%s117] ss:$8 sm:$0xf]
    %s119 = scalar_lea.vmem [#allocation2], 2
    %120 = vst.msk [vmem:[%s119] ss:$8 sm:$0xf] %vm93, %v118
    %121 = vst.msk [vmem:[%s119] ss:$8 sm:$0x0] %vm93, %v118
    %s122 = sld [smem:[#allocation3 + $0x3]]
    %s123 = sshra.s32 %s122, 3
    %s124 = sand.u32 %s122, 7
    %s125 = sshra.s32 %s122, 3
    %s126 = sand.u32 %s122, 7
    %s127 = smul.u32 %s123, 4
    %s128 = smul.u32 %s127, 8
    %s129 = sadd.s32 %s128, %s126
    %s130 = scalar_lea.vmem [#allocation6], %s129
    %v131 = vld [vmem:[%s130] ss:$8 sm:$0xf]
    %s132 = scalar_lea.vmem [#allocation2], 3
    %133 = vst.msk [vmem:[%s132] ss:$8 sm:$0xf] %vm93, %v131
    %134 = vst.msk [vmem:[%s132] ss:$8 sm:$0x0] %vm93, %v131
    %s135 = sld [smem:[#allocation3 + $0x4]]
    %s136 = sshra.s32 %s135, 3
    %s137 = sand.u32 %s135, 7
    %s138 = sshra.s32 %s135, 3
    %s139 = sand.u32 %s135, 7
    %s140 = smul.u32 %s136, 4
    %s141 = smul.u32 %s140, 8
    %s142 = sadd.s32 %s141, %s139
    %s143 = scalar_lea.vmem [#allocation6], %s142
    %v144 = vld [vmem:[%s143] ss:$8 sm:$0xf]
    %s145 = scalar_lea.vmem [#allocation2], 4
    %146 = vst.msk [vmem:[%s145] ss:$8 sm:$0xf] %vm93, %v144
    %147 = vst.msk [vmem:[%s145] ss:$8 sm:$0x0] %vm93, %v144
    %s148 = sld [smem:[#allocation3 + $0x5]]
    %s149 = sshra.s32 %s148, 3
    %s150 = sand.u32 %s148, 7
    %s151 = sshra.s32 %s148, 3
    %s152 = sand.u32 %s148, 7
    %s153 = smul.u32 %s149, 4
    %s154 = smul.u32 %s153, 8
    %s155 = sadd.s32 %s154, %s152
    %s156 = scalar_lea.vmem [#allocation6], %s155
    %v157 = vld [vmem:[%s156] ss:$8 sm:$0xf]
    %s158 = scalar_lea.vmem [#allocation2], 5
    %159 = vst.msk [vmem:[%s158] ss:$8 sm:$0xf] %vm93, %v157
    %160 = vst.msk [vmem:[%s158] ss:$8 sm:$0x0] %vm93, %v157
    %s161 = sld [smem:[#allocation3 + $0x6]]
    %s162 = sshra.s32 %s161, 3
    %s163 = sand.u32 %s161, 7
    %s164 = sshra.s32 %s161, 3
    %s165 = sand.u32 %s161, 7
    %s166 = smul.u32 %s162, 4
    %s167 = smul.u32 %s166, 8
    %s168 = sadd.s32 %s167, %s165
    %s169 = scalar_lea.vmem [#allocation6], %s168
    %v170 = vld [vmem:[%s169] ss:$8 sm:$0xf]
    %s171 = scalar_lea.vmem [#allocation2], 6
    %172 = vst.msk [vmem:[%s171] ss:$8 sm:$0xf] %vm93, %v170
    %173 = vst.msk [vmem:[%s171] ss:$8 sm:$0x0] %vm93, %v170
    %s174 = sld [smem:[#allocation3 + $0x7]]
    %s175 = sshra.s32 %s174, 3
    %s176 = sand.u32 %s174, 7
    %s177 = sshra.s32 %s174, 3
    %s178 = sand.u32 %s174, 7
    %s179 = smul.u32 %s175, 4
    %s180 = smul.u32 %s179, 8
    %s181 = sadd.s32 %s180, %s178
    %s182 = scalar_lea.vmem [#allocation6], %s181
    %v183 = vld [vmem:[%s182] ss:$8 sm:$0xf]
    %s184 = scalar_lea.vmem [#allocation2], 7
    %185 = vst.msk [vmem:[%s184] ss:$8 sm:$0xf] %vm93, %v183
    %186 = vst.msk [vmem:[%s184] ss:$8 sm:$0x0] %vm93, %v183
    %s187 = sld [smem:[#allocation3 + $0x8]]
    %s188 = sshra.s32 %s187, 3
    %s189 = sand.u32 %s187, 7
    %s190 = sshra.s32 %s187, 3
    %s191 = sand.u32 %s187, 7
    %s192 = smul.u32 %s188, 4
    %s193 = smul.u32 %s192, 8
    %s194 = sadd.s32 %s193, %s191
    %s195 = scalar_lea.vmem [#allocation6], %s194
    %v196 = vld [vmem:[%s195] ss:$8 sm:$0xf]
    %s197 = scalar_lea.vmem [#allocation2], 32
    %198 = vst.msk [vmem:[%s197] ss:$8 sm:$0xf] %vm93, %v196
    %199 = vst.msk [vmem:[%s197] ss:$8 sm:$0x0] %vm93, %v196
    %s200 = sld [smem:[#allocation3 + $0x9]]
    %s201 = sshra.s32 %s200, 3
    %s202 = sand.u32 %s200, 7
    %s203 = sshra.s32 %s200, 3
    %s204 = sand.u32 %s200, 7
    %s205 = smul.u32 %s201, 4
    %s206 = smul.u32 %s205, 8
    %s207 = sadd.s32 %s206, %s204
    %s208 = scalar_lea.vmem [#allocation6], %s207
    %v209 = vld [vmem:[%s208] ss:$8 sm:$0xf]
    %s210 = scalar_lea.vmem [#allocation2], 33
    %211 = vst.msk [vmem:[%s210] ss:$8 sm:$0xf] %vm93, %v209
    %212 = vst.msk [vmem:[%s210] ss:$8 sm:$0x0] %vm93, %v209
    %s213 = sld [smem:[#allocation3 + $0xa]]
    %s214 = sshra.s32 %s213, 3
    %s215 = sand.u32 %s213, 7
    %s216 = sshra.s32 %s213, 3
    %s217 = sand.u32 %s213, 7
    %s218 = smul.u32 %s214, 4
    %s219 = smul.u32 %s218, 8
    %s220 = sadd.s32 %s219, %s217
    %s221 = scalar_lea.vmem [#allocation6], %s220
    %v222 = vld [vmem:[%s221] ss:$8 sm:$0xf]
    %s223 = scalar_lea.vmem [#allocation2], 34
    %224 = vst.msk [vmem:[%s223] ss:$8 sm:$0xf] %vm93, %v222
    %225 = vst.msk [vmem:[%s223] ss:$8 sm:$0x0] %vm93, %v222
    %s226 = sld [smem:[#allocation3 + $0xb]]
    %s227 = sshra.s32 %s226, 3
    %s228 = sand.u32 %s226, 7
    %s229 = sshra.s32 %s226, 3
    %s230 = sand.u32 %s226, 7
    %s231 = smul.u32 %s227, 4
    %s232 = smul.u32 %s231, 8
    %s233 = sadd.s32 %s232, %s230
    %s234 = scalar_lea.vmem [#allocation6], %s233
    %v235 = vld [vmem:[%s234] ss:$8 sm:$0xf]
    %s236 = scalar_lea.vmem [#allocation2], 35
    %237 = vst.msk [vmem:[%s236] ss:$8 sm:$0xf] %vm93, %v235
    %238 = vst.msk [vmem:[%s236] ss:$8 sm:$0x0] %vm93, %v235
    %s239 = sld [smem:[#allocation3 + $0xc]]
    %s240 = sshra.s32 %s239, 3
    %s241 = sand.u32 %s239, 7
    %s242 = sshra.s32 %s239, 3
    %s243 = sand.u32 %s239, 7
    %s244 = smul.u32 %s240, 4
    %s245 = smul.u32 %s244, 8
    %s246 = sadd.s32 %s245, %s243
    %s247 = scalar_lea.vmem [#allocation6], %s246
    %v248 = vld [vmem:[%s247] ss:$8 sm:$0xf]
    %s249 = scalar_lea.vmem [#allocation2], 36
    %250 = vst.msk [vmem:[%s249] ss:$8 sm:$0xf] %vm93, %v248
    %251 = vst.msk [vmem:[%s249] ss:$8 sm:$0x0] %vm93, %v248
    %s252 = sld [smem:[#allocation3 + $0xd]]
    %s253 = sshra.s32 %s252, 3
    %s254 = sand.u32 %s252, 7
    %s255 = sshra.s32 %s252, 3
    %s256 = sand.u32 %s252, 7
    %s257 = smul.u32 %s253, 4
    %s258 = smul.u32 %s257, 8
    %s259 = sadd.s32 %s258, %s256
    %s260 = scalar_lea.vmem [#allocation6], %s259
    %v261 = vld [vmem:[%s260] ss:$8 sm:$0xf]
    %s262 = scalar_lea.vmem [#allocation2], 37
    %263 = vst.msk [vmem:[%s262] ss:$8 sm:$0xf] %vm93, %v261
    %264 = vst.msk [vmem:[%s262] ss:$8 sm:$0x0] %vm93, %v261
    %s265 = sld [smem:[#allocation3 + $0xe]]
    %s266 = sshra.s32 %s265, 3
    %s267 = sand.u32 %s265, 7
    %s268 = sshra.s32 %s265, 3
    %s269 = sand.u32 %s265, 7
    %s270 = smul.u32 %s266, 4
    %s271 = smul.u32 %s270, 8
    %s272 = sadd.s32 %s271, %s269
    %s273 = scalar_lea.vmem [#allocation6], %s272
    %v274 = vld [vmem:[%s273] ss:$8 sm:$0xf]
    %s275 = scalar_lea.vmem [#allocation2], 38
    %276 = vst.msk [vmem:[%s275] ss:$8 sm:$0xf] %vm93, %v274
    %277 = vst.msk [vmem:[%s275] ss:$8 sm:$0x0] %vm93, %v274
    %s278 = sld [smem:[#allocation3 + $0xf]]
    %s279 = sshra.s32 %s278, 3
    %s280 = sand.u32 %s278, 7
    %s281 = sshra.s32 %s278, 3
    %s282 = sand.u32 %s278, 7
    %s283 = smul.u32 %s279, 4
    %s284 = smul.u32 %s283, 8
    %s285 = sadd.s32 %s284, %s282
    %s286 = scalar_lea.vmem [#allocation6], %s285
    %v287 = vld [vmem:[%s286] ss:$8 sm:$0xf]
    %s288 = scalar_lea.vmem [#allocation2], 39
    %289 = vst.msk [vmem:[%s288] ss:$8 sm:$0xf] %vm93, %v287
    %290 = vst.msk [vmem:[%s288] ss:$8 sm:$0x0] %vm93, %v287
    %s291 = sld [smem:[#allocation3 + $0x10]]
    %s292 = sshra.s32 %s291, 3
    %s293 = sand.u32 %s291, 7
    %s294 = sshra.s32 %s291, 3
    %s295 = sand.u32 %s291, 7
    %s296 = smul.u32 %s292, 4
    %s297 = smul.u32 %s296, 8
    %s298 = sadd.s32 %s297, %s295
    %s299 = scalar_lea.vmem [#allocation6], %s298
    %v300 = vld [vmem:[%s299] ss:$8 sm:$0xf]
    %s301 = scalar_lea.vmem [#allocation2], 64
    %302 = vst.msk [vmem:[%s301] ss:$8 sm:$0xf] %vm93, %v300
    %303 = vst.msk [vmem:[%s301] ss:$8 sm:$0x0] %vm93, %v300
    %s304 = sld [smem:[#allocation3 + $0x11]]
    %s305 = sshra.s32 %s304, 3
    %s306 = sand.u32 %s304, 7
    %s307 = sshra.s32 %s304, 3
    %s308 = sand.u32 %s304, 7
    %s309 = smul.u32 %s305, 4
    %s310 = smul.u32 %s309, 8
    %s311 = sadd.s32 %s310, %s308
    %s312 = scalar_lea.vmem [#allocation6], %s311
    %v313 = vld [vmem:[%s312] ss:$8 sm:$0xf]
    %s314 = scalar_lea.vmem [#allocation2], 65
    %315 = vst.msk [vmem:[%s314] ss:$8 sm:$0xf] %vm93, %v313
    %316 = vst.msk [vmem:[%s314] ss:$8 sm:$0x0] %vm93, %v313
    %s317 = sld [smem:[#allocation3 + $0x12]]
    %s318 = sshra.s32 %s317, 3
    %s319 = sand.u32 %s317, 7
    %s320 = sshra.s32 %s317, 3
    %s321 = sand.u32 %s317, 7
    %s322 = smul.u32 %s318, 4
    %s323 = smul.u32 %s322, 8
    %s324 = sadd.s32 %s323, %s321
    %s325 = scalar_lea.vmem [#allocation6], %s324
    %v326 = vld [vmem:[%s325] ss:$8 sm:$0xf]
    %s327 = scalar_lea.vmem [#allocation2], 66
    %328 = vst.msk [vmem:[%s327] ss:$8 sm:$0xf] %vm93, %v326
    %329 = vst.msk [vmem:[%s327] ss:$8 sm:$0x0] %vm93, %v326
    %s330 = sld [smem:[#allocation3 + $0x13]]
    %s331 = sshra.s32 %s330, 3
    %s332 = sand.u32 %s330, 7
    %s333 = sshra.s32 %s330, 3
    %s334 = sand.u32 %s330, 7
    %s335 = smul.u32 %s331, 4
    %s336 = smul.u32 %s335, 8
    %s337 = sadd.s32 %s336, %s334
    %s338 = scalar_lea.vmem [#allocation6], %s337
    %v339 = vld [vmem:[%s338] ss:$8 sm:$0xf]
    %s340 = scalar_lea.vmem [#allocation2], 67
    %341 = vst.msk [vmem:[%s340] ss:$8 sm:$0xf] %vm93, %v339
    %342 = vst.msk [vmem:[%s340] ss:$8 sm:$0x0] %vm93, %v339
    %s343 = sld [smem:[#allocation3 + $0x14]]
    %s344 = sshra.s32 %s343, 3
    %s345 = sand.u32 %s343, 7
    %s346 = sshra.s32 %s343, 3
    %s347 = sand.u32 %s343, 7
    %s348 = smul.u32 %s344, 4
    %s349 = smul.u32 %s348, 8
    %s350 = sadd.s32 %s349, %s347
    %s351 = scalar_lea.vmem [#allocation6], %s350
    %v352 = vld [vmem:[%s351] ss:$8 sm:$0xf]
    %s353 = scalar_lea.vmem [#allocation2], 68
    %354 = vst.msk [vmem:[%s353] ss:$8 sm:$0xf] %vm93, %v352
    %355 = vst.msk [vmem:[%s353] ss:$8 sm:$0x0] %vm93, %v352
    %s356 = sld [smem:[#allocation3 + $0x15]]
    %s357 = sshra.s32 %s356, 3
    %s358 = sand.u32 %s356, 7
    %s359 = sshra.s32 %s356, 3
    %s360 = sand.u32 %s356, 7
    %s361 = smul.u32 %s357, 4
    %s362 = smul.u32 %s361, 8
    %s363 = sadd.s32 %s362, %s360
    %s364 = scalar_lea.vmem [#allocation6], %s363
    %v365 = vld [vmem:[%s364] ss:$8 sm:$0xf]
    %s366 = scalar_lea.vmem [#allocation2], 69
    %367 = vst.msk [vmem:[%s366] ss:$8 sm:$0xf] %vm93, %v365
    %368 = vst.msk [vmem:[%s366] ss:$8 sm:$0x0] %vm93, %v365
    %s369 = sld [smem:[#allocation3 + $0x16]]
    %s370 = sshra.s32 %s369, 3
    %s371 = sand.u32 %s369, 7
    %s372 = sshra.s32 %s369, 3
    %s373 = sand.u32 %s369, 7
    %s374 = smul.u32 %s370, 4
    %s375 = smul.u32 %s374, 8
    %s376 = sadd.s32 %s375, %s373
    %s377 = scalar_lea.vmem [#allocation6], %s376
    %v378 = vld [vmem:[%s377] ss:$8 sm:$0xf]
    %s379 = scalar_lea.vmem [#allocation2], 70
    %380 = vst.msk [vmem:[%s379] ss:$8 sm:$0xf] %vm93, %v378
    %381 = vst.msk [vmem:[%s379] ss:$8 sm:$0x0] %vm93, %v378
    %s382 = sld [smem:[#allocation3 + $0x17]]
    %s383 = sshra.s32 %s382, 3
    %s384 = sand.u32 %s382, 7
    %s385 = sshra.s32 %s382, 3
    %s386 = sand.u32 %s382, 7
    %s387 = smul.u32 %s383, 4
    %s388 = smul.u32 %s387, 8
    %s389 = sadd.s32 %s388, %s386
    %s390 = scalar_lea.vmem [#allocation6], %s389
    %v391 = vld [vmem:[%s390] ss:$8 sm:$0xf]
    %s392 = scalar_lea.vmem [#allocation2], 71
    %393 = vst.msk [vmem:[%s392] ss:$8 sm:$0xf] %vm93, %v391
    %394 = vst.msk [vmem:[%s392] ss:$8 sm:$0x0] %vm93, %v391
    %s395 = sld [smem:[#allocation3 + $0x18]]
    %s396 = sshra.s32 %s395, 3
    %s397 = sand.u32 %s395, 7
    %s398 = sshra.s32 %s395, 3
    %s399 = sand.u32 %s395, 7
    %s400 = smul.u32 %s396, 4
    %s401 = smul.u32 %s400, 8
    %s402 = sadd.s32 %s401, %s399
    %s403 = scalar_lea.vmem [#allocation6], %s402
    %v404 = vld [vmem:[%s403] ss:$8 sm:$0xf]
    %s405 = scalar_lea.vmem [#allocation2], 96
    %406 = vst.msk [vmem:[%s405] ss:$8 sm:$0xf] %vm93, %v404
    %407 = vst.msk [vmem:[%s405] ss:$8 sm:$0x0] %vm93, %v404
    %s408 = sld [smem:[#allocation3 + $0x19]]
    %s409 = sshra.s32 %s408, 3
    %s410 = sand.u32 %s408, 7
    %s411 = sshra.s32 %s408, 3
    %s412 = sand.u32 %s408, 7
    %s413 = smul.u32 %s409, 4
    %s414 = smul.u32 %s413, 8
    %s415 = sadd.s32 %s414, %s412
    %s416 = scalar_lea.vmem [#allocation6], %s415
    %v417 = vld [vmem:[%s416] ss:$8 sm:$0xf]
    %s418 = scalar_lea.vmem [#allocation2], 97
    %419 = vst.msk [vmem:[%s418] ss:$8 sm:$0xf] %vm93, %v417
    %420 = vst.msk [vmem:[%s418] ss:$8 sm:$0x0] %vm93, %v417
    %s421 = sld [smem:[#allocation3 + $0x1a]]
    %s422 = sshra.s32 %s421, 3
    %s423 = sand.u32 %s421, 7
    %s424 = sshra.s32 %s421, 3
    %s425 = sand.u32 %s421, 7
    %s426 = smul.u32 %s422, 4
    %s427 = smul.u32 %s426, 8
    %s428 = sadd.s32 %s427, %s425
    %s429 = scalar_lea.vmem [#allocation6], %s428
    %v430 = vld [vmem:[%s429] ss:$8 sm:$0xf]
    %s431 = scalar_lea.vmem [#allocation2], 98
    %432 = vst.msk [vmem:[%s431] ss:$8 sm:$0xf] %vm93, %v430
    %433 = vst.msk [vmem:[%s431] ss:$8 sm:$0x0] %vm93, %v430
    %s434 = sld [smem:[#allocation3 + $0x1b]]
    %s435 = sshra.s32 %s434, 3
    %s436 = sand.u32 %s434, 7
    %s437 = sshra.s32 %s434, 3
    %s438 = sand.u32 %s434, 7
    %s439 = smul.u32 %s435, 4
    %s440 = smul.u32 %s439, 8
    %s441 = sadd.s32 %s440, %s438
    %s442 = scalar_lea.vmem [#allocation6], %s441
    %v443 = vld [vmem:[%s442] ss:$8 sm:$0xf]
    %s444 = scalar_lea.vmem [#allocation2], 99
    %445 = vst.msk [vmem:[%s444] ss:$8 sm:$0xf] %vm93, %v443
    %446 = vst.msk [vmem:[%s444] ss:$8 sm:$0x0] %vm93, %v443
    %s447 = sld [smem:[#allocation3 + $0x1c]]
    %s448 = sshra.s32 %s447, 3
    %s449 = sand.u32 %s447, 7
    %s450 = sshra.s32 %s447, 3
    %s451 = sand.u32 %s447, 7
    %s452 = smul.u32 %s448, 4
    %s453 = smul.u32 %s452, 8
    %s454 = sadd.s32 %s453, %s451
    %s455 = scalar_lea.vmem [#allocation6], %s454
    %v456 = vld [vmem:[%s455] ss:$8 sm:$0xf]
    %s457 = scalar_lea.vmem [#allocation2], 100
    %458 = vst.msk [vmem:[%s457] ss:$8 sm:$0xf] %vm93, %v456
    %459 = vst.msk [vmem:[%s457] ss:$8 sm:$0x0] %vm93, %v456
    %s460 = sld [smem:[#allocation3 + $0x1d]]
    %s461 = sshra.s32 %s460, 3
    %s462 = sand.u32 %s460, 7
    %s463 = sshra.s32 %s460, 3
    %s464 = sand.u32 %s460, 7
    %s465 = smul.u32 %s461, 4
    %s466 = smul.u32 %s465, 8
    %s467 = sadd.s32 %s466, %s464
    %s468 = scalar_lea.vmem [#allocation6], %s467
    %v469 = vld [vmem:[%s468] ss:$8 sm:$0xf]
    %s470 = scalar_lea.vmem [#allocation2], 101
    %471 = vst.msk [vmem:[%s470] ss:$8 sm:$0xf] %vm93, %v469
    %472 = vst.msk [vmem:[%s470] ss:$8 sm:$0x0] %vm93, %v469
    %s473 = sld [smem:[#allocation3 + $0x1e]]
    %s474 = sshra.s32 %s473, 3
    %s475 = sand.u32 %s473, 7
    %s476 = sshra.s32 %s473, 3
    %s477 = sand.u32 %s473, 7
    %s478 = smul.u32 %s474, 4
    %s479 = smul.u32 %s478, 8
    %s480 = sadd.s32 %s479, %s477
    %s481 = scalar_lea.vmem [#allocation6], %s480
    %v482 = vld [vmem:[%s481] ss:$8 sm:$0xf]
    %s483 = scalar_lea.vmem [#allocation2], 102
    %484 = vst.msk [vmem:[%s483] ss:$8 sm:$0xf] %vm93, %v482
    %485 = vst.msk [vmem:[%s483] ss:$8 sm:$0x0] %vm93, %v482
    %s486 = sld [smem:[#allocation3 + $0x1f]]
    %s487 = sshra.s32 %s486, 3
    %s488 = sand.u32 %s486, 7
    %s489 = sshra.s32 %s486, 3
    %s490 = sand.u32 %s486, 7
    %s491 = smul.u32 %s487, 4
    %s492 = smul.u32 %s491, 8
    %s493 = sadd.s32 %s492, %s490
    %s494 = scalar_lea.vmem [#allocation6], %s493
    %v495 = vld [vmem:[%s494] ss:$8 sm:$0xf]
    %s496 = scalar_lea.vmem [#allocation2], 103
    %497 = vst.msk [vmem:[%s496] ss:$8 sm:$0xf] %vm93, %v495
    %498 = vst.msk [vmem:[%s496] ss:$8 sm:$0x0] %vm93, %v495
    %s499 = sld [smem:[#allocation3 + $0x20]]
    %s500 = sshra.s32 %s499, 3
    %s501 = sand.u32 %s499, 7
    %s502 = sshra.s32 %s499, 3
    %s503 = sand.u32 %s499, 7
    %s504 = smul.u32 %s500, 4
    %s505 = smul.u32 %s504, 8
    %s506 = sadd.s32 %s505, %s503
    %s507 = scalar_lea.vmem [#allocation6], %s506
    %v508 = vld [vmem:[%s507] ss:$8 sm:$0xf]
    %s509 = scalar_lea.vmem [#allocation2], 128
    %510 = vst.msk [vmem:[%s509] ss:$8 sm:$0xf] %vm93, %v508
    %511 = vst.msk [vmem:[%s509] ss:$8 sm:$0x0] %vm93, %v508
    %s512 = sld [smem:[#allocation3 + $0x21]]
    %s513 = sshra.s32 %s512, 3
    %s514 = sand.u32 %s512, 7
    %s515 = sshra.s32 %s512, 3
    %s516 = sand.u32 %s512, 7
    %s517 = smul.u32 %s513, 4
    %s518 = smul.u32 %s517, 8
    %s519 = sadd.s32 %s518, %s516
    %s520 = scalar_lea.vmem [#allocation6], %s519
    %v521 = vld [vmem:[%s520] ss:$8 sm:$0xf]
    %s522 = scalar_lea.vmem [#allocation2], 129
    %523 = vst.msk [vmem:[%s522] ss:$8 sm:$0xf] %vm93, %v521
    %524 = vst.msk [vmem:[%s522] ss:$8 sm:$0x0] %vm93, %v521
    %s525 = sld [smem:[#allocation3 + $0x22]]
    %s526 = sshra.s32 %s525, 3
    %s527 = sand.u32 %s525, 7
    %s528 = sshra.s32 %s525, 3
    %s529 = sand.u32 %s525, 7
    %s530 = smul.u32 %s526, 4
    %s531 = smul.u32 %s530, 8
    %s532 = sadd.s32 %s531, %s529
    %s533 = scalar_lea.vmem [#allocation6], %s532
    %v534 = vld [vmem:[%s533] ss:$8 sm:$0xf]
    %s535 = scalar_lea.vmem [#allocation2], 130
    %536 = vst.msk [vmem:[%s535] ss:$8 sm:$0xf] %vm93, %v534
    %537 = vst.msk [vmem:[%s535] ss:$8 sm:$0x0] %vm93, %v534
    %s538 = sld [smem:[#allocation3 + $0x23]]
    %s539 = sshra.s32 %s538, 3
    %s540 = sand.u32 %s538, 7
    %s541 = sshra.s32 %s538, 3
    %s542 = sand.u32 %s538, 7
    %s543 = smul.u32 %s539, 4
    %s544 = smul.u32 %s543, 8
    %s545 = sadd.s32 %s544, %s542
    %s546 = scalar_lea.vmem [#allocation6], %s545
    %v547 = vld [vmem:[%s546] ss:$8 sm:$0xf]
    %s548 = scalar_lea.vmem [#allocation2], 131
    %549 = vst.msk [vmem:[%s548] ss:$8 sm:$0xf] %vm93, %v547
    %550 = vst.msk [vmem:[%s548] ss:$8 sm:$0x0] %vm93, %v547
    %s551 = sld [smem:[#allocation3 + $0x24]]
    %s552 = sshra.s32 %s551, 3
    %s553 = sand.u32 %s551, 7
    %s554 = sshra.s32 %s551, 3
    %s555 = sand.u32 %s551, 7
    %s556 = smul.u32 %s552, 4
    %s557 = smul.u32 %s556, 8
    %s558 = sadd.s32 %s557, %s555
    %s559 = scalar_lea.vmem [#allocation6], %s558
    %v560 = vld [vmem:[%s559] ss:$8 sm:$0xf]
    %s561 = scalar_lea.vmem [#allocation2], 132
    %562 = vst.msk [vmem:[%s561] ss:$8 sm:$0xf] %vm93, %v560
    %563 = vst.msk [vmem:[%s561] ss:$8 sm:$0x0] %vm93, %v560
    %s564 = sld [smem:[#allocation3 + $0x25]]
    %s565 = sshra.s32 %s564, 3
    %s566 = sand.u32 %s564, 7
    %s567 = sshra.s32 %s564, 3
    %s568 = sand.u32 %s564, 7
    %s569 = smul.u32 %s565, 4
    %s570 = smul.u32 %s569, 8
    %s571 = sadd.s32 %s570, %s568
    %s572 = scalar_lea.vmem [#allocation6], %s571
    %v573 = vld [vmem:[%s572] ss:$8 sm:$0xf]
    %s574 = scalar_lea.vmem [#allocation2], 133
    %575 = vst.msk [vmem:[%s574] ss:$8 sm:$0xf] %vm93, %v573
    %576 = vst.msk [vmem:[%s574] ss:$8 sm:$0x0] %vm93, %v573
    %s577 = sld [smem:[#allocation3 + $0x26]]
    %s578 = sshra.s32 %s577, 3
    %s579 = sand.u32 %s577, 7
    %s580 = sshra.s32 %s577, 3
    %s581 = sand.u32 %s577, 7
    %s582 = smul.u32 %s578, 4
    %s583 = smul.u32 %s582, 8
    %s584 = sadd.s32 %s583, %s581
    %s585 = scalar_lea.vmem [#allocation6], %s584
    %v586 = vld [vmem:[%s585] ss:$8 sm:$0xf]
    %s587 = scalar_lea.vmem [#allocation2], 134
    %588 = vst.msk [vmem:[%s587] ss:$8 sm:$0xf] %vm93, %v586
    %589 = vst.msk [vmem:[%s587] ss:$8 sm:$0x0] %vm93, %v586
    %s590 = sld [smem:[#allocation3 + $0x27]]
    %s591 = sshra.s32 %s590, 3
    %s592 = sand.u32 %s590, 7
    %s593 = sshra.s32 %s590, 3
    %s594 = sand.u32 %s590, 7
    %s595 = smul.u32 %s591, 4
    %s596 = smul.u32 %s595, 8
    %s597 = sadd.s32 %s596, %s594
    %s598 = scalar_lea.vmem [#allocation6], %s597
    %v599 = vld [vmem:[%s598] ss:$8 sm:$0xf]
    %s600 = scalar_lea.vmem [#allocation2], 135
    %601 = vst.msk [vmem:[%s600] ss:$8 sm:$0xf] %vm93, %v599
    %602 = vst.msk [vmem:[%s600] ss:$8 sm:$0x0] %vm93, %v599
    %s603 = sld [smem:[#allocation3 + $0x28]]
    %s604 = sshra.s32 %s603, 3
    %s605 = sand.u32 %s603, 7
    %s606 = sshra.s32 %s603, 3
    %s607 = sand.u32 %s603, 7
    %s608 = smul.u32 %s604, 4
    %s609 = smul.u32 %s608, 8
    %s610 = sadd.s32 %s609, %s607
    %s611 = scalar_lea.vmem [#allocation6], %s610
    %v612 = vld [vmem:[%s611] ss:$8 sm:$0xf]
    %s613 = scalar_lea.vmem [#allocation2], 160
    %614 = vst.msk [vmem:[%s613] ss:$8 sm:$0xf] %vm93, %v612
    %615 = vst.msk [vmem:[%s613] ss:$8 sm:$0x0] %vm93, %v612
    %s616 = sld [smem:[#allocation3 + $0x29]]
    %s617 = sshra.s32 %s616, 3
    %s618 = sand.u32 %s616, 7
    %s619 = sshra.s32 %s616, 3
    %s620 = sand.u32 %s616, 7
    %s621 = smul.u32 %s617, 4
    %s622 = smul.u32 %s621, 8
    %s623 = sadd.s32 %s622, %s620
    %s624 = scalar_lea.vmem [#allocation6], %s623
    %v625 = vld [vmem:[%s624] ss:$8 sm:$0xf]
    %s626 = scalar_lea.vmem [#allocation2], 161
    %627 = vst.msk [vmem:[%s626] ss:$8 sm:$0xf] %vm93, %v625
    %628 = vst.msk [vmem:[%s626] ss:$8 sm:$0x0] %vm93, %v625
    %s629 = sld [smem:[#allocation3 + $0x2a]]
    %s630 = sshra.s32 %s629, 3
    %s631 = sand.u32 %s629, 7
    %s632 = sshra.s32 %s629, 3
    %s633 = sand.u32 %s629, 7
    %s634 = smul.u32 %s630, 4
    %s635 = smul.u32 %s634, 8
    %s636 = sadd.s32 %s635, %s633
    %s637 = scalar_lea.vmem [#allocation6], %s636
    %v638 = vld [vmem:[%s637] ss:$8 sm:$0xf]
    %s639 = scalar_lea.vmem [#allocation2], 162
    %640 = vst.msk [vmem:[%s639] ss:$8 sm:$0xf] %vm93, %v638
    %641 = vst.msk [vmem:[%s639] ss:$8 sm:$0x0] %vm93, %v638
    %s642 = sld [smem:[#allocation3 + $0x2b]]
    %s643 = sshra.s32 %s642, 3
    %s644 = sand.u32 %s642, 7
    %s645 = sshra.s32 %s642, 3
    %s646 = sand.u32 %s642, 7
    %s647 = smul.u32 %s643, 4
    %s648 = smul.u32 %s647, 8
    %s649 = sadd.s32 %s648, %s646
    %s650 = scalar_lea.vmem [#allocation6], %s649
    %v651 = vld [vmem:[%s650] ss:$8 sm:$0xf]
    %s652 = scalar_lea.vmem [#allocation2], 163
    %653 = vst.msk [vmem:[%s652] ss:$8 sm:$0xf] %vm93, %v651
    %654 = vst.msk [vmem:[%s652] ss:$8 sm:$0x0] %vm93, %v651
    %s655 = sld [smem:[#allocation3 + $0x2c]]
    %s656 = sshra.s32 %s655, 3
    %s657 = sand.u32 %s655, 7
    %s658 = sshra.s32 %s655, 3
    %s659 = sand.u32 %s655, 7
    %s660 = smul.u32 %s656, 4
    %s661 = smul.u32 %s660, 8
    %s662 = sadd.s32 %s661, %s659
    %s663 = scalar_lea.vmem [#allocation6], %s662
    %v664 = vld [vmem:[%s663] ss:$8 sm:$0xf]
    %s665 = scalar_lea.vmem [#allocation2], 164
    %666 = vst.msk [vmem:[%s665] ss:$8 sm:$0xf] %vm93, %v664
    %667 = vst.msk [vmem:[%s665] ss:$8 sm:$0x0] %vm93, %v664
    %s668 = sld [smem:[#allocation3 + $0x2d]]
    %s669 = sshra.s32 %s668, 3
    %s670 = sand.u32 %s668, 7
    %s671 = sshra.s32 %s668, 3
    %s672 = sand.u32 %s668, 7
    %s673 = smul.u32 %s669, 4
    %s674 = smul.u32 %s673, 8
    %s675 = sadd.s32 %s674, %s672
    %s676 = scalar_lea.vmem [#allocation6], %s675
    %v677 = vld [vmem:[%s676] ss:$8 sm:$0xf]
    %s678 = scalar_lea.vmem [#allocation2], 165
    %679 = vst.msk [vmem:[%s678] ss:$8 sm:$0xf] %vm93, %v677
    %680 = vst.msk [vmem:[%s678] ss:$8 sm:$0x0] %vm93, %v677
    %s681 = sld [smem:[#allocation3 + $0x2e]]
    %s682 = sshra.s32 %s681, 3
    %s683 = sand.u32 %s681, 7
    %s684 = sshra.s32 %s681, 3
    %s685 = sand.u32 %s681, 7
    %s686 = smul.u32 %s682, 4
    %s687 = smul.u32 %s686, 8
    %s688 = sadd.s32 %s687, %s685
    %s689 = scalar_lea.vmem [#allocation6], %s688
    %v690 = vld [vmem:[%s689] ss:$8 sm:$0xf]
    %s691 = scalar_lea.vmem [#allocation2], 166
    %692 = vst.msk [vmem:[%s691] ss:$8 sm:$0xf] %vm93, %v690
    %693 = vst.msk [vmem:[%s691] ss:$8 sm:$0x0] %vm93, %v690
    %s694 = sld [smem:[#allocation3 + $0x2f]]
    %s695 = sshra.s32 %s694, 3
    %s696 = sand.u32 %s694, 7
    %s697 = sshra.s32 %s694, 3
    %s698 = sand.u32 %s694, 7
    %s699 = smul.u32 %s695, 4
    %s700 = smul.u32 %s699, 8
    %s701 = sadd.s32 %s700, %s698
    %s702 = scalar_lea.vmem [#allocation6], %s701
    %v703 = vld [vmem:[%s702] ss:$8 sm:$0xf]
    %s704 = scalar_lea.vmem [#allocation2], 167
    %705 = vst.msk [vmem:[%s704] ss:$8 sm:$0xf] %vm93, %v703
    %706 = vst.msk [vmem:[%s704] ss:$8 sm:$0x0] %vm93, %v703
    %s707 = sld [smem:[#allocation3 + $0x30]]
    %s708 = sshra.s32 %s707, 3
    %s709 = sand.u32 %s707, 7
    %s710 = sshra.s32 %s707, 3
    %s711 = sand.u32 %s707, 7
    %s712 = smul.u32 %s708, 4
    %s713 = smul.u32 %s712, 8
    %s714 = sadd.s32 %s713, %s711
    %s715 = scalar_lea.vmem [#allocation6], %s714
    %v716 = vld [vmem:[%s715] ss:$8 sm:$0xf]
    %s717 = scalar_lea.vmem [#allocation2], 192
    %718 = vst.msk [vmem:[%s717] ss:$8 sm:$0xf] %vm93, %v716
    %719 = vst.msk [vmem:[%s717] ss:$8 sm:$0x0] %vm93, %v716
    %s720 = sld [smem:[#allocation3 + $0x31]]
    %s721 = sshra.s32 %s720, 3
    %s722 = sand.u32 %s720, 7
    %s723 = sshra.s32 %s720, 3
    %s724 = sand.u32 %s720, 7
    %s725 = smul.u32 %s721, 4
    %s726 = smul.u32 %s725, 8
    %s727 = sadd.s32 %s726, %s724
    %s728 = scalar_lea.vmem [#allocation6], %s727
    %v729 = vld [vmem:[%s728] ss:$8 sm:$0xf]
    %s730 = scalar_lea.vmem [#allocation2], 193
    %731 = vst.msk [vmem:[%s730] ss:$8 sm:$0xf] %vm93, %v729
    %732 = vst.msk [vmem:[%s730] ss:$8 sm:$0x0] %vm93, %v729
    %s733 = sld [smem:[#allocation3 + $0x32]]
    %s734 = sshra.s32 %s733, 3
    %s735 = sand.u32 %s733, 7
    %s736 = sshra.s32 %s733, 3
    %s737 = sand.u32 %s733, 7
    %s738 = smul.u32 %s734, 4
    %s739 = smul.u32 %s738, 8
    %s740 = sadd.s32 %s739, %s737
    %s741 = scalar_lea.vmem [#allocation6], %s740
    %v742 = vld [vmem:[%s741] ss:$8 sm:$0xf]
    %s743 = scalar_lea.vmem [#allocation2], 194
    %744 = vst.msk [vmem:[%s743] ss:$8 sm:$0xf] %vm93, %v742
    %745 = vst.msk [vmem:[%s743] ss:$8 sm:$0x0] %vm93, %v742
    %s746 = sld [smem:[#allocation3 + $0x33]]
    %s747 = sshra.s32 %s746, 3
    %s748 = sand.u32 %s746, 7
    %s749 = sshra.s32 %s746, 3
    %s750 = sand.u32 %s746, 7
    %s751 = smul.u32 %s747, 4
    %s752 = smul.u32 %s751, 8
    %s753 = sadd.s32 %s752, %s750
    %s754 = scalar_lea.vmem [#allocation6], %s753
    %v755 = vld [vmem:[%s754] ss:$8 sm:$0xf]
    %s756 = scalar_lea.vmem [#allocation2], 195
    %757 = vst.msk [vmem:[%s756] ss:$8 sm:$0xf] %vm93, %v755
    %758 = vst.msk [vmem:[%s756] ss:$8 sm:$0x0] %vm93, %v755
    %s759 = sld [smem:[#allocation3 + $0x34]]
    %s760 = sshra.s32 %s759, 3
    %s761 = sand.u32 %s759, 7
    %s762 = sshra.s32 %s759, 3
    %s763 = sand.u32 %s759, 7
    %s764 = smul.u32 %s760, 4
    %s765 = smul.u32 %s764, 8
    %s766 = sadd.s32 %s765, %s763
    %s767 = scalar_lea.vmem [#allocation6], %s766
    %v768 = vld [vmem:[%s767] ss:$8 sm:$0xf]
    %s769 = scalar_lea.vmem [#allocation2], 196
    %770 = vst.msk [vmem:[%s769] ss:$8 sm:$0xf] %vm93, %v768
    %771 = vst.msk [vmem:[%s769] ss:$8 sm:$0x0] %vm93, %v768
    %s772 = sld [smem:[#allocation3 + $0x35]]
    %s773 = sshra.s32 %s772, 3
    %s774 = sand.u32 %s772, 7
    %s775 = sshra.s32 %s772, 3
    %s776 = sand.u32 %s772, 7
    %s777 = smul.u32 %s773, 4
    %s778 = smul.u32 %s777, 8
    %s779 = sadd.s32 %s778, %s776
    %s780 = scalar_lea.vmem [#allocation6], %s779
    %v781 = vld [vmem:[%s780] ss:$8 sm:$0xf]
    %s782 = scalar_lea.vmem [#allocation2], 197
    %783 = vst.msk [vmem:[%s782] ss:$8 sm:$0xf] %vm93, %v781
    %784 = vst.msk [vmem:[%s782] ss:$8 sm:$0x0] %vm93, %v781
    %s785 = sld [smem:[#allocation3 + $0x36]]
    %s786 = sshra.s32 %s785, 3
    %s787 = sand.u32 %s785, 7
    %s788 = sshra.s32 %s785, 3
    %s789 = sand.u32 %s785, 7
    %s790 = smul.u32 %s786, 4
    %s791 = smul.u32 %s790, 8
    %s792 = sadd.s32 %s791, %s789
    %s793 = scalar_lea.vmem [#allocation6], %s792
    %v794 = vld [vmem:[%s793] ss:$8 sm:$0xf]
    %s795 = scalar_lea.vmem [#allocation2], 198
    %796 = vst.msk [vmem:[%s795] ss:$8 sm:$0xf] %vm93, %v794
    %797 = vst.msk [vmem:[%s795] ss:$8 sm:$0x0] %vm93, %v794
    %s798 = sld [smem:[#allocation3 + $0x37]]
    %s799 = sshra.s32 %s798, 3
    %s800 = sand.u32 %s798, 7
    %s801 = sshra.s32 %s798, 3
    %s802 = sand.u32 %s798, 7
    %s803 = smul.u32 %s799, 4
    %s804 = smul.u32 %s803, 8
    %s805 = sadd.s32 %s804, %s802
    %s806 = scalar_lea.vmem [#allocation6], %s805
    %v807 = vld [vmem:[%s806] ss:$8 sm:$0xf]
    %s808 = scalar_lea.vmem [#allocation2], 199
    %809 = vst.msk [vmem:[%s808] ss:$8 sm:$0xf] %vm93, %v807
    %810 = vst.msk [vmem:[%s808] ss:$8 sm:$0x0] %vm93, %v807
    %s811 = sld [smem:[#allocation3 + $0x38]]
    %s812 = sshra.s32 %s811, 3
    %s813 = sand.u32 %s811, 7
    %s814 = sshra.s32 %s811, 3
    %s815 = sand.u32 %s811, 7
    %s816 = smul.u32 %s812, 4
    %s817 = smul.u32 %s816, 8
    %s818 = sadd.s32 %s817, %s815
    %s819 = scalar_lea.vmem [#allocation6], %s818
    %v820 = vld [vmem:[%s819] ss:$8 sm:$0xf]
    %s821 = scalar_lea.vmem [#allocation2], 224
    %822 = vst.msk [vmem:[%s821] ss:$8 sm:$0xf] %vm93, %v820
    %823 = vst.msk [vmem:[%s821] ss:$8 sm:$0x0] %vm93, %v820
    %s824 = sld [smem:[#allocation3 + $0x39]]
    %s825 = sshra.s32 %s824, 3
    %s826 = sand.u32 %s824, 7
    %s827 = sshra.s32 %s824, 3
    %s828 = sand.u32 %s824, 7
    %s829 = smul.u32 %s825, 4
    %s830 = smul.u32 %s829, 8
    %s831 = sadd.s32 %s830, %s828
    %s832 = scalar_lea.vmem [#allocation6], %s831
    %v833 = vld [vmem:[%s832] ss:$8 sm:$0xf]
    %s834 = scalar_lea.vmem [#allocation2], 225
    %835 = vst.msk [vmem:[%s834] ss:$8 sm:$0xf] %vm93, %v833
    %836 = vst.msk [vmem:[%s834] ss:$8 sm:$0x0] %vm93, %v833
    %s837 = sld [smem:[#allocation3 + $0x3a]]
    %s838 = sshra.s32 %s837, 3
    %s839 = sand.u32 %s837, 7
    %s840 = sshra.s32 %s837, 3
    %s841 = sand.u32 %s837, 7
    %s842 = smul.u32 %s838, 4
    %s843 = smul.u32 %s842, 8
    %s844 = sadd.s32 %s843, %s841
    %s845 = scalar_lea.vmem [#allocation6], %s844
    %v846 = vld [vmem:[%s845] ss:$8 sm:$0xf]
    %s847 = scalar_lea.vmem [#allocation2], 226
    %848 = vst.msk [vmem:[%s847] ss:$8 sm:$0xf] %vm93, %v846
    %849 = vst.msk [vmem:[%s847] ss:$8 sm:$0x0] %vm93, %v846
    %s850 = sld [smem:[#allocation3 + $0x3b]]
    %s851 = sshra.s32 %s850, 3
    %s852 = sand.u32 %s850, 7
    %s853 = sshra.s32 %s850, 3
    %s854 = sand.u32 %s850, 7
    %s855 = smul.u32 %s851, 4
    %s856 = smul.u32 %s855, 8
    %s857 = sadd.s32 %s856, %s854
    %s858 = scalar_lea.vmem [#allocation6], %s857
    %v859 = vld [vmem:[%s858] ss:$8 sm:$0xf]
    %s860 = scalar_lea.vmem [#allocation2], 227
    %861 = vst.msk [vmem:[%s860] ss:$8 sm:$0xf] %vm93, %v859
    %862 = vst.msk [vmem:[%s860] ss:$8 sm:$0x0] %vm93, %v859
    %s863 = sld [smem:[#allocation3 + $0x3c]]
    %s864 = sshra.s32 %s863, 3
    %s865 = sand.u32 %s863, 7
    %s866 = sshra.s32 %s863, 3
    %s867 = sand.u32 %s863, 7
    %s868 = smul.u32 %s864, 4
    %s869 = smul.u32 %s868, 8
    %s870 = sadd.s32 %s869, %s867
    %s871 = scalar_lea.vmem [#allocation6], %s870
    %v872 = vld [vmem:[%s871] ss:$8 sm:$0xf]
    %s873 = scalar_lea.vmem [#allocation2], 228
    %874 = vst.msk [vmem:[%s873] ss:$8 sm:$0xf] %vm93, %v872
    %875 = vst.msk [vmem:[%s873] ss:$8 sm:$0x0] %vm93, %v872
    %s876 = sld [smem:[#allocation3 + $0x3d]]
    %s877 = sshra.s32 %s876, 3
    %s878 = sand.u32 %s876, 7
    %s879 = sshra.s32 %s876, 3
    %s880 = sand.u32 %s876, 7
    %s881 = smul.u32 %s877, 4
    %s882 = smul.u32 %s881, 8
    %s883 = sadd.s32 %s882, %s880
    %s884 = scalar_lea.vmem [#allocation6], %s883
    %v885 = vld [vmem:[%s884] ss:$8 sm:$0xf]
    %s886 = scalar_lea.vmem [#allocation2], 229
    %887 = vst.msk [vmem:[%s886] ss:$8 sm:$0xf] %vm93, %v885
    %888 = vst.msk [vmem:[%s886] ss:$8 sm:$0x0] %vm93, %v885
    %s889 = sld [smem:[#allocation3 + $0x3e]]
    %s890 = sshra.s32 %s889, 3
    %s891 = sand.u32 %s889, 7
    %s892 = sshra.s32 %s889, 3
    %s893 = sand.u32 %s889, 7
    %s894 = smul.u32 %s890, 4
    %s895 = smul.u32 %s894, 8
    %s896 = sadd.s32 %s895, %s893
    %s897 = scalar_lea.vmem [#allocation6], %s896
    %v898 = vld [vmem:[%s897] ss:$8 sm:$0xf]
    %s899 = scalar_lea.vmem [#allocation2], 230
    %900 = vst.msk [vmem:[%s899] ss:$8 sm:$0xf] %vm93, %v898
    %901 = vst.msk [vmem:[%s899] ss:$8 sm:$0x0] %vm93, %v898
    %s902 = sld [smem:[#allocation3 + $0x3f]]
    %s903 = sshra.s32 %s902, 3
    %s904 = sand.u32 %s902, 7
    %s905 = sshra.s32 %s902, 3
    %s906 = sand.u32 %s902, 7
    %s907 = smul.u32 %s903, 4
    %s908 = smul.u32 %s907, 8
    %s909 = sadd.s32 %s908, %s906
    %s910 = scalar_lea.vmem [#allocation6], %s909
    %v911 = vld [vmem:[%s910] ss:$8 sm:$0xf]
    %s912 = scalar_lea.vmem [#allocation2], 231
    %913 = vst.msk [vmem:[%s912] ss:$8 sm:$0xf] %vm93, %v911
    %914 = vst.msk [vmem:[%s912] ss:$8 sm:$0x0] %vm93, %v911
    %v915 = vld [vmem:[#allocation7] sm:$0xff]
    %v916 = vld [vmem:[#allocation7 + $0x8] sm:$0xff]
    %v917 = vld [vmem:[#allocation7 + $0x10] sm:$0xff]
    %v918 = vld [vmem:[#allocation7 + $0x18] sm:$0xff]
    %v919 = vld [vmem:[#allocation7 + $0x20] sm:$0xff]
    %v920 = vld [vmem:[#allocation7 + $0x28] sm:$0xff]
    %v921 = vld [vmem:[#allocation7 + $0x30] sm:$0xff]
    %v922 = vld [vmem:[#allocation7 + $0x38] sm:$0xff]
    %v923 = vld [vmem:[#allocation7 + $0x40] sm:$0xff]
    %v924 = vld [vmem:[#allocation7 + $0x48] sm:$0xff]
    %v925 = vld [vmem:[#allocation7 + $0x50] sm:$0xff]
    %v926 = vld [vmem:[#allocation7 + $0x58] sm:$0xff]
    %v927 = vld [vmem:[#allocation7 + $0x60] sm:$0xff]
    %v928 = vld [vmem:[#allocation7 + $0x68] sm:$0xff]
    %v929 = vld [vmem:[#allocation7 + $0x70] sm:$0xff]
    %v930 = vld [vmem:[#allocation7 + $0x78] sm:$0xff]
    %v931 = vld [vmem:[#allocation7 + $0x80] sm:$0xff]
    %v932 = vld [vmem:[#allocation7 + $0x88] sm:$0xff]
    %v933 = vld [vmem:[#allocation7 + $0x90] sm:$0xff]
    %v934 = vld [vmem:[#allocation7 + $0x98] sm:$0xff]
    %v935 = vld [vmem:[#allocation7 + $0xa0] sm:$0xff]
    %v936 = vld [vmem:[#allocation7 + $0xa8] sm:$0xff]
    %v937 = vld [vmem:[#allocation7 + $0xb0] sm:$0xff]
    %v938 = vld [vmem:[#allocation7 + $0xb8] sm:$0xff]
    %v939 = vld [vmem:[#allocation7 + $0xc0] sm:$0xff]
    %v940 = vld [vmem:[#allocation7 + $0xc8] sm:$0xff]
    %v941 = vld [vmem:[#allocation7 + $0xd0] sm:$0xff]
    %v942 = vld [vmem:[#allocation7 + $0xd8] sm:$0xff]
    %v943 = vld [vmem:[#allocation7 + $0xe0] sm:$0xff]
    %v944 = vld [vmem:[#allocation7 + $0xe8] sm:$0xff]
    %v945 = vld [vmem:[#allocation7 + $0xf0] sm:$0xff]
    %v946 = vld [vmem:[#allocation7 + $0xf8] sm:$0xff]
    %v947 = vld [vmem:[#allocation2] sm:$0xff]
    %v948 = vld [vmem:[#allocation2 + $0x10] sm:$0xff]
    %v949 = vld [vmem:[#allocation2 + $0x18] sm:$0xff]
    %v950 = vmul.f32 %v947, 0.5
    %v951 = vtanh.pop %v950
    %v952 = vmul.f32 %v951, 0.5
    %v953 = vadd.f32 %v952, 0.5
    %v954 = vtanh.pop %v948
    %v955 = vmul.f32 %v949, 0.5
    %v956 = vtanh.pop %v955
    %v957 = vmul.f32 %v956, 0.5
    %v958 = vadd.f32 %v957, 0.5
    %v959 = vmul.f32 %v953, %v954
    %v960 = vtanh.pop %v959
    %v961 = vmul.f32 %v958, %v960
    %s962 = smul.u32 1, 4
    %s963 = smul.addr %s962, 8
    %s964 = scalar_lea.vmem [#allocation2], %s963
    %v965 = vld [vmem:[%s964] sm:$0xff]
    %v966 = vld [vmem:[%s964 + $0x8] sm:$0xff]
    %v967 = vld [vmem:[%s964 + $0x10] sm:$0xff]
    %v968 = vld [vmem:[%s964 + $0x18] sm:$0xff]
    %v969 = vpack.c.bf16 %v961, %v961
    %v1002 = vunpack.c.l.b16 %v915
    %v1003 = vunpack.c.h.b16 %v915
    %v1004 = vunpack.c.l.b16 %v916
    %v1005 = vunpack.c.h.b16 %v916
    %v1006 = vunpack.c.l.b16 %v917
    %v1007 = vunpack.c.h.b16 %v917
    %v1008 = vunpack.c.l.b16 %v918
    %v1009 = vunpack.c.h.b16 %v918
    %v1010 = vunpack.c.l.b16 %v919
    %v1011 = vunpack.c.h.b16 %v919
    %v1012 = vunpack.c.l.b16 %v920
    %v1013 = vunpack.c.h.b16 %v920
    %v1014 = vunpack.c.l.b16 %v921
    %v1015 = vunpack.c.h.b16 %v921
    %v1016 = vunpack.c.l.b16 %v922
    %v1017 = vunpack.c.h.b16 %v922
    %v1018 = vunpack.c.l.b16 %v923
    %v1019 = vunpack.c.h.b16 %v923
    %v1020 = vunpack.c.l.b16 %v924
    %v1021 = vunpack.c.h.b16 %v924
    %v1022 = vunpack.c.l.b16 %v925
    %v1023 = vunpack.c.h.b16 %v925
    %v1024 = vunpack.c.l.b16 %v926
    %v1025 = vunpack.c.h.b16 %v926
    %v1026 = vunpack.c.l.b16 %v927
    %v1027 = vunpack.c.h.b16 %v927
    %v1028 = vunpack.c.l.b16 %v928
    %v1029 = vunpack.c.h.b16 %v928
    %v1030 = vunpack.c.l.b16 %v929
    %v1031 = vunpack.c.h.b16 %v929
    %v1032 = vunpack.c.l.b16 %v930
    %v1033 = vunpack.c.h.b16 %v930
    %v1034 = vunpack.c.l.b16 %v931
    %v1035 = vunpack.c.h.b16 %v931
    %v1036 = vunpack.c.l.b16 %v932
    %v1037 = vunpack.c.h.b16 %v932
    %v1038 = vunpack.c.l.b16 %v933
    %v1039 = vunpack.c.h.b16 %v933
    %v1040 = vunpack.c.l.b16 %v934
    %v1041 = vunpack.c.h.b16 %v934
    %v1042 = vunpack.c.l.b16 %v935
    %v1043 = vunpack.c.h.b16 %v935
    %v1044 = vunpack.c.l.b16 %v936
    %v1045 = vunpack.c.h.b16 %v936
    %v1046 = vunpack.c.l.b16 %v937
    %v1047 = vunpack.c.h.b16 %v937
    %v1048 = vunpack.c.l.b16 %v938
    %v1049 = vunpack.c.h.b16 %v938
    %v1050 = vunpack.c.l.b16 %v939
    %v1051 = vunpack.c.h.b16 %v939
    %v1052 = vunpack.c.l.b16 %v940
    %v1053 = vunpack.c.h.b16 %v940
    %v1054 = vunpack.c.l.b16 %v941
    %v1055 = vunpack.c.h.b16 %v941
    %v1056 = vunpack.c.l.b16 %v942
    %v1057 = vunpack.c.h.b16 %v942
    %v1058 = vunpack.c.l.b16 %v943
    %v1059 = vunpack.c.h.b16 %v943
    %v1060 = vunpack.c.l.b16 %v944
    %v1061 = vunpack.c.h.b16 %v944
    %v1062 = vunpack.c.l.b16 %v945
    %v1063 = vunpack.c.h.b16 %v945
    %v1064 = vunpack.c.l.b16 %v946
    %v1065 = vunpack.c.h.b16 %v946
    %v1066 = vpack.c.b16 %v1006, %v1002
    %v1067 = vpack.c.b16 %v1007, %v1003
    %v1068 = vpack.c.b16 %v1008, %v1004
    %v1069 = vpack.c.b16 %v1009, %v1005
    %v1070 = vpack.c.b16 %v1014, %v1010
    %v1071 = vpack.c.b16 %v1015, %v1011
    %v1072 = vpack.c.b16 %v1016, %v1012
    %v1073 = vpack.c.b16 %v1017, %v1013
    %v1074 = vpack.c.b16 %v1022, %v1018
    %v1075 = vpack.c.b16 %v1023, %v1019
    %v1076 = vpack.c.b16 %v1024, %v1020
    %v1077 = vpack.c.b16 %v1025, %v1021
    %v1078 = vpack.c.b16 %v1030, %v1026
    %v1079 = vpack.c.b16 %v1031, %v1027
    %v1080 = vpack.c.b16 %v1032, %v1028
    %v1081 = vpack.c.b16 %v1033, %v1029
    %v1082 = vpack.c.b16 %v1038, %v1034
    %v1083 = vpack.c.b16 %v1039, %v1035
    %v1084 = vpack.c.b16 %v1040, %v1036
    %v1085 = vpack.c.b16 %v1041, %v1037
    %v1086 = vpack.c.b16 %v1046, %v1042
    %v1087 = vpack.c.b16 %v1047, %v1043
    %v1088 = vpack.c.b16 %v1048, %v1044
    %v1089 = vpack.c.b16 %v1049, %v1045
    %v1090 = vpack.c.b16 %v1054, %v1050
    %v1091 = vpack.c.b16 %v1055, %v1051
    %v1092 = vpack.c.b16 %v1056, %v1052
    %v1093 = vpack.c.b16 %v1057, %v1053
    %v1094 = vpack.c.b16 %v1062, %v1058
    %v1095 = vpack.c.b16 %v1063, %v1059
    %v1096 = vpack.c.b16 %v1064, %v1060
    %v1097 = vpack.c.b16 %v1065, %v1061
    %1130 = vmatpush.bf16.msra.mxu0 %v1094
    %1131 = vmatpush.bf16.msra.mxu0 %v1090
    %1132 = vmatpush.bf16.msra.mxu0 %v1086
    %1133 = vmatpush.bf16.msra.mxu0 %v1082
    %1134 = vmatpush.bf16.msra.mxu0 %v1078
    %1135 = vmatpush.bf16.msra.mxu0 %v1074
    %1136 = vmatpush.bf16.msra.mxu0 %v1070
    %1137 = vmatpush.bf16.msra.mxu0 %v1066
    %1138 = vmatmul.bf16.gmra.mxu0 %v969
    %v1139 = vpop.f32.mrf.mxu0
    %v1140 = vadd.f32 0.0, %v1139
    %v1141 = vpop.f32.mrf.mxu0
    %1142 = vdwg.mxu0
    %1143 = vmatpush.bf16.msra.mxu0 %v1095
    %1144 = vmatpush.bf16.msra.mxu0 %v1091
    %1145 = vmatpush.bf16.msra.mxu0 %v1087
    %1146 = vmatpush.bf16.msra.mxu0 %v1083
    %1147 = vmatpush.bf16.msra.mxu0 %v1079
    %1148 = vmatpush.bf16.msra.mxu0 %v1075
    %1149 = vmatpush.bf16.msra.mxu0 %v1071
    %1150 = vmatpush.bf16.msra.mxu0 %v1067
    %1151 = vmatmul.bf16.gmra.mxu0 %v969
    %v1152 = vpop.f32.mrf.mxu0
    %v1153 = vadd.f32 0.0, %v1152
    %v1154 = vpop.f32.mrf.mxu0
    %1155 = vdwg.mxu0
    %1156 = vmatpush.bf16.msra.mxu0 %v1096
    %1157 = vmatpush.bf16.msra.mxu0 %v1092
    %1158 = vmatpush.bf16.msra.mxu0 %v1088
    %1159 = vmatpush.bf16.msra.mxu0 %v1084
    %1160 = vmatpush.bf16.msra.mxu0 %v1080
    %1161 = vmatpush.bf16.msra.mxu0 %v1076
    %1162 = vmatpush.bf16.msra.mxu0 %v1072
    %1163 = vmatpush.bf16.msra.mxu0 %v1068
    %1164 = vmatmul.bf16.gmra.mxu0 %v969
    %v1165 = vpop.f32.mrf.mxu0
    %v1166 = vadd.f32 0.0, %v1165
    %v1167 = vpop.f32.mrf.mxu0
    %1168 = vdwg.mxu0
    %1169 = vmatpush.bf16.msra.mxu0 %v1097
    %1170 = vmatpush.bf16.msra.mxu0 %v1093
    %1171 = vmatpush.bf16.msra.mxu0 %v1089
    %1172 = vmatpush.bf16.msra.mxu0 %v1085
    %1173 = vmatpush.bf16.msra.mxu0 %v1081
    %1174 = vmatpush.bf16.msra.mxu0 %v1077
    %1175 = vmatpush.bf16.msra.mxu0 %v1073
    %1176 = vmatpush.bf16.msra.mxu0 %v1069
    %1177 = vmatmul.bf16.gmra.mxu0 %v969
    %v1178 = vpop.f32.mrf.mxu0
    %v1179 = vadd.f32 0.0, %v1178
    %v1180 = vpop.f32.mrf.mxu0
    %1181 = vdwg.mxu0
    %v1182 = vadd.f32 %v965, %v1140
    %v1183 = vadd.f32 %v966, %v1153
    %v1184 = vadd.f32 %v967, %v1166
    %v1185 = vadd.f32 %v968, %v1179
    %v1186 = vmul.f32 %v1182, 0.5
    %v1187 = vtanh.pop %v1186
    %v1188 = vmul.f32 %v1187, 0.5
    %v1189 = vadd.f32 %v1188, 0.5
    %v1190 = vmul.f32 %v1183, 0.5
    %v1191 = vtanh.pop %v1190
    %v1192 = vmul.f32 %v1191, 0.5
    %v1193 = vadd.f32 %v1192, 0.5
    %v1194 = vtanh.pop %v1184
    %v1195 = vmul.f32 %v1185, 0.5
    %v1196 = vtanh.pop %v1195
    %v1197 = vmul.f32 %v1196, 0.5
    %v1198 = vadd.f32 %v1197, 0.5
    %v1199 = vmul.f32 %v1193, %v959
    %v1200 = vmul.f32 %v1189, %v1194
    %v1201 = vadd.f32 %v1199, %v1200
    %v1202 = vtanh.pop %v1201
    %v1203 = vmul.f32 %v1198, %v1202
    %s1204 = smul.u32 2, 4
    %s1205 = smul.addr %s1204, 8
    %s1206 = scalar_lea.vmem [#allocation2], %s1205
    %v1207 = vld [vmem:[%s1206] sm:$0xff]
    %v1208 = vld [vmem:[%s1206 + $0x8] sm:$0xff]
    %v1209 = vld [vmem:[%s1206 + $0x10] sm:$0xff]
    %v1210 = vld [vmem:[%s1206 + $0x18] sm:$0xff]
    %v1211 = vpack.c.bf16 %v1203, %v1203
    %1212 = vmatpush.bf16.msra.mxu0 %v1094
    %1213 = vmatpush.bf16.msra.mxu0 %v1090
    %1214 = vmatpush.bf16.msra.mxu0 %v1086
    %1215 = vmatpush.bf16.msra.mxu0 %v1082
    %1216 = vmatpush.bf16.msra.mxu0 %v1078
    %1217 = vmatpush.bf16.msra.mxu0 %v1074
    %1218 = vmatpush.bf16.msra.mxu0 %v1070
    %1219 = vmatpush.bf16.msra.mxu0 %v1066
    %1220 = vmatmul.bf16.gmra.mxu0 %v1211
    %v1221 = vpop.f32.mrf.mxu0
    %v1222 = vadd.f32 0.0, %v1221
    %v1223 = vpop.f32.mrf.mxu0
    %1224 = vdwg.mxu0
    %1225 = vmatpush.bf16.msra.mxu0 %v1095
    %1226 = vmatpush.bf16.msra.mxu0 %v1091
    %1227 = vmatpush.bf16.msra.mxu0 %v1087
    %1228 = vmatpush.bf16.msra.mxu0 %v1083
    %1229 = vmatpush.bf16.msra.mxu0 %v1079
    %1230 = vmatpush.bf16.msra.mxu0 %v1075
    %1231 = vmatpush.bf16.msra.mxu0 %v1071
    %1232 = vmatpush.bf16.msra.mxu0 %v1067
    %1233 = vmatmul.bf16.gmra.mxu0 %v1211
    %v1234 = vpop.f32.mrf.mxu0
    %v1235 = vadd.f32 0.0, %v1234
    %v1236 = vpop.f32.mrf.mxu0
    %1237 = vdwg.mxu0
    %1238 = vmatpush.bf16.msra.mxu0 %v1096
    %1239 = vmatpush.bf16.msra.mxu0 %v1092
    %1240 = vmatpush.bf16.msra.mxu0 %v1088
    %1241 = vmatpush.bf16.msra.mxu0 %v1084
    %1242 = vmatpush.bf16.msra.mxu0 %v1080
    %1243 = vmatpush.bf16.msra.mxu0 %v1076
    %1244 = vmatpush.bf16.msra.mxu0 %v1072
    %1245 = vmatpush.bf16.msra.mxu0 %v1068
    %1246 = vmatmul.bf16.gmra.mxu0 %v1211
    %v1247 = vpop.f32.mrf.mxu0
    %v1248 = vadd.f32 0.0, %v1247
    %v1249 = vpop.f32.mrf.mxu0
    %1250 = vdwg.mxu0
    %1251 = vmatpush.bf16.msra.mxu0 %v1097
    %1252 = vmatpush.bf16.msra.mxu0 %v1093
    %1253 = vmatpush.bf16.msra.mxu0 %v1089
    %1254 = vmatpush.bf16.msra.mxu0 %v1085
    %1255 = vmatpush.bf16.msra.mxu0 %v1081
    %1256 = vmatpush.bf16.msra.mxu0 %v1077
    %1257 = vmatpush.bf16.msra.mxu0 %v1073
    %1258 = vmatpush.bf16.msra.mxu0 %v1069
    %1259 = vmatmul.bf16.gmra.mxu0 %v1211
    %v1260 = vpop.f32.mrf.mxu0
    %v1261 = vadd.f32 0.0, %v1260
    %v1262 = vpop.f32.mrf.mxu0
    %1263 = vdwg.mxu0
    %v1264 = vadd.f32 %v1207, %v1222
    %v1265 = vadd.f32 %v1208, %v1235
    %v1266 = vadd.f32 %v1209, %v1248
    %v1267 = vadd.f32 %v1210, %v1261
    %v1268 = vmul.f32 %v1264, 0.5
    %v1269 = vtanh.pop %v1268
    %v1270 = vmul.f32 %v1269, 0.5
    %v1271 = vadd.f32 %v1270, 0.5
    %v1272 = vmul.f32 %v1265, 0.5
    %v1273 = vtanh.pop %v1272
    %v1274 = vmul.f32 %v1273, 0.5
    %v1275 = vadd.f32 %v1274, 0.5
    %v1276 = vtanh.pop %v1266
    %v1277 = vmul.f32 %v1267, 0.5
    %v1278 = vtanh.pop %v1277
    %v1279 = vmul.f32 %v1278, 0.5
    %v1280 = vadd.f32 %v1279, 0.5
    %v1281 = vmul.f32 %v1275, %v1201
    %v1282 = vmul.f32 %v1271, %v1276
    %v1283 = vadd.f32 %v1281, %v1282
    %v1284 = vtanh.pop %v1283
    %v1285 = vmul.f32 %v1280, %v1284
    %s1286 = smul.u32 3, 4
    %s1287 = smul.addr %s1286, 8
    %s1288 = scalar_lea.vmem [#allocation2], %s1287
    %v1289 = vld [vmem:[%s1288] sm:$0xff]
    %v1290 = vld [vmem:[%s1288 + $0x8] sm:$0xff]
    %v1291 = vld [vmem:[%s1288 + $0x10] sm:$0xff]
    %v1292 = vld [vmem:[%s1288 + $0x18] sm:$0xff]
    %v1293 = vpack.c.bf16 %v1285, %v1285
    %1294 = vmatpush.bf16.msra.mxu0 %v1094
    %1295 = vmatpush.bf16.msra.mxu0 %v1090
    %1296 = vmatpush.bf16.msra.mxu0 %v1086
    %1297 = vmatpush.bf16.msra.mxu0 %v1082
    %1298 = vmatpush.bf16.msra.mxu0 %v1078
    %1299 = vmatpush.bf16.msra.mxu0 %v1074
    %1300 = vmatpush.bf16.msra.mxu0 %v1070
    %1301 = vmatpush.bf16.msra.mxu0 %v1066
    %1302 = vmatmul.bf16.gmra.mxu0 %v1293
    %v1303 = vpop.f32.mrf.mxu0
    %v1304 = vadd.f32 0.0, %v1303
    %v1305 = vpop.f32.mrf.mxu0
    %1306 = vdwg.mxu0
    %1307 = vmatpush.bf16.msra.mxu0 %v1095
    %1308 = vmatpush.bf16.msra.mxu0 %v1091
    %1309 = vmatpush.bf16.msra.mxu0 %v1087
    %1310 = vmatpush.bf16.msra.mxu0 %v1083
    %1311 = vmatpush.bf16.msra.mxu0 %v1079
    %1312 = vmatpush.bf16.msra.mxu0 %v1075
    %1313 = vmatpush.bf16.msra.mxu0 %v1071
    %1314 = vmatpush.bf16.msra.mxu0 %v1067
    %1315 = vmatmul.bf16.gmra.mxu0 %v1293
    %v1316 = vpop.f32.mrf.mxu0
    %v1317 = vadd.f32 0.0, %v1316
    %v1318 = vpop.f32.mrf.mxu0
    %1319 = vdwg.mxu0
    %1320 = vmatpush.bf16.msra.mxu0 %v1096
    %1321 = vmatpush.bf16.msra.mxu0 %v1092
    %1322 = vmatpush.bf16.msra.mxu0 %v1088
    %1323 = vmatpush.bf16.msra.mxu0 %v1084
    %1324 = vmatpush.bf16.msra.mxu0 %v1080
    %1325 = vmatpush.bf16.msra.mxu0 %v1076
    %1326 = vmatpush.bf16.msra.mxu0 %v1072
    %1327 = vmatpush.bf16.msra.mxu0 %v1068
    %1328 = vmatmul.bf16.gmra.mxu0 %v1293
    %v1329 = vpop.f32.mrf.mxu0
    %v1330 = vadd.f32 0.0, %v1329
    %v1331 = vpop.f32.mrf.mxu0
    %1332 = vdwg.mxu0
    %1333 = vmatpush.bf16.msra.mxu0 %v1097
    %1334 = vmatpush.bf16.msra.mxu0 %v1093
    %1335 = vmatpush.bf16.msra.mxu0 %v1089
    %1336 = vmatpush.bf16.msra.mxu0 %v1085
    %1337 = vmatpush.bf16.msra.mxu0 %v1081
    %1338 = vmatpush.bf16.msra.mxu0 %v1077
    %1339 = vmatpush.bf16.msra.mxu0 %v1073
    %1340 = vmatpush.bf16.msra.mxu0 %v1069
    %1341 = vmatmul.bf16.gmra.mxu0 %v1293
    %v1342 = vpop.f32.mrf.mxu0
    %v1343 = vadd.f32 0.0, %v1342
    %v1344 = vpop.f32.mrf.mxu0
    %1345 = vdwg.mxu0
    %v1346 = vadd.f32 %v1289, %v1304
    %v1347 = vadd.f32 %v1290, %v1317
    %v1348 = vadd.f32 %v1291, %v1330
    %v1349 = vadd.f32 %v1292, %v1343
    %v1350 = vmul.f32 %v1346, 0.5
    %v1351 = vtanh.pop %v1350
    %v1352 = vmul.f32 %v1351, 0.5
    %v1353 = vadd.f32 %v1352, 0.5
    %v1354 = vmul.f32 %v1347, 0.5
    %v1355 = vtanh.pop %v1354
    %v1356 = vmul.f32 %v1355, 0.5
    %v1357 = vadd.f32 %v1356, 0.5
    %v1358 = vtanh.pop %v1348
    %v1359 = vmul.f32 %v1349, 0.5
    %v1360 = vtanh.pop %v1359
    %v1361 = vmul.f32 %v1360, 0.5
    %v1362 = vadd.f32 %v1361, 0.5
    %v1363 = vmul.f32 %v1357, %v1283
    %v1364 = vmul.f32 %v1353, %v1358
    %v1365 = vadd.f32 %v1363, %v1364
    %v1366 = vtanh.pop %v1365
    %v1367 = vmul.f32 %v1362, %v1366
    %s1368 = smul.u32 4, 4
    %s1369 = smul.addr %s1368, 8
    %s1370 = scalar_lea.vmem [#allocation2], %s1369
    %v1371 = vld [vmem:[%s1370] sm:$0xff]
    %v1372 = vld [vmem:[%s1370 + $0x8] sm:$0xff]
    %v1373 = vld [vmem:[%s1370 + $0x10] sm:$0xff]
    %v1374 = vld [vmem:[%s1370 + $0x18] sm:$0xff]
    %v1375 = vpack.c.bf16 %v1367, %v1367
    %1376 = vmatpush.bf16.msra.mxu0 %v1094
    %1377 = vmatpush.bf16.msra.mxu0 %v1090
    %1378 = vmatpush.bf16.msra.mxu0 %v1086
    %1379 = vmatpush.bf16.msra.mxu0 %v1082
    %1380 = vmatpush.bf16.msra.mxu0 %v1078
    %1381 = vmatpush.bf16.msra.mxu0 %v1074
    %1382 = vmatpush.bf16.msra.mxu0 %v1070
    %1383 = vmatpush.bf16.msra.mxu0 %v1066
    %1384 = vmatmul.bf16.gmra.mxu0 %v1375
    %v1385 = vpop.f32.mrf.mxu0
    %v1386 = vadd.f32 0.0, %v1385
    %v1387 = vpop.f32.mrf.mxu0
    %1388 = vdwg.mxu0
    %1389 = vmatpush.bf16.msra.mxu0 %v1095
    %1390 = vmatpush.bf16.msra.mxu0 %v1091
    %1391 = vmatpush.bf16.msra.mxu0 %v1087
    %1392 = vmatpush.bf16.msra.mxu0 %v1083
    %1393 = vmatpush.bf16.msra.mxu0 %v1079
    %1394 = vmatpush.bf16.msra.mxu0 %v1075
    %1395 = vmatpush.bf16.msra.mxu0 %v1071
    %1396 = vmatpush.bf16.msra.mxu0 %v1067
    %1397 = vmatmul.bf16.gmra.mxu0 %v1375
    %v1398 = vpop.f32.mrf.mxu0
    %v1399 = vadd.f32 0.0, %v1398
    %v1400 = vpop.f32.mrf.mxu0
    %1401 = vdwg.mxu0
    %1402 = vmatpush.bf16.msra.mxu0 %v1096
    %1403 = vmatpush.bf16.msra.mxu0 %v1092
    %1404 = vmatpush.bf16.msra.mxu0 %v1088
    %1405 = vmatpush.bf16.msra.mxu0 %v1084
    %1406 = vmatpush.bf16.msra.mxu0 %v1080
    %1407 = vmatpush.bf16.msra.mxu0 %v1076
    %1408 = vmatpush.bf16.msra.mxu0 %v1072
    %1409 = vmatpush.bf16.msra.mxu0 %v1068
    %1410 = vmatmul.bf16.gmra.mxu0 %v1375
    %v1411 = vpop.f32.mrf.mxu0
    %v1412 = vadd.f32 0.0, %v1411
    %v1413 = vpop.f32.mrf.mxu0
    %1414 = vdwg.mxu0
    %1415 = vmatpush.bf16.msra.mxu0 %v1097
    %1416 = vmatpush.bf16.msra.mxu0 %v1093
    %1417 = vmatpush.bf16.msra.mxu0 %v1089
    %1418 = vmatpush.bf16.msra.mxu0 %v1085
    %1419 = vmatpush.bf16.msra.mxu0 %v1081
    %1420 = vmatpush.bf16.msra.mxu0 %v1077
    %1421 = vmatpush.bf16.msra.mxu0 %v1073
    %1422 = vmatpush.bf16.msra.mxu0 %v1069
    %1423 = vmatmul.bf16.gmra.mxu0 %v1375
    %v1424 = vpop.f32.mrf.mxu0
    %v1425 = vadd.f32 0.0, %v1424
    %v1426 = vpop.f32.mrf.mxu0
    %1427 = vdwg.mxu0
    %v1428 = vadd.f32 %v1371, %v1386
    %v1429 = vadd.f32 %v1372, %v1399
    %v1430 = vadd.f32 %v1373, %v1412
    %v1431 = vadd.f32 %v1374, %v1425
    %v1432 = vmul.f32 %v1428, 0.5
    %v1433 = vtanh.pop %v1432
    %v1434 = vmul.f32 %v1433, 0.5
    %v1435 = vadd.f32 %v1434, 0.5
    %v1436 = vmul.f32 %v1429, 0.5
    %v1437 = vtanh.pop %v1436
    %v1438 = vmul.f32 %v1437, 0.5
    %v1439 = vadd.f32 %v1438, 0.5
    %v1440 = vtanh.pop %v1430
    %v1441 = vmul.f32 %v1431, 0.5
    %v1442 = vtanh.pop %v1441
    %v1443 = vmul.f32 %v1442, 0.5
    %v1444 = vadd.f32 %v1443, 0.5
    %v1445 = vmul.f32 %v1439, %v1365
    %v1446 = vmul.f32 %v1435, %v1440
    %v1447 = vadd.f32 %v1445, %v1446
    %v1448 = vtanh.pop %v1447
    %v1449 = vmul.f32 %v1444, %v1448
    %s1450 = smul.u32 5, 4
    %s1451 = smul.addr %s1450, 8
    %s1452 = scalar_lea.vmem [#allocation2], %s1451
    %v1453 = vld [vmem:[%s1452] sm:$0xff]
    %v1454 = vld [vmem:[%s1452 + $0x8] sm:$0xff]
    %v1455 = vld [vmem:[%s1452 + $0x10] sm:$0xff]
    %v1456 = vld [vmem:[%s1452 + $0x18] sm:$0xff]
    %v1457 = vpack.c.bf16 %v1449, %v1449
    %1458 = vmatpush.bf16.msra.mxu0 %v1094
    %1459 = vmatpush.bf16.msra.mxu0 %v1090
    %1460 = vmatpush.bf16.msra.mxu0 %v1086
    %1461 = vmatpush.bf16.msra.mxu0 %v1082
    %1462 = vmatpush.bf16.msra.mxu0 %v1078
    %1463 = vmatpush.bf16.msra.mxu0 %v1074
    %1464 = vmatpush.bf16.msra.mxu0 %v1070
    %1465 = vmatpush.bf16.msra.mxu0 %v1066
    %1466 = vmatmul.bf16.gmra.mxu0 %v1457
    %v1467 = vpop.f32.mrf.mxu0
    %v1468 = vadd.f32 0.0, %v1467
    %v1469 = vpop.f32.mrf.mxu0
    %1470 = vdwg.mxu0
    %1471 = vmatpush.bf16.msra.mxu0 %v1095
    %1472 = vmatpush.bf16.msra.mxu0 %v1091
    %1473 = vmatpush.bf16.msra.mxu0 %v1087
    %1474 = vmatpush.bf16.msra.mxu0 %v1083
    %1475 = vmatpush.bf16.msra.mxu0 %v1079
    %1476 = vmatpush.bf16.msra.mxu0 %v1075
    %1477 = vmatpush.bf16.msra.mxu0 %v1071
    %1478 = vmatpush.bf16.msra.mxu0 %v1067
    %1479 = vmatmul.bf16.gmra.mxu0 %v1457
    %v1480 = vpop.f32.mrf.mxu0
    %v1481 = vadd.f32 0.0, %v1480
    %v1482 = vpop.f32.mrf.mxu0
    %1483 = vdwg.mxu0
    %1484 = vmatpush.bf16.msra.mxu0 %v1096
    %1485 = vmatpush.bf16.msra.mxu0 %v1092
    %1486 = vmatpush.bf16.msra.mxu0 %v1088
    %1487 = vmatpush.bf16.msra.mxu0 %v1084
    %1488 = vmatpush.bf16.msra.mxu0 %v1080
    %1489 = vmatpush.bf16.msra.mxu0 %v1076
    %1490 = vmatpush.bf16.msra.mxu0 %v1072
    %1491 = vmatpush.bf16.msra.mxu0 %v1068
    %1492 = vmatmul.bf16.gmra.mxu0 %v1457
    %v1493 = vpop.f32.mrf.mxu0
    %v1494 = vadd.f32 0.0, %v1493
    %v1495 = vpop.f32.mrf.mxu0
    %1496 = vdwg.mxu0
    %1497 = vmatpush.bf16.msra.mxu0 %v1097
    %1498 = vmatpush.bf16.msra.mxu0 %v1093
    %1499 = vmatpush.bf16.msra.mxu0 %v1089
    %1500 = vmatpush.bf16.msra.mxu0 %v1085
    %1501 = vmatpush.bf16.msra.mxu0 %v1081
    %1502 = vmatpush.bf16.msra.mxu0 %v1077
    %1503 = vmatpush.bf16.msra.mxu0 %v1073
    %1504 = vmatpush.bf16.msra.mxu0 %v1069
    %1505 = vmatmul.bf16.gmra.mxu0 %v1457
    %v1506 = vpop.f32.mrf.mxu0
    %v1507 = vadd.f32 0.0, %v1506
    %v1508 = vpop.f32.mrf.mxu0
    %1509 = vdwg.mxu0
    %v1510 = vadd.f32 %v1453, %v1468
    %v1511 = vadd.f32 %v1454, %v1481
    %v1512 = vadd.f32 %v1455, %v1494
    %v1513 = vadd.f32 %v1456, %v1507
    %v1514 = vmul.f32 %v1510, 0.5
    %v1515 = vtanh.pop %v1514
    %v1516 = vmul.f32 %v1515, 0.5
    %v1517 = vadd.f32 %v1516, 0.5
    %v1518 = vmul.f32 %v1511, 0.5
    %v1519 = vtanh.pop %v1518
    %v1520 = vmul.f32 %v1519, 0.5
    %v1521 = vadd.f32 %v1520, 0.5
    %v1522 = vtanh.pop %v1512
    %v1523 = vmul.f32 %v1513, 0.5
    %v1524 = vtanh.pop %v1523
    %v1525 = vmul.f32 %v1524, 0.5
    %v1526 = vadd.f32 %v1525, 0.5
    %v1527 = vmul.f32 %v1521, %v1447
    %v1528 = vmul.f32 %v1517, %v1522
    %v1529 = vadd.f32 %v1527, %v1528
    %v1530 = vtanh.pop %v1529
    %v1531 = vmul.f32 %v1526, %v1530
    %s1532 = smul.u32 6, 4
    %s1533 = smul.addr %s1532, 8
    %s1534 = scalar_lea.vmem [#allocation2], %s1533
    %v1535 = vld [vmem:[%s1534] sm:$0xff]
    %v1536 = vld [vmem:[%s1534 + $0x8] sm:$0xff]
    %v1537 = vld [vmem:[%s1534 + $0x10] sm:$0xff]
    %v1538 = vld [vmem:[%s1534 + $0x18] sm:$0xff]
    %v1539 = vpack.c.bf16 %v1531, %v1531
    %1540 = vmatpush.bf16.msra.mxu0 %v1094
    %1541 = vmatpush.bf16.msra.mxu0 %v1090
    %1542 = vmatpush.bf16.msra.mxu0 %v1086
    %1543 = vmatpush.bf16.msra.mxu0 %v1082
    %1544 = vmatpush.bf16.msra.mxu0 %v1078
    %1545 = vmatpush.bf16.msra.mxu0 %v1074
    %1546 = vmatpush.bf16.msra.mxu0 %v1070
    %1547 = vmatpush.bf16.msra.mxu0 %v1066
    %1548 = vmatmul.bf16.gmra.mxu0 %v1539
    %v1549 = vpop.f32.mrf.mxu0
    %v1550 = vadd.f32 0.0, %v1549
    %v1551 = vpop.f32.mrf.mxu0
    %1552 = vdwg.mxu0
    %1553 = vmatpush.bf16.msra.mxu0 %v1095
    %1554 = vmatpush.bf16.msra.mxu0 %v1091
    %1555 = vmatpush.bf16.msra.mxu0 %v1087
    %1556 = vmatpush.bf16.msra.mxu0 %v1083
    %1557 = vmatpush.bf16.msra.mxu0 %v1079
    %1558 = vmatpush.bf16.msra.mxu0 %v1075
    %1559 = vmatpush.bf16.msra.mxu0 %v1071
    %1560 = vmatpush.bf16.msra.mxu0 %v1067
    %1561 = vmatmul.bf16.gmra.mxu0 %v1539
    %v1562 = vpop.f32.mrf.mxu0
    %v1563 = vadd.f32 0.0, %v1562
    %v1564 = vpop.f32.mrf.mxu0
    %1565 = vdwg.mxu0
    %1566 = vmatpush.bf16.msra.mxu0 %v1096
    %1567 = vmatpush.bf16.msra.mxu0 %v1092
    %1568 = vmatpush.bf16.msra.mxu0 %v1088
    %1569 = vmatpush.bf16.msra.mxu0 %v1084
    %1570 = vmatpush.bf16.msra.mxu0 %v1080
    %1571 = vmatpush.bf16.msra.mxu0 %v1076
    %1572 = vmatpush.bf16.msra.mxu0 %v1072
    %1573 = vmatpush.bf16.msra.mxu0 %v1068
    %1574 = vmatmul.bf16.gmra.mxu0 %v1539
    %v1575 = vpop.f32.mrf.mxu0
    %v1576 = vadd.f32 0.0, %v1575
    %v1577 = vpop.f32.mrf.mxu0
    %1578 = vdwg.mxu0
    %1579 = vmatpush.bf16.msra.mxu0 %v1097
    %1580 = vmatpush.bf16.msra.mxu0 %v1093
    %1581 = vmatpush.bf16.msra.mxu0 %v1089
    %1582 = vmatpush.bf16.msra.mxu0 %v1085
    %1583 = vmatpush.bf16.msra.mxu0 %v1081
    %1584 = vmatpush.bf16.msra.mxu0 %v1077
    %1585 = vmatpush.bf16.msra.mxu0 %v1073
    %1586 = vmatpush.bf16.msra.mxu0 %v1069
    %1587 = vmatmul.bf16.gmra.mxu0 %v1539
    %v1588 = vpop.f32.mrf.mxu0
    %v1589 = vadd.f32 0.0, %v1588
    %v1590 = vpop.f32.mrf.mxu0
    %1591 = vdwg.mxu0
    %v1592 = vadd.f32 %v1535, %v1550
    %v1593 = vadd.f32 %v1536, %v1563
    %v1594 = vadd.f32 %v1537, %v1576
    %v1595 = vadd.f32 %v1538, %v1589
    %v1596 = vmul.f32 %v1592, 0.5
    %v1597 = vtanh.pop %v1596
    %v1598 = vmul.f32 %v1597, 0.5
    %v1599 = vadd.f32 %v1598, 0.5
    %v1600 = vmul.f32 %v1593, 0.5
    %v1601 = vtanh.pop %v1600
    %v1602 = vmul.f32 %v1601, 0.5
    %v1603 = vadd.f32 %v1602, 0.5
    %v1604 = vtanh.pop %v1594
    %v1605 = vmul.f32 %v1595, 0.5
    %v1606 = vtanh.pop %v1605
    %v1607 = vmul.f32 %v1606, 0.5
    %v1608 = vadd.f32 %v1607, 0.5
    %v1609 = vmul.f32 %v1603, %v1529
    %v1610 = vmul.f32 %v1599, %v1604
    %v1611 = vadd.f32 %v1609, %v1610
    %v1612 = vtanh.pop %v1611
    %v1613 = vmul.f32 %v1608, %v1612
    %s1614 = smul.u32 7, 4
    %s1615 = smul.addr %s1614, 8
    %s1616 = scalar_lea.vmem [#allocation2], %s1615
    %v1617 = vld [vmem:[%s1616] sm:$0xff]
    %v1618 = vld [vmem:[%s1616 + $0x8] sm:$0xff]
    %v1619 = vld [vmem:[%s1616 + $0x10] sm:$0xff]
    %v1620 = vld [vmem:[%s1616 + $0x18] sm:$0xff]
    %v1621 = vpack.c.bf16 %v1613, %v1613
    %1622 = vmatpush.bf16.msra.mxu0 %v1094
    %1623 = vmatpush.bf16.msra.mxu0 %v1090
    %1624 = vmatpush.bf16.msra.mxu0 %v1086
    %1625 = vmatpush.bf16.msra.mxu0 %v1082
    %1626 = vmatpush.bf16.msra.mxu0 %v1078
    %1627 = vmatpush.bf16.msra.mxu0 %v1074
    %1628 = vmatpush.bf16.msra.mxu0 %v1070
    %1629 = vmatpush.bf16.msra.mxu0 %v1066
    %1630 = vmatmul.bf16.gmra.mxu0 %v1621
    %v1631 = vpop.f32.mrf.mxu0
    %v1632 = vadd.f32 0.0, %v1631
    %v1633 = vpop.f32.mrf.mxu0
    %1634 = vdwg.mxu0
    %1635 = vmatpush.bf16.msra.mxu0 %v1095
    %1636 = vmatpush.bf16.msra.mxu0 %v1091
    %1637 = vmatpush.bf16.msra.mxu0 %v1087
    %1638 = vmatpush.bf16.msra.mxu0 %v1083
    %1639 = vmatpush.bf16.msra.mxu0 %v1079
    %1640 = vmatpush.bf16.msra.mxu0 %v1075
    %1641 = vmatpush.bf16.msra.mxu0 %v1071
    %1642 = vmatpush.bf16.msra.mxu0 %v1067
    %1643 = vmatmul.bf16.gmra.mxu0 %v1621
    %v1644 = vpop.f32.mrf.mxu0
    %v1645 = vadd.f32 0.0, %v1644
    %v1646 = vpop.f32.mrf.mxu0
    %1647 = vdwg.mxu0
    %1648 = vmatpush.bf16.msra.mxu0 %v1096
    %1649 = vmatpush.bf16.msra.mxu0 %v1092
    %1650 = vmatpush.bf16.msra.mxu0 %v1088
    %1651 = vmatpush.bf16.msra.mxu0 %v1084
    %1652 = vmatpush.bf16.msra.mxu0 %v1080
    %1653 = vmatpush.bf16.msra.mxu0 %v1076
    %1654 = vmatpush.bf16.msra.mxu0 %v1072
    %1655 = vmatpush.bf16.msra.mxu0 %v1068
    %1656 = vmatmul.bf16.gmra.mxu0 %v1621
    %v1657 = vpop.f32.mrf.mxu0
    %v1658 = vadd.f32 0.0, %v1657
    %v1659 = vpop.f32.mrf.mxu0
    %1660 = vdwg.mxu0
    %1661 = vmatpush.bf16.msra.mxu0 %v1097
    %1662 = vmatpush.bf16.msra.mxu0 %v1093
    %1663 = vmatpush.bf16.msra.mxu0 %v1089
    %1664 = vmatpush.bf16.msra.mxu0 %v1085
    %1665 = vmatpush.bf16.msra.mxu0 %v1081
    %1666 = vmatpush.bf16.msra.mxu0 %v1077
    %1667 = vmatpush.bf16.msra.mxu0 %v1073
    %1668 = vmatpush.bf16.msra.mxu0 %v1069
    %1669 = vmatmul.bf16.gmra.mxu0 %v1621
    %v1670 = vpop.f32.mrf.mxu0
    %v1671 = vadd.f32 0.0, %v1670
    %v1672 = vpop.f32.mrf.mxu0
    %1673 = vdwg.mxu0
    %v1674 = vadd.f32 %v1617, %v1632
    %v1675 = vadd.f32 %v1618, %v1645
    %v1676 = vadd.f32 %v1619, %v1658
    %v1677 = vadd.f32 %v1620, %v1671
    %v1678 = vmul.f32 %v1674, 0.5
    %v1679 = vtanh.pop %v1678
    %v1680 = vmul.f32 %v1679, 0.5
    %v1681 = vadd.f32 %v1680, 0.5
    %v1682 = vmul.f32 %v1675, 0.5
    %v1683 = vtanh.pop %v1682
    %v1684 = vmul.f32 %v1683, 0.5
    %v1685 = vadd.f32 %v1684, 0.5
    %v1686 = vtanh.pop %v1676
    %v1687 = vmul.f32 %v1677, 0.5
    %v1688 = vtanh.pop %v1687
    %v1689 = vmul.f32 %v1688, 0.5
    %v1690 = vadd.f32 %v1689, 0.5
    %v1691 = vmul.f32 %v1685, %v1611
    %v1692 = vmul.f32 %v1681, %v1686
    %v1693 = vadd.f32 %v1691, %v1692
    %v1694 = vtanh.pop %v1693
    %v1695 = vmul.f32 %v1690, %v1694
    %v1696 = vpack.c.bf16 %v1695, %v1695
    %v1697 = vld [vmem:[#allocation9] sm:$0xf]
    %v1698 = vld [vmem:[#allocation9 + $0x4] sm:$0xf]
    %v1699 = vld [vmem:[#allocation9 + $0x8] sm:$0xf]
    %v1700 = vld [vmem:[#allocation9 + $0xc] sm:$0xf]
    %v1701 = vld [vmem:[#allocation9 + $0x10] sm:$0xf]
    %v1702 = vld [vmem:[#allocation9 + $0x14] sm:$0xf]
    %v1703 = vld [vmem:[#allocation9 + $0x18] sm:$0xf]
    %v1704 = vld [vmem:[#allocation9 + $0x1c] sm:$0xf]
    %v1705 = vld [vmem:[#allocation9 + $0x20] sm:$0xf]
    %v1706 = vld [vmem:[#allocation9 + $0x24] sm:$0xf]
    %v1707 = vld [vmem:[#allocation9 + $0x28] sm:$0xf]
    %v1708 = vld [vmem:[#allocation9 + $0x2c] sm:$0xf]
    %v1709 = vld [vmem:[#allocation9 + $0x30] sm:$0xf]
    %v1710 = vld [vmem:[#allocation9 + $0x34] sm:$0xf]
    %v1711 = vld [vmem:[#allocation9 + $0x38] sm:$0xf]
    %v1712 = vld [vmem:[#allocation9 + $0x3c] sm:$0xf]
    %v1713 = vld [vmem:[%s4] sm:$0x1]
    %v1715 = vperm.slane %v1713, 0
    %v1733 = vunpack.c.l.b16 %v1697
    %v1734 = vunpack.c.l.b16 %v1698
    %v1735 = vunpack.c.l.b16 %v1699
    %v1736 = vunpack.c.l.b16 %v1700
    %v1737 = vunpack.c.l.b16 %v1701
    %v1738 = vunpack.c.l.b16 %v1702
    %v1739 = vunpack.c.l.b16 %v1703
    %v1740 = vunpack.c.l.b16 %v1704
    %v1741 = vunpack.c.l.b16 %v1705
    %v1742 = vunpack.c.l.b16 %v1706
    %v1743 = vunpack.c.l.b16 %v1707
    %v1744 = vunpack.c.l.b16 %v1708
    %v1745 = vunpack.c.l.b16 %v1709
    %v1746 = vunpack.c.l.b16 %v1710
    %v1747 = vunpack.c.l.b16 %v1711
    %v1748 = vunpack.c.l.b16 %v1712
    %v1749 = vpack.c.b16 %v1734, %v1733
    %v1750 = vpack.c.b16 %v1736, %v1735
    %v1751 = vpack.c.b16 %v1738, %v1737
    %v1752 = vpack.c.b16 %v1740, %v1739
    %v1753 = vpack.c.b16 %v1742, %v1741
    %v1754 = vpack.c.b16 %v1744, %v1743
    %v1755 = vpack.c.b16 %v1746, %v1745
    %v1756 = vpack.c.b16 %v1748, %v1747
    %1765 = vmatpush.bf16.msra.mxu0 %v1756
    %1766 = vmatpush.bf16.msra.mxu0 %v1755
    %1767 = vmatpush.bf16.msra.mxu0 %v1754
    %1768 = vmatpush.bf16.msra.mxu0 %v1753
    %1769 = vmatpush.bf16.msra.mxu0 %v1752
    %1770 = vmatpush.bf16.msra.mxu0 %v1751
    %1771 = vmatpush.bf16.msra.mxu0 %v1750
    %1772 = vmatpush.bf16.msra.mxu0 %v1749
    %1773 = vmatmul.bf16.gmra.mxu0 %v1696
    %v1774 = vpop.f32.mrf.mxu0
    %v1775 = vadd.f32 %v1715, %v1774
    %v1776 = vpop.f32.mrf.mxu0
    %1777 = vdwg.mxu0
    %1778 = vst [vmem:[%s5] sm:$0xff] %v1775
    // Predicated region
    $region38: #{svd_classifier_forward.1} parent=1 // pred_check
      _
    $region39: #{svd_classifier_forward.1} parent=1 // pred_check_branch
      %1780 = sbr.rel (0) target = $region41
    $region40: #{svd_classifier_forward.1} parent=1 // pred_region
      _
    $region41: #{svd_classifier_forward.1} parent=1 // pred_fallthru
      _
    // Predicated region
    $region42: #{svd_classifier_forward.1} parent=1 // pred_check
      _
    $region43: #{svd_classifier_forward.1} parent=1 // pred_check_branch
      %1782 = sbr.rel (0) target = $region45
    $region44: #{svd_classifier_forward.1} parent=1 // pred_region
      _
    $region45: #{svd_classifier_forward.1} parent=1 // pred_fallthru
      _
    %1783 = vsyncpa [#allocation4], 1
    %1784 = vsyncpa [#allocation8], 1
    %1785 = vsyncpa [#allocation5], 1

</llo_original>
